<compile_context>
chip_gen: v7x
topology: tpu7x:2x2x1
jax: 0.10.0
libtpu: 0.0.40
codegen_flags: <defaults>
</compile_context>

<pallas_src>
import functools
import math

import jax
import jax.numpy as jnp
from jax.experimental import pallas as pl
from jax.experimental.pallas import tpu as pltpu


def _round_up(x, m):
    return (x + m - 1) // m * m


def _pad2(w, rows, cols):
    out = jnp.zeros((rows, cols), w.dtype)
    return out.at[: w.shape[0], : w.shape[1]].set(w)


def _compiler_params(dims, vmem_estimate_bytes):
    # 2x for double-buffering + slack; cap at 48 MiB (v7x has 64 MiB per TC).
    limit = int(min(max(2 * vmem_estimate_bytes + (4 << 20), 16 << 20), 48 << 20))
    return pltpu.CompilerParams(dimension_semantics=dims, vmem_limit_bytes=limit)


# ---------------------------------------------------------------------------
# Prep kernel: L2-normalize x and emit the layer-1 projections in one pass.
#   Y1 = normalize(x) @ W1l          (bf16, aggregated by layer 1)
#   S1 = normalize(x) @ W1r + b1     (f32, self/root term added at finalize)
# ---------------------------------------------------------------------------
def _prep_kernel(x_ref, w1l_ref, w1r_ref, b1_ref, y1_ref, s1_ref):
    x = x_ref[...]                                          # f32 [tm, c_in_p]
    ssq = jnp.sum(x * x, axis=1, keepdims=True)
    # x / max(||x||, 1e-12) == x * rsqrt(max(||x||^2, 1e-24))   (EUP rsqrt)
    xn = (x * jax.lax.rsqrt(jnp.maximum(ssq, 1e-24))).astype(jnp.bfloat16)
    y1_ref[...] = jnp.dot(xn, w1l_ref[...],
                          preferred_element_type=jnp.float32).astype(y1_ref.dtype)
    s1_ref[...] = (jnp.dot(xn, w1r_ref[...], preferred_element_type=jnp.float32)
                   + b1_ref[...])


def prep_layer1(x_pad, w1l, w1r, b1, *, tm):
    n_pad, c_in_p = x_pad.shape
    hid_p = w1l.shape[1]
    est = (tm * c_in_p * 4 + 2 * c_in_p * hid_p * 2 + hid_p * 4
           + tm * hid_p * 2 + tm * hid_p * 4)
    return pl.pallas_call(
        _prep_kernel,
        out_shape=(jax.ShapeDtypeStruct((n_pad, hid_p), jnp.bfloat16),
                   jax.ShapeDtypeStruct((n_pad, hid_p), jnp.float32)),
        grid=(n_pad // tm,),
        in_specs=[
            pl.BlockSpec((tm, c_in_p), lambda i: (i, 0)),
            pl.BlockSpec((c_in_p, hid_p), lambda i: (0, 0)),
            pl.BlockSpec((c_in_p, hid_p), lambda i: (0, 0)),
            pl.BlockSpec((1, hid_p), lambda i: (0, 0)),
        ],
        out_specs=[pl.BlockSpec((tm, hid_p), lambda i: (i, 0)),
                   pl.BlockSpec((tm, hid_p), lambda i: (i, 0))],
        compiler_params=_compiler_params(("parallel",), est),
    )(x_pad, w1l, w1r, b1)


# ---------------------------------------------------------------------------
# SAGE layer 1 (tiled rows x aggregation-K, f32 VMEM accumulator):
#   h = relu( deg_inv * (A_counts @ Y1) + S1 )
# and, fused into the finalize, the layer-2 / edge-score projections:
#   Y2 = h @ (W2l @ W_sd)      S2 = h @ (W2r @ W_sd) + b2 @ W_sd
# ---------------------------------------------------------------------------
def _sage1_kernel(a_ref, y1_ref, dinv_ref, s1_ref, w2l_ref, w2r_ref, b2_ref,
                  y2_ref, s2_ref, acc_ref):
    k = pl.program_id(1)

    @pl.when(k == 0)
    def _init():
        acc_ref[...] = jnp.zeros_like(acc_ref)

    # single matmul per step: int8 counts -> bf16 (VPU cast) -> MXU
    acc_ref[...] += jnp.dot(a_ref[...].astype(jnp.bfloat16), y1_ref[...],
                            preferred_element_type=jnp.float32)

    @pl.when(k == pl.num_programs(1) - 1)
    def _finalize():
        h = jnp.maximum(dinv_ref[...] * acc_ref[...] + s1_ref[...], 0.0)
        hb = h.astype(jnp.bfloat16)
        y2_ref[...] = jnp.dot(hb, w2l_ref[...],
                              preferred_element_type=jnp.float32).astype(y2_ref.dtype)
        s2_ref[...] = (jnp.dot(hb, w2r_ref[...], preferred_element_type=jnp.float32)
                       + b2_ref[...])


def sage_layer1(a_i8, y1, deg_inv, s1, w2l_c, w2r_c, b2_c, *, tm, tk):
    n_pad = a_i8.shape[0]
    hid_p = y1.shape[1]
    sc_p = w2l_c.shape[1]
    est = (tm * tk * 1 + tk * hid_p * 2 + tm * 4 + tm * hid_p * 4
           + 2 * hid_p * sc_p * 2 + sc_p * 4
           + tm * sc_p * 2 + tm * sc_p * 4 + tm * hid_p * 4)
    # TODO(synk): experiment with pipeline_mode=pl.Buffered(3) on the A / Y1
    #             specs if DMA latency is exposed at Buffered(2).
    return pl.pallas_call(
        _sage1_kernel,
        out_shape=(jax.ShapeDtypeStruct((n_pad, sc_p), jnp.bfloat16),
                   jax.ShapeDtypeStruct((n_pad, sc_p), jnp.float32)),
        grid=(n_pad // tm, n_pad // tk),
        in_specs=[
            pl.BlockSpec((tm, tk), lambda i, k: (i, k)),        # A counts (int8)
            pl.BlockSpec((tk, hid_p), lambda i, k: (k, 0)),     # Y1 (bf16)
            pl.BlockSpec((tm, 1), lambda i, k: (i, 0)),         # deg_inv (f32)
            pl.BlockSpec((tm, hid_p), lambda i, k: (i, 0)),     # S1 (f32)
            pl.BlockSpec((hid_p, sc_p), lambda i, k: (0, 0)),   # W2l @ W_sd (bf16)
            pl.BlockSpec((hid_p, sc_p), lambda i, k: (0, 0)),   # W2r @ W_sd (bf16)
            pl.BlockSpec((1, sc_p), lambda i, k: (0, 0)),       # b2 @ W_sd (f32)
        ],
        out_specs=[pl.BlockSpec((tm, sc_p), lambda i, k: (i, 0)),
                   pl.BlockSpec((tm, sc_p), lambda i, k: (i, 0))],
        scratch_shapes=[pltpu.VMEM((tm, hid_p), jnp.float32)],
        compiler_params=_compiler_params(("parallel", "arbitrary"), est),
    )(a_i8, y1, deg_inv, s1, w2l_c, w2r_c, b2_c)


# ---------------------------------------------------------------------------
# SAGE layer 2 (already projected onto the 2 edge-score columns):
#   scores = deg_inv * (A_counts @ Y2) + S2      # cols 0/1 = z.w_src / z.w_dst
# ---------------------------------------------------------------------------
def _sage2_kernel(a_ref, y2_ref, dinv_ref, s2_ref, out_ref, acc_ref):
    k = pl.program_id(1)

    @pl.when(k == 0)
    def _init():
        acc_ref[...] = jnp.zeros_like(acc_ref)

    acc_ref[...] += jnp.dot(a_ref[...].astype(jnp.bfloat16), y2_ref[...],
                            preferred_element_type=jnp.float32)

    @pl.when(k == pl.num_programs(1) - 1)
    def _finalize():
        out_ref[...] = dinv_ref[...] * acc_ref[...] + s2_ref[...]


def sage_layer2(a_i8, y2, deg_inv, s2, *, tm, tk):
    n_pad = a_i8.shape[0]
    sc_p = y2.shape[1]
    est = (tm * tk * 1 + tk * sc_p * 2 + tm * 4 + tm * sc_p * 4
           + tm * sc_p * 4 + tm * sc_p * 4)
    return pl.pallas_call(
        _sage2_kernel,
        out_shape=jax.ShapeDtypeStruct((n_pad, sc_p), jnp.float32),
        grid=(n_pad // tm, n_pad // tk),
        in_specs=[
            pl.BlockSpec((tm, tk), lambda i, k: (i, k)),
            pl.BlockSpec((tk, sc_p), lambda i, k: (k, 0)),
            pl.BlockSpec((tm, 1), lambda i, k: (i, 0)),
            pl.BlockSpec((tm, sc_p), lambda i, k: (i, 0)),
        ],
        out_specs=pl.BlockSpec((tm, sc_p), lambda i, k: (i, 0)),
        scratch_shapes=[pltpu.VMEM((tm, sc_p), jnp.float32)],
        compiler_params=_compiler_params(("parallel", "arbitrary"), est),
    )(a_i8, y2, deg_inv, s2)


# ---------------------------------------------------------------------------
# Decode: sigmoid( s_src[src] + s_dst[dst] + b )  — the per-edge gather is
# XLA glue; the add + sigmoid runs lane-dense over [1, te] blocks.
# ---------------------------------------------------------------------------
def _decode_kernel(ssrc_ref, sdst_ref, b_ref, out_ref):
    out_ref[...] = jax.nn.sigmoid(ssrc_ref[...] + sdst_ref[...] + b_ref[...])


def decode(ssrc_row, sdst_row, b_lin, *, te):
    e_pad = ssrc_row.shape[1]
    est = 2 * (3 * te * 4 + 4)
    return pl.pallas_call(
        _decode_kernel,
        out_shape=jax.ShapeDtypeStruct((1, e_pad), jnp.float32),
        grid=(e_pad // te,),
        in_specs=[
            pl.BlockSpec((1, te), lambda e: (0, e)),
            pl.BlockSpec((1, te), lambda e: (0, e)),
            pl.BlockSpec((1, 1), lambda e: (0, 0)),
        ],
        out_specs=pl.BlockSpec((1, te), lambda e: (0, e)),
        compiler_params=_compiler_params(("parallel",), est),
    )(ssrc_row, sdst_row, b_lin)


# ---------------------------------------------------------------------------
# Full forward pass.
# ---------------------------------------------------------------------------
def forward(x, edge_index, params, *, tm=512, tk=1024, te=512):
    n, c_in = x.shape
    e = edge_index.shape[1]

    c_in_p = _round_up(c_in, 128)
    hid_p = _round_up(params["w1l"].shape[1], 128)
    sc_p = 128  # [s_src, s_dst] edge-score columns padded to one lane-dense block

    n128 = _round_up(n, 128)
    tm = min(tm, n128)
    # keep >= 2 row tiles where possible so the "parallel" M axis can split
    # across v7x's two TensorCores (irrelevant on single-TC v5e/v6e).
    if n128 >= 256:
        tm = min(tm, max(128, (n128 // 2) // 128 * 128))
    tk = min(tk, n128)
    n_pad = _round_up(n, math.lcm(tm, tk))

    te = min(te, _round_up(e, 128))
    e_pad = _round_up(e, te)

    src, dst = edge_index[0], edge_index[1]

    # --- mean-aggregation operator, built without an f32 N^2 intermediate ---
    # deg via an O(E) segment-sum; A stored as int8 edge counts (exact, half the
    # HBM bytes of bf16); the 1/deg scale is applied in f32 at the finalize.
    deg = jnp.zeros((n_pad,), jnp.float32).at[dst].add(1.0)
    deg_inv = (1.0 / jnp.maximum(deg, 1.0)).reshape(n_pad, 1)
    # TODO(synk): int8 counts overflow for >127 duplicate edges between the same
    #             node pair (use int16 if such multigraphs are possible); for
    #             large sparse graphs replace the dense A with a scalar-
    #             prefetched CSR segment-sum aggregation kernel (O(E)).
    a_i8 = jnp.zeros((n_pad, n_pad), jnp.int8).at[dst, src].add(jnp.int8(1))

    # --- pad params; fold Linear(2*out_c, 1) into layer-2 weights (exact) ---
    w1l = _pad2(params["w1l"], c_in_p, hid_p).astype(jnp.bfloat16)
    w1r = _pad2(params["w1r"], c_in_p, hid_p).astype(jnp.bfloat16)
    b1 = _pad2(params["b1"], 1, hid_p)
    w_sd = jnp.concatenate([params["w_lin_src"], params["w_lin_dst"]], axis=1)
    w2l_c = _pad2(params["w2l"] @ w_sd, hid_p, sc_p).astype(jnp.bfloat16)
    w2r_c = _pad2(params["w2r"] @ w_sd, hid_p, sc_p).astype(jnp.bfloat16)
    b2_c = _pad2(params["b2"] @ w_sd, 1, sc_p)

    x_p = jnp.zeros((n_pad, c_in_p), jnp.float32).at[:n, :c_in].set(x)

    # --- encode ---
    y1, s1 = prep_layer1(x_p, w1l, w1r, b1, tm=tm)
    y2, s2 = sage_layer1(a_i8, y1, deg_inv, s1, w2l_c, w2r_c, b2_c, tm=tm, tk=tk)
    scores = sage_layer2(a_i8, y2, deg_inv, s2, tm=tm, tk=tk)   # [n_pad, 128] f32

    # --- decode: scalar gather per edge (XLA glue) + add/sigmoid kernel ---
    ssrc = jnp.zeros((1, e_pad), jnp.float32).at[0, :e].set(scores[src, 0])
    sdst = jnp.zeros((1, e_pad), jnp.float32).at[0, :e].set(scores[dst, 1])
    probs_row = decode(ssrc, sdst, params["b_lin"], te=te)      # [1, e_pad]
    return probs_row[0, :e].reshape(e, 1)


# ---------------------------------------------------------------------------
# Parameters (logical PyTorch shapes) and a pure-JAX f32 reference.
# ---------------------------------------------------------------------------
def init_params(key, in_channels, hidden_channels, out_channels):
    ks = jax.random.split(key, 7)
    s = 0.1
    return {
        # SAGEConv1: lin_l (with bias) on aggregated msgs, lin_r (no bias) on self
        "w1l": s * jax.random.normal(ks[0], (in_channels, hidden_channels), jnp.float32),
        "w1r": s * jax.random.normal(ks[1], (in_channels, hidden_channels), jnp.float32),
        "b1": s * jax.random.normal(ks[2], (1, hidden_channels), jnp.float32),
        # SAGEConv2
        "w2l": s * jax.random.normal(ks[3], (hidden_channels, out_channels), jnp.float32),
        "w2r": s * jax.random.normal(ks[4], (hidden_channels, out_channels), jnp.float32),
        "b2": s * jax.random.normal(ks[5], (1, out_channels), jnp.float32),
        # Linear(2*out_channels, 1): weight^T split into src / dst halves
        "w_lin_src": s * jax.random.normal(ks[6], (out_channels, 1), jnp.float32),
        "w_lin_dst": s * jax.random.normal(jax.random.fold_in(ks[6], 1),
                                           (out_channels, 1), jnp.float32),
        "b_lin": jnp.zeros((1, 1), jnp.float32),
    }


def reference_forward(x, edge_index, params):
    n = x.shape[0]
    src, dst = edge_index[0], edge_index[1]
    a = jnp.zeros((n, n), jnp.float32).at[dst, src].add(1.0)
    a_mean = a / jnp.maximum(jnp.sum(a, axis=1, keepdims=True), 1.0)
    norm = jnp.sqrt(jnp.sum(x * x, axis=1, keepdims=True))
    xn = x / jnp.maximum(norm, 1e-12)
    h = jnp.maximum(a_mean @ xn @ params["w1l"] + params["b1"] + xn @ params["w1r"], 0.0)
    z = a_mean @ h @ params["w2l"] + params["b2"] + h @ params["w2r"]
    logits = z[src] @ params["w_lin_src"] + z[dst] @ params["w_lin_dst"] + params["b_lin"]
    return jax.nn.sigmoid(logits)


if __name__ == "__main__":
    key = jax.random.PRNGKey(0)
    n_nodes, n_edges = 200, 320
    in_channels, hidden_channels, out_channels = 8, 32, 16

    kx, ke, kp = jax.random.split(key, 3)
    x = jax.random.normal(kx, (n_nodes, in_channels), jnp.float32)
    edge_index = jax.random.randint(ke, (2, n_edges), 0, n_nodes, dtype=jnp.int32)
    params = init_params(kp, in_channels, hidden_channels, out_channels)

    # Small tiles so the multi-tile (parallel-M, arbitrary-K) accumulator path is
    # exercised even at demo sizes; production defaults are tm=512, tk=1024, te=512.
    fwd = jax.jit(functools.partial(forward, tm=128, tk=128, te=128))
    probs = jax.block_until_ready(fwd(x, edge_index, params))

    assert probs.shape == (n_edges, 1)
    assert bool(jnp.all(jnp.isfinite(probs)))
    assert bool(jnp.all((probs >= 0.0) & (probs <= 1.0)))

    ref = reference_forward(x, edge_index, params)
    max_err = float(jnp.max(jnp.abs(probs - ref)))
    assert max_err < 2e-2, f"mismatch vs f32 reference: {max_err}"
    print("KERNEL_OK")
</pallas_src>

<mosaic_0001>
module attributes {stable_mosaic.version = 11 : i64} {
  func.func private @main(%arg0: i32) attributes {dimension_semantics = [#tpu.dimension_semantics<core_parallel>], iteration_bounds = array<i64: 2>, tpu.core_type = #tpu.core_type<sc_scalar_subcore>, window_params = []} {
    return
  }
}

module attributes {stable_mosaic.version = 11 : i64} {
  func.func private @main(%arg0: i32) attributes {dimension_semantics = [#tpu.dimension_semantics<core_parallel>], iteration_bounds = array<i64: 2>, tpu.core_type = #tpu.core_type<sc_scalar_subcore>, window_params = []} {
    return
  }
}

module attributes {stable_mosaic.version = 11 : i64} {
  func.func @_prep_kernel(%arg0: i32, %arg1: memref<128x128xf32, #tpu.memory_space<vmem>>, %arg2: memref<128x128xbf16, #tpu.memory_space<vmem>>, %arg3: memref<128x128xbf16, #tpu.memory_space<vmem>>, %arg4: memref<1x128xf32, #tpu.memory_space<vmem>>, %arg5: memref<128x128xbf16, #tpu.memory_space<vmem>>, %arg6: memref<128x128xf32, #tpu.memory_space<vmem>>) attributes {dimension_semantics = [#tpu.dimension_semantics<parallel>], iteration_bounds = array<i64: 2>, scalar_prefetch = 0 : i64, scratch_operands = 0 : i64, tpu.core_type = #tpu.core_type<tc>, window_params = [{transform_indices = @transform_0, window_bounds = array<i64: 128, 128>}, {pipeline_mode = #tpu.pipeline_mode<synchronous>, transform_indices = @transform_1, window_bounds = array<i64: 128, 128>}, {pipeline_mode = #tpu.pipeline_mode<synchronous>, transform_indices = @transform_2, window_bounds = array<i64: 128, 128>}, {pipeline_mode = #tpu.pipeline_mode<synchronous>, transform_indices = @transform_3, window_bounds = array<i64: 1, 128>}, {transform_indices = @transform_4, window_bounds = array<i64: 128, 128>}, {transform_indices = @transform_5, window_bounds = array<i64: 128, 128>}]} {
    %c0 = arith.constant 0 : index
    %c0_0 = arith.constant 0 : index
    %0 = vector.load %arg1[%c0, %c0_0] : memref<128x128xf32, #tpu.memory_space<vmem>>, vector<128x128xf32>
    %1 = arith.mulf %0, %0 : vector<128x128xf32>
    %cst = arith.constant dense<0.000000e+00> : vector<128xf32>
    %2 = vector.multi_reduction <add>, %1, %cst [1] : vector<128x128xf32> to vector<128xf32>
    %3 = vector.shape_cast %2 : vector<128xf32> to vector<128x1xf32>
    %cst_1 = arith.constant 1.000000e-24 : f32
    %4 = vector.broadcast %cst_1 : f32 to vector<128x1xf32>
    %5 = arith.maximumf %3, %4 : vector<128x1xf32>
    %6 = math.rsqrt %5 : vector<128x1xf32>
    %7 = vector.broadcast %6 : vector<128x1xf32> to vector<128x128xf32>
    %8 = arith.mulf %0, %7 : vector<128x128xf32>
    %9 = arith.truncf %8 : vector<128x128xf32> to vector<128x128xbf16>
    %c0_2 = arith.constant 0 : index
    %c0_3 = arith.constant 0 : index
    %10 = vector.load %arg2[%c0_2, %c0_3] : memref<128x128xbf16, #tpu.memory_space<vmem>>, vector<128x128xbf16>
    %cst_4 = arith.constant dense<0.000000e+00> : vector<128x128xf32>
    %11 = tpu.matmul %9, %10, %cst_4 {dimension_numbers = #tpu.dot_dimension_numbers<[1], [0], [0], [1], [0, 0, 1, 1], [], []>} : vector<128x128xbf16>, vector<128x128xbf16>, vector<128x128xf32> -> vector<128x128xf32>
    %12 = arith.truncf %11 : vector<128x128xf32> to vector<128x128xbf16>
    %c0_5 = arith.constant 0 : index
    %c0_6 = arith.constant 0 : index
    %13 = vector.load %arg5[%c0_5, %c0_6] : memref<128x128xbf16, #tpu.memory_space<vmem>>, vector<128x128xbf16>
    tpu.vector_store %arg5[%c0_5, %c0_6], %12 {strides = array<i32>} : memref<128x128xbf16, #tpu.memory_space<vmem>>, vector<128x128xbf16>,
    %c0_7 = arith.constant 0 : index
    %c0_8 = arith.constant 0 : index
    %14 = vector.load %arg3[%c0_7, %c0_8] : memref<128x128xbf16, #tpu.memory_space<vmem>>, vector<128x128xbf16>
    %cst_9 = arith.constant dense<0.000000e+00> : vector<128x128xf32>
    %15 = tpu.matmul %9, %14, %cst_9 {dimension_numbers = #tpu.dot_dimension_numbers<[1], [0], [0], [1], [0, 0, 1, 1], [], []>} : vector<128x128xbf16>, vector<128x128xbf16>, vector<128x128xf32> -> vector<128x128xf32>
    %c0_10 = arith.constant 0 : index
    %c0_11 = arith.constant 0 : index
    %16 = vector.load %arg4[%c0_10, %c0_11] : memref<1x128xf32, #tpu.memory_space<vmem>>, vector<1x128xf32>
    %17 = vector.broadcast %16 : vector<1x128xf32> to vector<128x128xf32>
    %18 = arith.addf %15, %17 : vector<128x128xf32>
    %c0_12 = arith.constant 0 : index
    %c0_13 = arith.constant 0 : index
    %19 = vector.load %arg6[%c0_12, %c0_13] : memref<128x128xf32, #tpu.memory_space<vmem>>, vector<128x128xf32>
    tpu.vector_store %arg6[%c0_12, %c0_13], %18 {strides = array<i32>} : memref<128x128xf32, #tpu.memory_space<vmem>>, vector<128x128xf32>,
    return
  }
  func.func @transform_0(%arg0: i32) -> (i32, i32) {
    %c0_i32 = arith.constant 0 : i32
    %c0_i32_0 = arith.constant 0 : i32
    return %arg0, %c0_i32 : i32, i32
  }
  func.func @transform_1(%arg0: i32) -> (i32, i32) {
    %c0_i32 = arith.constant 0 : i32
    %c0_i32_0 = arith.constant 0 : i32
    %c0_i32_1 = arith.constant 0 : i32
    return %c0_i32, %c0_i32_0 : i32, i32
  }
  func.func @transform_2(%arg0: i32) -> (i32, i32) {
    %c0_i32 = arith.constant 0 : i32
    %c0_i32_0 = arith.constant 0 : i32
    %c0_i32_1 = arith.constant 0 : i32
    return %c0_i32, %c0_i32_0 : i32, i32
  }
  func.func @transform_3(%arg0: i32) -> (i32, i32) {
    %c0_i32 = arith.constant 0 : i32
    %c0_i32_0 = arith.constant 0 : i32
    %c0_i32_1 = arith.constant 0 : i32
    return %c0_i32, %c0_i32_0 : i32, i32
  }
  func.func @transform_4(%arg0: i32) -> (i32, i32) {
    %c0_i32 = arith.constant 0 : i32
    %c0_i32_0 = arith.constant 0 : i32
    return %arg0, %c0_i32 : i32, i32
  }
  func.func @transform_5(%arg0: i32) -> (i32, i32) {
    %c0_i32 = arith.constant 0 : i32
    %c0_i32_0 = arith.constant 0 : i32
    return %arg0, %c0_i32 : i32, i32
  }
}

module attributes {stable_mosaic.version = 11 : i64} {
  func.func @_sage1_kernel(%arg0: i32, %arg1: i32, %arg2: memref<128x128xi8, #tpu.memory_space<vmem>>, %arg3: memref<128x128xbf16, #tpu.memory_space<vmem>>, %arg4: memref<128x1xf32, #tpu.memory_space<vmem>>, %arg5: memref<128x128xf32, #tpu.memory_space<vmem>>, %arg6: memref<128x128xbf16, #tpu.memory_space<vmem>>, %arg7: memref<128x128xbf16, #tpu.memory_space<vmem>>, %arg8: memref<1x128xf32, #tpu.memory_space<vmem>>, %arg9: memref<128x128xbf16, #tpu.memory_space<vmem>>, %arg10: memref<128x128xf32, #tpu.memory_space<vmem>>, %arg11: memref<128x128xf32, #tpu.memory_space<vmem>>) attributes {dimension_semantics = [#tpu.dimension_semantics<parallel>, #tpu.dimension_semantics<arbitrary>], iteration_bounds = array<i64: 2, 2>, scalar_prefetch = 0 : i64, scratch_operands = 1 : i64, tpu.core_type = #tpu.core_type<tc>, window_params = [{transform_indices = @transform_0, window_bounds = array<i64: 128, 128>}, {transform_indices = @transform_1, window_bounds = array<i64: 128, 128>}, {transform_indices = @transform_2, window_bounds = array<i64: 128, 1>}, {transform_indices = @transform_3, window_bounds = array<i64: 128, 128>}, {pipeline_mode = #tpu.pipeline_mode<synchronous>, transform_indices = @transform_4, window_bounds = array<i64: 128, 128>}, {pipeline_mode = #tpu.pipeline_mode<synchronous>, transform_indices = @transform_5, window_bounds = array<i64: 128, 128>}, {pipeline_mode = #tpu.pipeline_mode<synchronous>, transform_indices = @transform_6, window_bounds = array<i64: 1, 128>}, {transform_indices = @transform_7, window_bounds = array<i64: 128, 128>}, {transform_indices = @transform_8, window_bounds = array<i64: 128, 128>}]} {
    %c0_i32 = arith.constant 0 : i32
    %0 = arith.cmpi eq, %arg1, %c0_i32 : i32
    %1 = arith.extui %0 : i1 to i32
    %c0_i32_0 = arith.constant 0 : i32
    %2 = arith.cmpi ne, %1, %c0_i32_0 : i32
    scf.if %2 {
      %cst_9 = arith.constant 0.000000e+00 : f32
      %13 = vector.broadcast %cst_9 : f32 to vector<128x128xf32>
      %c0_10 = arith.constant 0 : index
      %c0_11 = arith.constant 0 : index
      %14 = vector.load %arg11[%c0_10, %c0_11] : memref<128x128xf32, #tpu.memory_space<vmem>>, vector<128x128xf32>
      tpu.vector_store %arg11[%c0_10, %c0_11], %13 {strides = array<i32>} : memref<128x128xf32, #tpu.memory_space<vmem>>, vector<128x128xf32>,
    } else {
    }
    %c0 = arith.constant 0 : index
    %c0_1 = arith.constant 0 : index
    %3 = vector.load %arg11[%c0, %c0_1] : memref<128x128xf32, #tpu.memory_space<vmem>>, vector<128x128xf32>
    %c0_2 = arith.constant 0 : index
    %c0_3 = arith.constant 0 : index
    %4 = vector.load %arg2[%c0_2, %c0_3] : memref<128x128xi8, #tpu.memory_space<vmem>>, vector<128x128xi8>
    %5 = arith.sitofp %4 : vector<128x128xi8> to vector<128x128xbf16>
    %c0_4 = arith.constant 0 : index
    %c0_5 = arith.constant 0 : index
    %6 = vector.load %arg3[%c0_4, %c0_5] : memref<128x128xbf16, #tpu.memory_space<vmem>>, vector<128x128xbf16>
    %cst = arith.constant dense<0.000000e+00> : vector<128x128xf32>
    %7 = tpu.matmul %5, %6, %cst {dimension_numbers = #tpu.dot_dimension_numbers<[1], [0], [0], [1], [0, 0, 1, 1], [], []>} : vector<128x128xbf16>, vector<128x128xbf16>, vector<128x128xf32> -> vector<128x128xf32>
    %8 = arith.addf %3, %7 : vector<128x128xf32>
    %c0_6 = arith.constant 0 : index
    %c0_7 = arith.constant 0 : index
    %9 = vector.load %arg11[%c0_6, %c0_7] : memref<128x128xf32, #tpu.memory_space<vmem>>, vector<128x128xf32>
    tpu.vector_store %arg11[%c0_6, %c0_7], %8 {strides = array<i32>} : memref<128x128xf32, #tpu.memory_space<vmem>>, vector<128x128xf32>,
    %c1_i32 = arith.constant 1 : i32
    %10 = arith.cmpi eq, %arg1, %c1_i32 : i32
    %11 = arith.extui %10 : i1 to i32
    %c0_i32_8 = arith.constant 0 : i32
    %12 = arith.cmpi ne, %11, %c0_i32_8 : i32
    scf.if %12 {
      %c0_9 = arith.constant 0 : index
      %c0_10 = arith.constant 0 : index
      %13 = vector.load %arg4[%c0_9, %c0_10] : memref<128x1xf32, #tpu.memory_space<vmem>>, vector<128x1xf32>
      %c0_11 = arith.constant 0 : index
      %c0_12 = arith.constant 0 : index
      %14 = vector.load %arg11[%c0_11, %c0_12] : memref<128x128xf32, #tpu.memory_space<vmem>>, vector<128x128xf32>
      %15 = vector.broadcast %13 : vector<128x1xf32> to vector<128x128xf32>
      %16 = arith.mulf %15, %14 : vector<128x128xf32>
      %c0_13 = arith.constant 0 : index
      %c0_14 = arith.constant 0 : index
      %17 = vector.load %arg5[%c0_13, %c0_14] : memref<128x128xf32, #tpu.memory_space<vmem>>, vector<128x128xf32>
      %18 = arith.addf %16, %17 : vector<128x128xf32>
      %cst_15 = arith.constant 0.000000e+00 : f32
      %19 = vector.broadcast %cst_15 : f32 to vector<128x128xf32>
      %20 = arith.maximumf %18, %19 : vector<128x128xf32>
      %21 = arith.truncf %20 : vector<128x128xf32> to vector<128x128xbf16>
      %c0_16 = arith.constant 0 : index
      %c0_17 = arith.constant 0 : index
      %22 = vector.load %arg6[%c0_16, %c0_17] : memref<128x128xbf16, #tpu.memory_space<vmem>>, vector<128x128xbf16>
      %cst_18 = arith.constant dense<0.000000e+00> : vector<128x128xf32>
      %23 = tpu.matmul %21, %22, %cst_18 {dimension_numbers = #tpu.dot_dimension_numbers<[1], [0], [0], [1], [0, 0, 1, 1], [], []>} : vector<128x128xbf16>, vector<128x128xbf16>, vector<128x128xf32> -> vector<128x128xf32>
      %24 = arith.truncf %23 : vector<128x128xf32> to vector<128x128xbf16>
      %c0_19 = arith.constant 0 : index
      %c0_20 = arith.constant 0 : index
      %25 = vector.load %arg9[%c0_19, %c0_20] : memref<128x128xbf16, #tpu.memory_space<vmem>>, vector<128x128xbf16>
      tpu.vector_store %arg9[%c0_19, %c0_20], %24 {strides = array<i32>} : memref<128x128xbf16, #tpu.memory_space<vmem>>, vector<128x128xbf16>,
      %c0_21 = arith.constant 0 : index
      %c0_22 = arith.constant 0 : index
      %26 = vector.load %arg7[%c0_21, %c0_22] : memref<128x128xbf16, #tpu.memory_space<vmem>>, vector<128x128xbf16>
      %cst_23 = arith.constant dense<0.000000e+00> : vector<128x128xf32>
      %27 = tpu.matmul %21, %26, %cst_23 {dimension_numbers = #tpu.dot_dimension_numbers<[1], [0], [0], [1], [0, 0, 1, 1], [], []>} : vector<128x128xbf16>, vector<128x128xbf16>, vector<128x128xf32> -> vector<128x128xf32>
      %c0_24 = arith.constant 0 : index
      %c0_25 = arith.constant 0 : index
      %28 = vector.load %arg8[%c0_24, %c0_25] : memref<1x128xf32, #tpu.memory_space<vmem>>, vector<1x128xf32>
      %29 = vector.broadcast %28 : vector<1x128xf32> to vector<128x128xf32>
      %30 = arith.addf %27, %29 : vector<128x128xf32>
      %c0_26 = arith.constant 0 : index
      %c0_27 = arith.constant 0 : index
      %31 = vector.load %arg10[%c0_26, %c0_27] : memref<128x128xf32, #tpu.memory_space<vmem>>, vector<128x128xf32>
      tpu.vector_store %arg10[%c0_26, %c0_27], %30 {strides = array<i32>} : memref<128x128xf32, #tpu.memory_space<vmem>>, vector<128x128xf32>,
    } else {
    }
    return
  }
  func.func @transform_0(%arg0: i32, %arg1: i32) -> (i32, i32) {
    %c0_i32 = arith.constant 0 : i32
    return %arg0, %arg1 : i32, i32
  }
  func.func @transform_1(%arg0: i32, %arg1: i32) -> (i32, i32) {
    %c0_i32 = arith.constant 0 : i32
    %c0_i32_0 = arith.constant 0 : i32
    return %arg1, %c0_i32 : i32, i32
  }
  func.func @transform_2(%arg0: i32, %arg1: i32) -> (i32, i32) {
    %c0_i32 = arith.constant 0 : i32
    %c0_i32_0 = arith.constant 0 : i32
    return %arg0, %c0_i32 : i32, i32
  }
  func.func @transform_3(%arg0: i32, %arg1: i32) -> (i32, i32) {
    %c0_i32 = arith.constant 0 : i32
    %c0_i32_0 = arith.constant 0 : i32
    return %arg0, %c0_i32 : i32, i32
  }
  func.func @transform_4(%arg0: i32, %arg1: i32) -> (i32, i32) {
    %c0_i32 = arith.constant 0 : i32
    %c0_i32_0 = arith.constant 0 : i32
    %c0_i32_1 = arith.constant 0 : i32
    return %c0_i32, %c0_i32_0 : i32, i32
  }
  func.func @transform_5(%arg0: i32, %arg1: i32) -> (i32, i32) {
    %c0_i32 = arith.constant 0 : i32
    %c0_i32_0 = arith.constant 0 : i32
    %c0_i32_1 = arith.constant 0 : i32
    return %c0_i32, %c0_i32_0 : i32, i32
  }
  func.func @transform_6(%arg0: i32, %arg1: i32) -> (i32, i32) {
    %c0_i32 = arith.constant 0 : i32
    %c0_i32_0 = arith.constant 0 : i32
    %c0_i32_1 = arith.constant 0 : i32
    return %c0_i32, %c0_i32_0 : i32, i32
  }
  func.func @transform_7(%arg0: i32, %arg1: i32) -> (i32, i32) {
    %c0_i32 = arith.constant 0 : i32
    %c0_i32_0 = arith.constant 0 : i32
    return %arg0, %c0_i32 : i32, i32
  }
  func.func @transform_8(%arg0: i32, %arg1: i32) -> (i32, i32) {
    %c0_i32 = arith.constant 0 : i32
    %c0_i32_0 = arith.constant 0 : i32
    return %arg0, %c0_i32 : i32, i32
  }
}

module attributes {stable_mosaic.version = 11 : i64} {
  func.func @_sage2_kernel(%arg0: i32, %arg1: i32, %arg2: memref<128x128xi8, #tpu.memory_space<vmem>>, %arg3: memref<128x128xbf16, #tpu.memory_space<vmem>>, %arg4: memref<128x1xf32, #tpu.memory_space<vmem>>, %arg5: memref<128x128xf32, #tpu.memory_space<vmem>>, %arg6: memref<128x128xf32, #tpu.memory_space<vmem>>, %arg7: memref<128x128xf32, #tpu.memory_space<vmem>>) attributes {dimension_semantics = [#tpu.dimension_semantics<parallel>, #tpu.dimension_semantics<arbitrary>], iteration_bounds = array<i64: 2, 2>, scalar_prefetch = 0 : i64, scratch_operands = 1 : i64, tpu.core_type = #tpu.core_type<tc>, window_params = [{transform_indices = @transform_0, window_bounds = array<i64: 128, 128>}, {transform_indices = @transform_1, window_bounds = array<i64: 128, 128>}, {transform_indices = @transform_2, window_bounds = array<i64: 128, 1>}, {transform_indices = @transform_3, window_bounds = array<i64: 128, 128>}, {transform_indices = @transform_4, window_bounds = array<i64: 128, 128>}]} {
    %c0_i32 = arith.constant 0 : i32
    %0 = arith.cmpi eq, %arg1, %c0_i32 : i32
    %1 = arith.extui %0 : i1 to i32
    %c0_i32_0 = arith.constant 0 : i32
    %2 = arith.cmpi ne, %1, %c0_i32_0 : i32
    scf.if %2 {
      %cst_9 = arith.constant 0.000000e+00 : f32
      %13 = vector.broadcast %cst_9 : f32 to vector<128x128xf32>
      %c0_10 = arith.constant 0 : index
      %c0_11 = arith.constant 0 : index
      %14 = vector.load %arg7[%c0_10, %c0_11] : memref<128x128xf32, #tpu.memory_space<vmem>>, vector<128x128xf32>
      tpu.vector_store %arg7[%c0_10, %c0_11], %13 {strides = array<i32>} : memref<128x128xf32, #tpu.memory_space<vmem>>, vector<128x128xf32>,
    } else {
    }
    %c0 = arith.constant 0 : index
    %c0_1 = arith.constant 0 : index
    %3 = vector.load %arg7[%c0, %c0_1] : memref<128x128xf32, #tpu.memory_space<vmem>>, vector<128x128xf32>
    %c0_2 = arith.constant 0 : index
    %c0_3 = arith.constant 0 : index
    %4 = vector.load %arg2[%c0_2, %c0_3] : memref<128x128xi8, #tpu.memory_space<vmem>>, vector<128x128xi8>
    %5 = arith.sitofp %4 : vector<128x128xi8> to vector<128x128xbf16>
    %c0_4 = arith.constant 0 : index
    %c0_5 = arith.constant 0 : index
    %6 = vector.load %arg3[%c0_4, %c0_5] : memref<128x128xbf16, #tpu.memory_space<vmem>>, vector<128x128xbf16>
    %cst = arith.constant dense<0.000000e+00> : vector<128x128xf32>
    %7 = tpu.matmul %5, %6, %cst {dimension_numbers = #tpu.dot_dimension_numbers<[1], [0], [0], [1], [0, 0, 1, 1], [], []>} : vector<128x128xbf16>, vector<128x128xbf16>, vector<128x128xf32> -> vector<128x128xf32>
    %8 = arith.addf %3, %7 : vector<128x128xf32>
    %c0_6 = arith.constant 0 : index
    %c0_7 = arith.constant 0 : index
    %9 = vector.load %arg7[%c0_6, %c0_7] : memref<128x128xf32, #tpu.memory_space<vmem>>, vector<128x128xf32>
    tpu.vector_store %arg7[%c0_6, %c0_7], %8 {strides = array<i32>} : memref<128x128xf32, #tpu.memory_space<vmem>>, vector<128x128xf32>,
    %c1_i32 = arith.constant 1 : i32
    %10 = arith.cmpi eq, %arg1, %c1_i32 : i32
    %11 = arith.extui %10 : i1 to i32
    %c0_i32_8 = arith.constant 0 : i32
    %12 = arith.cmpi ne, %11, %c0_i32_8 : i32
    scf.if %12 {
      %c0_9 = arith.constant 0 : index
      %c0_10 = arith.constant 0 : index
      %13 = vector.load %arg4[%c0_9, %c0_10] : memref<128x1xf32, #tpu.memory_space<vmem>>, vector<128x1xf32>
      %c0_11 = arith.constant 0 : index
      %c0_12 = arith.constant 0 : index
      %14 = vector.load %arg7[%c0_11, %c0_12] : memref<128x128xf32, #tpu.memory_space<vmem>>, vector<128x128xf32>
      %15 = vector.broadcast %13 : vector<128x1xf32> to vector<128x128xf32>
      %16 = arith.mulf %15, %14 : vector<128x128xf32>
      %c0_13 = arith.constant 0 : index
      %c0_14 = arith.constant 0 : index
      %17 = vector.load %arg5[%c0_13, %c0_14] : memref<128x128xf32, #tpu.memory_space<vmem>>, vector<128x128xf32>
      %18 = arith.addf %16, %17 : vector<128x128xf32>
      %c0_15 = arith.constant 0 : index
      %c0_16 = arith.constant 0 : index
      %19 = vector.load %arg6[%c0_15, %c0_16] : memref<128x128xf32, #tpu.memory_space<vmem>>, vector<128x128xf32>
      tpu.vector_store %arg6[%c0_15, %c0_16], %18 {strides = array<i32>} : memref<128x128xf32, #tpu.memory_space<vmem>>, vector<128x128xf32>,
    } else {
    }
    return
  }
  func.func @transform_0(%arg0: i32, %arg1: i32) -> (i32, i32) {
    %c0_i32 = arith.constant 0 : i32
    return %arg0, %arg1 : i32, i32
  }
  func.func @transform_1(%arg0: i32, %arg1: i32) -> (i32, i32) {
    %c0_i32 = arith.constant 0 : i32
    %c0_i32_0 = arith.constant 0 : i32
    return %arg1, %c0_i32 : i32, i32
  }
  func.func @transform_2(%arg0: i32, %arg1: i32) -> (i32, i32) {
    %c0_i32 = arith.constant 0 : i32
    %c0_i32_0 = arith.constant 0 : i32
    return %arg0, %c0_i32 : i32, i32
  }
  func.func @transform_3(%arg0: i32, %arg1: i32) -> (i32, i32) {
    %c0_i32 = arith.constant 0 : i32
    %c0_i32_0 = arith.constant 0 : i32
    return %arg0, %c0_i32 : i32, i32
  }
  func.func @transform_4(%arg0: i32, %arg1: i32) -> (i32, i32) {
    %c0_i32 = arith.constant 0 : i32
    %c0_i32_0 = arith.constant 0 : i32
    return %arg0, %c0_i32 : i32, i32
  }
}

module attributes {stable_mosaic.version = 11 : i64} {
  func.func @_decode_kernel(%arg0: i32, %arg1: memref<1x128xf32, #tpu.memory_space<vmem>>, %arg2: memref<1x128xf32, #tpu.memory_space<vmem>>, %arg3: memref<1x1xf32, #tpu.memory_space<vmem>>, %arg4: memref<1x128xf32, #tpu.memory_space<vmem>>) attributes {dimension_semantics = [#tpu.dimension_semantics<parallel>], iteration_bounds = array<i64: 3>, scalar_prefetch = 0 : i64, scratch_operands = 0 : i64, tpu.core_type = #tpu.core_type<tc>, window_params = [{transform_indices = @transform_0, window_bounds = array<i64: 1, 128>}, {transform_indices = @transform_1, window_bounds = array<i64: 1, 128>}, {pipeline_mode = #tpu.pipeline_mode<synchronous>, transform_indices = @transform_2, window_bounds = array<i64: 1, 1>}, {transform_indices = @transform_3, window_bounds = array<i64: 1, 128>}]} {
    %c0 = arith.constant 0 : index
    %c0_0 = arith.constant 0 : index
    %0 = vector.load %arg1[%c0, %c0_0] : memref<1x128xf32, #tpu.memory_space<vmem>>, vector<1x128xf32>
    %c0_1 = arith.constant 0 : index
    %c0_2 = arith.constant 0 : index
    %1 = vector.load %arg2[%c0_1, %c0_2] : memref<1x128xf32, #tpu.memory_space<vmem>>, vector<1x128xf32>
    %2 = arith.addf %0, %1 : vector<1x128xf32>
    %c0_3 = arith.constant 0 : index
    %c0_4 = arith.constant 0 : index
    %3 = vector.load %arg3[%c0_3, %c0_4] : memref<1x1xf32, #tpu.memory_space<vmem>>, vector<1x1xf32>
    %4 = vector.broadcast %3 : vector<1x1xf32> to vector<1x128xf32>
    %5 = arith.addf %2, %4 : vector<1x128xf32>
    %6 = arith.negf %5 : vector<1x128xf32>
    %7 = math.exp %6 : vector<1x128xf32>
    %cst = arith.constant 1.000000e+00 : f32
    %8 = vector.broadcast %cst : f32 to vector<1x128xf32>
    %9 = arith.addf %8, %7 : vector<1x128xf32>
    %10 = arith.divf %8, %9 : vector<1x128xf32>
    %c0_5 = arith.constant 0 : index
    %c0_6 = arith.constant 0 : index
    %11 = vector.load %arg4[%c0_5, %c0_6] : memref<1x128xf32, #tpu.memory_space<vmem>>, vector<1x128xf32>
    tpu.vector_store %arg4[%c0_5, %c0_6], %10 {strides = array<i32>} : memref<1x128xf32, #tpu.memory_space<vmem>>, vector<1x128xf32>,
    return
  }
  func.func @transform_0(%arg0: i32) -> (i32, i32) {
    %c0_i32 = arith.constant 0 : i32
    %c0_i32_0 = arith.constant 0 : i32
    return %c0_i32, %arg0 : i32, i32
  }
  func.func @transform_1(%arg0: i32) -> (i32, i32) {
    %c0_i32 = arith.constant 0 : i32
    %c0_i32_0 = arith.constant 0 : i32
    return %c0_i32, %arg0 : i32, i32
  }
  func.func @transform_2(%arg0: i32) -> (i32, i32) {
    %c0_i32 = arith.constant 0 : i32
    %c0_i32_0 = arith.constant 0 : i32
    %c0_i32_1 = arith.constant 0 : i32
    return %c0_i32, %c0_i32_0 : i32, i32
  }
  func.func @transform_3(%arg0: i32) -> (i32, i32) {
    %c0_i32 = arith.constant 0 : i32
    %c0_i32_0 = arith.constant 0 : i32
    return %c0_i32, %arg0 : i32, i32
  }
}

</mosaic_0001>

<llo_original>
// kernel: forward.4
$region0: #{forward.4}
  #allocation0 [shape = 'u32[]', space=smem, size = 0x4, offset = 0x4, fixed_abs, tag = 'smem constant byte address 0x4 - core index']
  #allocation1 [shape = 'u32[144,128]{1,0:T(1,128)}', space=vmem, size = 0x12000, scoped, tag = 'internal scratch']
  %s0 = inlined_call_operand.vmem [shape: f32[256,128], index: 0, kind: input, shape index: {}]
  %s1 = inlined_call_operand.vmem [shape: bf16[128,128], index: 1, kind: input, shape index: {}]
  %s2 = inlined_call_operand.vmem [shape: bf16[128,128], index: 2, kind: input, shape index: {}]
  %s3 = inlined_call_operand.vmem [shape: f32[1,128], index: 3, kind: input, shape index: {}]
  %s4 = inlined_call_operand.vmem [shape: bf16[256,128], index: 4, kind: output, shape index: {0}]
  %s5 = inlined_call_operand.vmem [shape: f32[256,128], index: 5, kind: output, shape index: {1}]
  %6 = xla_tuple %s4, %s5
  %s7 = sld [smem:[#allocation0]]
  $region57: #{forward.4} parent=0
    _
  %s9 = ssub.s32 1, %s7
  %s10 = scalar_select 0, %s9, %s7
  loop: start=0, step=1, limit=4
  $region2: #{forward.4} parent=0 // loop_pre_header
    _
  $region3: #{forward.4} parent=0 // loop_header
    %s12 = sphi 0, %s16
    %p13 = scmp.ge.s32.totalorder %s12, 4
    %s22 = sphi 0, %s24
    %s25 = sphi 0, %s22
    %s26 = sphi 0, %s25
    %s42 = sphi 0, %s26
    %s46 = sphi 0, %s46
    %s48 = sphi 0, %s46
    %s49 = sphi 0, %s48
    %s63 = sphi 0, %s49
    %s67 = sphi 0, %s67
    %s69 = sphi 0, %s67
    %s70 = sphi 0, %s69
    %s84 = sphi 0, %s70
    %s88 = sphi 0, %s88
    %s90 = sphi 0, %s88
    %s91 = sphi 0, %s90
    %s105 = sphi 0, %s91
    %s111 = sphi 0, %s113
    %s114 = sphi 0, %s111
    %s115 = sphi 0, %s114
    %s131 = sphi 0, %s115
    %s137 = sphi 0, %s139
    %s140 = sphi 0, %s137
    %s141 = sphi 0, %s140
    %s157 = sphi 0, %s141
  $region4: #{forward.4} parent=0 // loop_header_branch
    %15 = sbr.rel (%p13) target = $region8
  $region5: #{forward.4} parent=0 // loop_body
    %s17 = ssub.s32 %s12, 1
    %s18 = ssub.s32 %s12, 2
    %s19 = sadd.s32 %s12, 1
    %s20 = ssub.s32 %s12, %s19
    %p21 = scmp.eq.s32.totalorder %s20, 0
    %s23 = sadd.s32 %s22, 1
    %s24 = scalar_select %p21, %s22, %s23
    %p27 = pneg %p21
    %p28 = scmp.eq.s32.totalorder %s12, 1
    %p29 = por %p27, %p28
    %p30 = scmp.ne.s32.totalorder %s22, %s25
    %p31 = scmp.eq.s32.totalorder %s12, 0
    %p32 = por %p30, %p31
    %p33 = scmp.ne.s32.totalorder %s22, %s25
    %p34 = scmp.eq.s32.totalorder %s17, 1
    %p35 = por %p33, %p34
    %p36 = scmp.ne.s32.totalorder %s25, %s26
    %p37 = scmp.eq.s32.totalorder %s17, 0
    %p38 = por %p36, %p37
    %p39 = scmp.ne.s32.totalorder %s25, %s26
    %p40 = scmp.eq.s32.totalorder %s18, 1
    %p41 = por %p39, %p40
    %p43 = scmp.ne.s32.totalorder %s26, %s42
    %p44 = scmp.eq.s32.totalorder %s18, 0
    %p45 = por %p43, %p44
    %s47 = sadd.s32 %s46, 1
    %p50 = scmp.eq.s32.totalorder %s12, 1
    %p51 = scmp.ne.s32.totalorder %s46, %s48
    %p52 = scmp.eq.s32.totalorder %s12, 0
    %p53 = por %p51, %p52
    %p54 = scmp.ne.s32.totalorder %s46, %s48
    %p55 = scmp.eq.s32.totalorder %s17, 1
    %p56 = por %p54, %p55
    %p57 = scmp.ne.s32.totalorder %s48, %s49
    %p58 = scmp.eq.s32.totalorder %s17, 0
    %p59 = por %p57, %p58
    %p60 = scmp.ne.s32.totalorder %s48, %s49
    %p61 = scmp.eq.s32.totalorder %s18, 1
    %p62 = por %p60, %p61
    %p64 = scmp.ne.s32.totalorder %s49, %s63
    %p65 = scmp.eq.s32.totalorder %s18, 0
    %p66 = por %p64, %p65
    %s68 = sadd.s32 %s67, 1
    %p71 = scmp.eq.s32.totalorder %s12, 1
    %p72 = scmp.ne.s32.totalorder %s67, %s69
    %p73 = scmp.eq.s32.totalorder %s12, 0
    %p74 = por %p72, %p73
    %p75 = scmp.ne.s32.totalorder %s67, %s69
    %p76 = scmp.eq.s32.totalorder %s17, 1
    %p77 = por %p75, %p76
    %p78 = scmp.ne.s32.totalorder %s69, %s70
    %p79 = scmp.eq.s32.totalorder %s17, 0
    %p80 = por %p78, %p79
    %p81 = scmp.ne.s32.totalorder %s69, %s70
    %p82 = scmp.eq.s32.totalorder %s18, 1
    %p83 = por %p81, %p82
    %p85 = scmp.ne.s32.totalorder %s70, %s84
    %p86 = scmp.eq.s32.totalorder %s18, 0
    %p87 = por %p85, %p86
    %s89 = sadd.s32 %s88, 1
    %p92 = scmp.eq.s32.totalorder %s12, 1
    %p93 = scmp.ne.s32.totalorder %s88, %s90
    %p94 = scmp.eq.s32.totalorder %s12, 0
    %p95 = por %p93, %p94
    %p96 = scmp.ne.s32.totalorder %s88, %s90
    %p97 = scmp.eq.s32.totalorder %s17, 1
    %p98 = por %p96, %p97
    %p99 = scmp.ne.s32.totalorder %s90, %s91
    %p100 = scmp.eq.s32.totalorder %s17, 0
    %p101 = por %p99, %p100
    %p102 = scmp.ne.s32.totalorder %s90, %s91
    %p103 = scmp.eq.s32.totalorder %s18, 1
    %p104 = por %p102, %p103
    %p106 = scmp.ne.s32.totalorder %s91, %s105
    %p107 = scmp.eq.s32.totalorder %s18, 0
    %p108 = por %p106, %p107
    %s109 = ssub.s32 %s12, %s19
    %p110 = scmp.eq.s32.totalorder %s109, 0
    %s112 = sadd.s32 %s111, 1
    %s113 = scalar_select %p110, %s111, %s112
    %p116 = pneg %p110
    %p117 = scmp.eq.s32.totalorder %s12, 1
    %p118 = por %p116, %p117
    %p119 = scmp.ne.s32.totalorder %s111, %s114
    %p120 = scmp.eq.s32.totalorder %s12, 0
    %p121 = por %p119, %p120
    %p122 = scmp.ne.s32.totalorder %s111, %s114
    %p123 = scmp.eq.s32.totalorder %s17, 1
    %p124 = por %p122, %p123
    %p125 = scmp.ne.s32.totalorder %s114, %s115
    %p126 = scmp.eq.s32.totalorder %s17, 0
    %p127 = por %p125, %p126
    %p128 = scmp.ne.s32.totalorder %s114, %s115
    %p129 = scmp.eq.s32.totalorder %s18, 1
    %p130 = por %p128, %p129
    %p132 = scmp.ne.s32.totalorder %s115, %s131
    %p133 = scmp.eq.s32.totalorder %s18, 0
    %p134 = por %p132, %p133
    %s135 = ssub.s32 %s12, %s19
    %p136 = scmp.eq.s32.totalorder %s135, 0
    %s138 = sadd.s32 %s137, 1
    %s139 = scalar_select %p136, %s137, %s138
    %p142 = pneg %p136
    %p143 = scmp.eq.s32.totalorder %s12, 1
    %p144 = por %p142, %p143
    %p145 = scmp.ne.s32.totalorder %s137, %s140
    %p146 = scmp.eq.s32.totalorder %s12, 0
    %p147 = por %p145, %p146
    %p148 = scmp.ne.s32.totalorder %s137, %s140
    %p149 = scmp.eq.s32.totalorder %s17, 1
    %p150 = por %p148, %p149
    %p151 = scmp.ne.s32.totalorder %s140, %s141
    %p152 = scmp.eq.s32.totalorder %s17, 0
    %p153 = por %p151, %p152
    %p154 = scmp.ne.s32.totalorder %s140, %s141
    %p155 = scmp.eq.s32.totalorder %s18, 1
    %p156 = por %p154, %p155
    %p158 = scmp.ne.s32.totalorder %s141, %s157
    %p159 = scmp.eq.s32.totalorder %s18, 0
    %p160 = por %p158, %p159
    %p161 = scmp.le.s32.totalorder 1, %s12
    %p162 = scmp.lt.s32.totalorder %s12, 3
    %p163 = pnand %p161, %p162
    %p164 = pneg %p163
    // Predicated region
    $region9: #{forward.4} parent=5 // pred_check
      _
    $region10: #{forward.4} parent=5 // pred_check_branch
      %166 = sbr.rel (%p163) target = $region12
    $region11: #{forward.4} parent=5 // pred_region
      %s167 = ssub.s32 %s12, 1
      // Predicated region
      $region13: #{forward.4} parent=11 // pred_check
        %p168 = pneg %p59
      $region14: #{forward.4} parent=11 // pred_check_branch
        %170 = sbr.rel (%p168) target = $region16
      $region15: #{forward.4} parent=11 // pred_region
        _
      $region16: #{forward.4} parent=11 // pred_fallthru
        _
      // Predicated region
      $region17: #{forward.4} parent=11 // pred_check
        %p171 = pneg %p80
      $region18: #{forward.4} parent=11 // pred_check_branch
        %173 = sbr.rel (%p171) target = $region20
      $region19: #{forward.4} parent=11 // pred_region
        _
      $region20: #{forward.4} parent=11 // pred_fallthru
        _
      // Predicated region
      $region21: #{forward.4} parent=11 // pred_check
        %p174 = pneg %p101
      $region22: #{forward.4} parent=11 // pred_check_branch
        %176 = sbr.rel (%p174) target = $region24
      $region23: #{forward.4} parent=11 // pred_region
        _
      $region24: #{forward.4} parent=11 // pred_fallthru
        _
    $region12: #{forward.4} parent=5 // pred_fallthru
      _
    %p177 = scmp.lt.s32.totalorder %s12, 2
    // Predicated region
    $region25: #{forward.4} parent=5 // pred_check
      %p178 = pneg %p177
    $region26: #{forward.4} parent=5 // pred_check_branch
      %180 = sbr.rel (%p178) target = $region28
    $region27: #{forward.4} parent=5 // pred_region
      // Predicated region
      $region29: #{forward.4} parent=27 // pred_check
        %p181 = pneg %p32
      $region30: #{forward.4} parent=27 // pred_check_branch
        %183 = sbr.rel (%p181) target = $region32
      $region31: #{forward.4} parent=27 // pred_region
        %s184 = smul.u32 16, %s12
        %p185 = scmp.lt.s32.totalorder %s184, 31
        %s186 = scalar_select %p185, %s184, 31
        %s187 = smul.addr %s186, 8
        %s188 = scalar_lea.vmem %s0, %s187
        %s189 = smul.u32 16, %s12
      $region32: #{forward.4} parent=27 // pred_fallthru
        _
    $region28: #{forward.4} parent=5 // pred_fallthru
      _
    %p190 = scmp.le.s32.totalorder 1, %s12
    %p191 = scmp.lt.s32.totalorder %s12, 3
    %p192 = pnand %p190, %p191
    %p193 = pneg %p192
    // Predicated region
    $region33: #{forward.4} parent=5 // pred_check
      _
    $region34: #{forward.4} parent=5 // pred_check_branch
      %195 = sbr.rel (%p192) target = $region36
    $region35: #{forward.4} parent=5 // pred_region
      %s196 = ssub.s32 %s12, 1
      %s197 = smul.u32 16, %s17
      %p198 = scmp.lt.s32.totalorder %s197, 31
      %s199 = scalar_select %p198, %s197, 31
      %s200 = smul.addr %s199, 8
      %s201 = scalar_lea.vmem %s0, %s200
      %p202 = pneg %p38
      %p203 = pneg %p35
      %p204 = pneg %p59
      %p205 = pneg %p56
      %p206 = pneg %p80
      %p207 = pneg %p77
      %p208 = pneg %p101
      %p209 = pneg %p98
      %p210 = pneg %p127
      %p211 = pneg %p124
      %s212 = smul.u32 16, %s17
      %p213 = scmp.lt.s32.totalorder %s212, 31
      %s214 = scalar_select %p213, %s212, 31
      %s215 = smul.addr %s214, 4
      %s216 = scalar_lea.vmem %s4, %s215
      %p217 = pneg %p153
      %p218 = pneg %p150
      %s219 = smul.u32 16, %s17
      %p220 = scmp.lt.s32.totalorder %s219, 31
      %s221 = scalar_select %p220, %s219, 31
      %s222 = smul.addr %s221, 8
      %s223 = scalar_lea.vmem %s5, %s222
      %s224 = smul.u32 16, %s17
      %p225 = scmp.lt.s32.totalorder %s224, 31
      %s226 = scalar_select %p225, %s224, 31
      %s227 = smul.addr %s226, 8
      %s228 = scalar_lea.vmem %s0, %s227
      %s229 = smul.u32 16, %s17
      %s230 = smul.u32 16, %s17
      %p231 = scmp.lt.s32.totalorder %s230, 31
      %s232 = scalar_select %p231, %s230, 31
      %s233 = smul.addr %s232, 4
      %s234 = scalar_lea.vmem %s4, %s233
      %s235 = smul.u32 16, %s17
      %s236 = smul.u32 16, %s17
      %p237 = scmp.lt.s32.totalorder %s236, 31
      %s238 = scalar_select %p237, %s236, 31
      %s239 = smul.addr %s238, 8
      %s240 = scalar_lea.vmem %s5, %s239
      %s241 = smul.u32 16, %s17
      %v243 = vld [vmem:[%s228] sm:$0xff]
      %v244 = vld [vmem:[%s228 + $0x8] sm:$0xff]
      %v245 = vld [vmem:[%s228 + $0x10] sm:$0xff]
      %v246 = vld [vmem:[%s228 + $0x18] sm:$0xff]
      %v247 = vld [vmem:[%s228 + $0x20] sm:$0xff]
      %v248 = vld [vmem:[%s228 + $0x28] sm:$0xff]
      %v249 = vld [vmem:[%s228 + $0x30] sm:$0xff]
      %v250 = vld [vmem:[%s228 + $0x38] sm:$0xff]
      %v251 = vld [vmem:[%s228 + $0x40] sm:$0xff]
      %v252 = vld [vmem:[%s228 + $0x48] sm:$0xff]
      %v253 = vld [vmem:[%s228 + $0x50] sm:$0xff]
      %v254 = vld [vmem:[%s228 + $0x58] sm:$0xff]
      %v255 = vld [vmem:[%s228 + $0x60] sm:$0xff]
      %v256 = vld [vmem:[%s228 + $0x68] sm:$0xff]
      %v257 = vld [vmem:[%s228 + $0x70] sm:$0xff]
      %v258 = vld [vmem:[%s228 + $0x78] sm:$0xff]
      %v259 = vmul.f32 %v243, %v243
      %v260 = vmul.f32 %v244, %v244
      %v261 = vmul.f32 %v245, %v245
      %v262 = vmul.f32 %v246, %v246
      %v263 = vmul.f32 %v247, %v247
      %v264 = vmul.f32 %v248, %v248
      %v265 = vmul.f32 %v249, %v249
      %v266 = vmul.f32 %v250, %v250
      %v267 = vmul.f32 %v251, %v251
      %v268 = vmul.f32 %v252, %v252
      %v269 = vmul.f32 %v253, %v253
      %v270 = vmul.f32 %v254, %v254
      %v271 = vmul.f32 %v255, %v255
      %v272 = vmul.f32 %v256, %v256
      %v273 = vmul.f32 %v257, %v257
      %v274 = vmul.f32 %v258, %v258
      %275 = vadd.xlane.f32.xlu0 %v259
      %v276 = vpop.xlane.xlu0 %275
      %277 = vadd.xlane.f32.xlu0 %v260
      %v278 = vpop.xlane.xlu0 %277
      %279 = vadd.xlane.f32.xlu0 %v261
      %v280 = vpop.xlane.xlu0 %279
      %281 = vadd.xlane.f32.xlu0 %v262
      %v282 = vpop.xlane.xlu0 %281
      %283 = vadd.xlane.f32.xlu0 %v263
      %v284 = vpop.xlane.xlu0 %283
      %285 = vadd.xlane.f32.xlu0 %v264
      %v286 = vpop.xlane.xlu0 %285
      %287 = vadd.xlane.f32.xlu0 %v265
      %v288 = vpop.xlane.xlu0 %287
      %289 = vadd.xlane.f32.xlu0 %v266
      %v290 = vpop.xlane.xlu0 %289
      %291 = vadd.xlane.f32.xlu0 %v267
      %v292 = vpop.xlane.xlu0 %291
      %293 = vadd.xlane.f32.xlu0 %v268
      %v294 = vpop.xlane.xlu0 %293
      %295 = vadd.xlane.f32.xlu0 %v269
      %v296 = vpop.xlane.xlu0 %295
      %297 = vadd.xlane.f32.xlu0 %v270
      %v298 = vpop.xlane.xlu0 %297
      %299 = vadd.xlane.f32.xlu0 %v271
      %v300 = vpop.xlane.xlu0 %299
      %301 = vadd.xlane.f32.xlu0 %v272
      %v302 = vpop.xlane.xlu0 %301
      %303 = vadd.xlane.f32.xlu0 %v273
      %v304 = vpop.xlane.xlu0 %303
      %305 = vadd.xlane.f32.xlu0 %v274
      %v306 = vpop.xlane.xlu0 %305
      %v307 = vmax.f32 %v276, 1e-24
      %v308 = vmax.f32 %v278, 1e-24
      %v309 = vmax.f32 %v280, 1e-24
      %v310 = vmax.f32 %v282, 1e-24
      %v311 = vmax.f32 %v284, 1e-24
      %v312 = vmax.f32 %v286, 1e-24
      %v313 = vmax.f32 %v288, 1e-24
      %v314 = vmax.f32 %v290, 1e-24
      %v315 = vmax.f32 %v292, 1e-24
      %v316 = vmax.f32 %v294, 1e-24
      %v317 = vmax.f32 %v296, 1e-24
      %v318 = vmax.f32 %v298, 1e-24
      %v319 = vmax.f32 %v300, 1e-24
      %v320 = vmax.f32 %v302, 1e-24
      %v321 = vmax.f32 %v304, 1e-24
      %v322 = vmax.f32 %v306, 1e-24
      %v323 = vrsqrt.pop %v307
      %v324 = vrsqrt.pop %v308
      %v325 = vrsqrt.pop %v309
      %v326 = vrsqrt.pop %v310
      %v327 = vrsqrt.pop %v311
      %v328 = vrsqrt.pop %v312
      %v329 = vrsqrt.pop %v313
      %v330 = vrsqrt.pop %v314
      %v331 = vrsqrt.pop %v315
      %v332 = vrsqrt.pop %v316
      %v333 = vrsqrt.pop %v317
      %v334 = vrsqrt.pop %v318
      %v335 = vrsqrt.pop %v319
      %v336 = vrsqrt.pop %v320
      %v337 = vrsqrt.pop %v321
      %v338 = vrsqrt.pop %v322
      %v339 = vmul.f32 %v243, %v323
      %v340 = vmul.f32 %v244, %v324
      %v341 = vmul.f32 %v245, %v325
      %v342 = vmul.f32 %v246, %v326
      %v343 = vmul.f32 %v247, %v327
      %v344 = vmul.f32 %v248, %v328
      %v345 = vmul.f32 %v249, %v329
      %v346 = vmul.f32 %v250, %v330
      %v347 = vmul.f32 %v251, %v331
      %v348 = vmul.f32 %v252, %v332
      %v349 = vmul.f32 %v253, %v333
      %v350 = vmul.f32 %v254, %v334
      %v351 = vmul.f32 %v255, %v335
      %v352 = vmul.f32 %v256, %v336
      %v353 = vmul.f32 %v257, %v337
      %v354 = vmul.f32 %v258, %v338
      %v355 = vpack.c.bf16 %v340, %v339
      %v356 = vpack.c.bf16 %v342, %v341
      %v357 = vpack.c.bf16 %v344, %v343
      %v358 = vpack.c.bf16 %v346, %v345
      %v359 = vpack.c.bf16 %v348, %v347
      %v360 = vpack.c.bf16 %v350, %v349
      %v361 = vpack.c.bf16 %v352, %v351
      %v362 = vpack.c.bf16 %v354, %v353
      %v363 = vld [vmem:[%s1] sm:$0xf]
      %v364 = vld [vmem:[%s1 + $0x4] sm:$0xf]
      %v365 = vld [vmem:[%s1 + $0x8] sm:$0xf]
      %v366 = vld [vmem:[%s1 + $0xc] sm:$0xf]
      %v367 = vld [vmem:[%s1 + $0x10] sm:$0xf]
      %v368 = vld [vmem:[%s1 + $0x14] sm:$0xf]
      %v369 = vld [vmem:[%s1 + $0x18] sm:$0xf]
      %v370 = vld [vmem:[%s1 + $0x1c] sm:$0xf]
      %v371 = vld [vmem:[%s1 + $0x20] sm:$0xf]
      %v372 = vld [vmem:[%s1 + $0x24] sm:$0xf]
      %v373 = vld [vmem:[%s1 + $0x28] sm:$0xf]
      %v374 = vld [vmem:[%s1 + $0x2c] sm:$0xf]
      %v375 = vld [vmem:[%s1 + $0x30] sm:$0xf]
      %v376 = vld [vmem:[%s1 + $0x34] sm:$0xf]
      %v377 = vld [vmem:[%s1 + $0x38] sm:$0xf]
      %v378 = vld [vmem:[%s1 + $0x3c] sm:$0xf]
      %v395 = vunpack.c.l.b16 %v363
      %v396 = vunpack.c.l.b16 %v364
      %v397 = vunpack.c.l.b16 %v365
      %v398 = vunpack.c.l.b16 %v366
      %v399 = vunpack.c.l.b16 %v367
      %v400 = vunpack.c.l.b16 %v368
      %v401 = vunpack.c.l.b16 %v369
      %v402 = vunpack.c.l.b16 %v370
      %v403 = vunpack.c.l.b16 %v371
      %v404 = vunpack.c.l.b16 %v372
      %v405 = vunpack.c.l.b16 %v373
      %v406 = vunpack.c.l.b16 %v374
      %v407 = vunpack.c.l.b16 %v375
      %v408 = vunpack.c.l.b16 %v376
      %v409 = vunpack.c.l.b16 %v377
      %v410 = vunpack.c.l.b16 %v378
      %v411 = vpack.c.b16 %v396, %v395
      %v412 = vpack.c.b16 %v398, %v397
      %v413 = vpack.c.b16 %v400, %v399
      %v414 = vpack.c.b16 %v402, %v401
      %v415 = vpack.c.b16 %v404, %v403
      %v416 = vpack.c.b16 %v406, %v405
      %v417 = vpack.c.b16 %v408, %v407
      %v418 = vpack.c.b16 %v410, %v409
      %427 = vmatprep.subr.bf16.mxu0 0
      %428 = vmatpush1.bf16.msra.mxu0 %v411
      %429 = vmatprep.subr.bf16.mxu0 0
      %430 = vmatpush1.bf16.msra.mxu0 %v412
      %431 = vmatprep.subr.bf16.mxu0 0
      %432 = vmatpush1.bf16.msra.mxu0 %v413
      %433 = vmatprep.subr.bf16.mxu0 0
      %434 = vmatpush1.bf16.msra.mxu0 %v414
      %435 = vmatprep.subr.bf16.mxu0 0
      %436 = vmatpush1.bf16.msra.mxu0 %v415
      %437 = vmatprep.subr.bf16.mxu0 0
      %438 = vmatpush1.bf16.msra.mxu0 %v416
      %439 = vmatprep.subr.bf16.mxu0 0
      %440 = vmatpush1.bf16.msra.mxu0 %v417
      %441 = vmatprep.subr.bf16.mxu0 0
      %442 = vmatpush1.bf16.msra.mxu0 %v418
      %443 = vmatprep.subr.bf16.mxu0 0
      %444 = vmatpush1.bf16.msra.mxu0 0
      %445 = vmatprep.subr.bf16.mxu0 0
      %446 = vmatpush1.bf16.msra.mxu0 0
      %447 = vmatprep.subr.bf16.mxu0 0
      %448 = vmatpush1.bf16.msra.mxu0 0
      %449 = vmatprep.subr.bf16.mxu0 0
      %450 = vmatpush1.bf16.msra.mxu0 0
      %451 = vmatprep.subr.bf16.mxu0 0
      %452 = vmatpush1.bf16.msra.mxu0 0
      %453 = vmatprep.subr.bf16.mxu0 0
      %454 = vmatpush1.bf16.msra.mxu0 0
      %455 = vmatprep.subr.bf16.mxu0 0
      %456 = vmatpush1.bf16.msra.mxu0 0
      %457 = vmatprep.subr.bf16.mxu0 0
      %458 = vmatpush1.bf16.msra.mxu0 0
      %459 = vmatprep.mubr.bf16.mxu0 0
      %460 = vmatmul.mubr.bf16.gmra.mrb[0].mxu0 %v355
      %v461 = vpop.f32.mrb[0].mxu0
      %v462 = vadd.f32 0.0, %v461
      %v463 = vpop.f32.mrb[0].mxu0
      %v464 = vpop.f32.mrb[0].mxu0
      %v465 = vadd.f32 0.0, %v464
      %v466 = vpop.f32.mrb[0].mxu0
      %467 = vmatprep.mubr.bf16.mxu0 0
      %468 = vmatmul.mubr.bf16.gmra.mrb[0].mxu0 %v356
      %v469 = vpop.f32.mrb[0].mxu0
      %v470 = vadd.f32 0.0, %v469
      %v471 = vpop.f32.mrb[0].mxu0
      %v472 = vpop.f32.mrb[0].mxu0
      %v473 = vadd.f32 0.0, %v472
      %v474 = vpop.f32.mrb[0].mxu0
      %475 = vmatprep.mubr.bf16.mxu0 0
      %476 = vmatmul.mubr.bf16.gmra.mrb[0].mxu0 %v357
      %v477 = vpop.f32.mrb[0].mxu0
      %v478 = vadd.f32 0.0, %v477
      %v479 = vpop.f32.mrb[0].mxu0
      %v480 = vpop.f32.mrb[0].mxu0
      %v481 = vadd.f32 0.0, %v480
      %v482 = vpop.f32.mrb[0].mxu0
      %483 = vmatprep.mubr.bf16.mxu0 0
      %484 = vmatmul.mubr.bf16.gmra.mrb[0].mxu0 %v358
      %v485 = vpop.f32.mrb[0].mxu0
      %v486 = vadd.f32 0.0, %v485
      %v487 = vpop.f32.mrb[0].mxu0
      %v488 = vpop.f32.mrb[0].mxu0
      %v489 = vadd.f32 0.0, %v488
      %v490 = vpop.f32.mrb[0].mxu0
      %491 = vmatprep.mubr.bf16.mxu0 0
      %492 = vmatmul.mubr.bf16.gmra.mrb[0].mxu0 %v359
      %v493 = vpop.f32.mrb[0].mxu0
      %v494 = vadd.f32 0.0, %v493
      %v495 = vpop.f32.mrb[0].mxu0
      %v496 = vpop.f32.mrb[0].mxu0
      %v497 = vadd.f32 0.0, %v496
      %v498 = vpop.f32.mrb[0].mxu0
      %499 = vmatprep.mubr.bf16.mxu0 0
      %500 = vmatmul.mubr.bf16.gmra.mrb[0].mxu0 %v360
      %v501 = vpop.f32.mrb[0].mxu0
      %v502 = vadd.f32 0.0, %v501
      %v503 = vpop.f32.mrb[0].mxu0
      %v504 = vpop.f32.mrb[0].mxu0
      %v505 = vadd.f32 0.0, %v504
      %v506 = vpop.f32.mrb[0].mxu0
      %507 = vmatprep.mubr.bf16.mxu0 0
      %508 = vmatmul.mubr.bf16.gmra.mrb[0].mxu0 %v361
      %v509 = vpop.f32.mrb[0].mxu0
      %v510 = vadd.f32 0.0, %v509
      %v511 = vpop.f32.mrb[0].mxu0
      %v512 = vpop.f32.mrb[0].mxu0
      %v513 = vadd.f32 0.0, %v512
      %v514 = vpop.f32.mrb[0].mxu0
      %515 = vmatprep.mubr.bf16.mxu0 0
      %516 = vmatmul.mubr.bf16.gmra.mrb[0].mxu0 %v362
      %v517 = vpop.f32.mrb[0].mxu0
      %v518 = vadd.f32 0.0, %v517
      %v519 = vpop.f32.mrb[0].mxu0
      %v520 = vpop.f32.mrb[0].mxu0
      %v521 = vadd.f32 0.0, %v520
      %v522 = vpop.f32.mrb[0].mxu0
      %523 = vdwg.mxu0
      %v524 = vpack.c.bf16 %v465, %v462
      %v525 = vpack.c.bf16 %v473, %v470
      %v526 = vpack.c.bf16 %v481, %v478
      %v527 = vpack.c.bf16 %v489, %v486
      %v528 = vpack.c.bf16 %v497, %v494
      %v529 = vpack.c.bf16 %v505, %v502
      %v530 = vpack.c.bf16 %v513, %v510
      %v531 = vpack.c.bf16 %v521, %v518
      %v540 = vunpack.c.l.b16 %v524
      %v541 = vunpack.c.h.b16 %v524
      %v542 = vunpack.c.l.b16 %v525
      %v543 = vunpack.c.h.b16 %v525
      %v544 = vunpack.c.l.b16 %v526
      %v545 = vunpack.c.h.b16 %v526
      %v546 = vunpack.c.l.b16 %v527
      %v547 = vunpack.c.h.b16 %v527
      %v548 = vunpack.c.l.b16 %v528
      %v549 = vunpack.c.h.b16 %v528
      %v550 = vunpack.c.l.b16 %v529
      %v551 = vunpack.c.h.b16 %v529
      %v552 = vunpack.c.l.b16 %v530
      %v553 = vunpack.c.h.b16 %v530
      %v554 = vunpack.c.l.b16 %v531
      %v555 = vunpack.c.h.b16 %v531
      %v556 = vpack.c.b16 %v540, %v540
      %v557 = vpack.c.b16 %v541, %v541
      %v558 = vpack.c.b16 %v542, %v542
      %v559 = vpack.c.b16 %v543, %v543
      %v560 = vpack.c.b16 %v544, %v544
      %v561 = vpack.c.b16 %v545, %v545
      %v562 = vpack.c.b16 %v546, %v546
      %v563 = vpack.c.b16 %v547, %v547
      %v564 = vpack.c.b16 %v548, %v548
      %v565 = vpack.c.b16 %v549, %v549
      %v566 = vpack.c.b16 %v550, %v550
      %v567 = vpack.c.b16 %v551, %v551
      %v568 = vpack.c.b16 %v552, %v552
      %v569 = vpack.c.b16 %v553, %v553
      %v570 = vpack.c.b16 %v554, %v554
      %v571 = vpack.c.b16 %v555, %v555
      %588 = vst [vmem:[%s234] sm:$0xf] %v556
      %589 = vst [vmem:[%s234 + $0x4] sm:$0xf] %v557
      %590 = vst [vmem:[%s234 + $0x8] sm:$0xf] %v558
      %591 = vst [vmem:[%s234 + $0xc] sm:$0xf] %v559
      %592 = vst [vmem:[%s234 + $0x10] sm:$0xf] %v560
      %593 = vst [vmem:[%s234 + $0x14] sm:$0xf] %v561
      %594 = vst [vmem:[%s234 + $0x18] sm:$0xf] %v562
      %595 = vst [vmem:[%s234 + $0x1c] sm:$0xf] %v563
      %596 = vst [vmem:[%s234 + $0x20] sm:$0xf] %v564
      %597 = vst [vmem:[%s234 + $0x24] sm:$0xf] %v565
      %598 = vst [vmem:[%s234 + $0x28] sm:$0xf] %v566
      %599 = vst [vmem:[%s234 + $0x2c] sm:$0xf] %v567
      %600 = vst [vmem:[%s234 + $0x30] sm:$0xf] %v568
      %601 = vst [vmem:[%s234 + $0x34] sm:$0xf] %v569
      %602 = vst [vmem:[%s234 + $0x38] sm:$0xf] %v570
      %603 = vst [vmem:[%s234 + $0x3c] sm:$0xf] %v571
      %v604 = vld [vmem:[%s2] sm:$0xf]
      %v605 = vld [vmem:[%s2 + $0x4] sm:$0xf]
      %v606 = vld [vmem:[%s2 + $0x8] sm:$0xf]
      %v607 = vld [vmem:[%s2 + $0xc] sm:$0xf]
      %v608 = vld [vmem:[%s2 + $0x10] sm:$0xf]
      %v609 = vld [vmem:[%s2 + $0x14] sm:$0xf]
      %v610 = vld [vmem:[%s2 + $0x18] sm:$0xf]
      %v611 = vld [vmem:[%s2 + $0x1c] sm:$0xf]
      %v612 = vld [vmem:[%s2 + $0x20] sm:$0xf]
      %v613 = vld [vmem:[%s2 + $0x24] sm:$0xf]
      %v614 = vld [vmem:[%s2 + $0x28] sm:$0xf]
      %v615 = vld [vmem:[%s2 + $0x2c] sm:$0xf]
      %v616 = vld [vmem:[%s2 + $0x30] sm:$0xf]
      %v617 = vld [vmem:[%s2 + $0x34] sm:$0xf]
      %v618 = vld [vmem:[%s2 + $0x38] sm:$0xf]
      %v619 = vld [vmem:[%s2 + $0x3c] sm:$0xf]
      %v620 = vld [vmem:[%s3] sm:$0x1]
      %v622 = vlaneseq
      %v623 = vshrl.u32 %v622, 7
      %v624 = vsub.s32 0, %v623
      %v625 = vrot.slane %v620, %v624
      %v643 = vunpack.c.l.b16 %v604
      %v644 = vunpack.c.l.b16 %v605
      %v645 = vunpack.c.l.b16 %v606
      %v646 = vunpack.c.l.b16 %v607
      %v647 = vunpack.c.l.b16 %v608
      %v648 = vunpack.c.l.b16 %v609
      %v649 = vunpack.c.l.b16 %v610
      %v650 = vunpack.c.l.b16 %v611
      %v651 = vunpack.c.l.b16 %v612
      %v652 = vunpack.c.l.b16 %v613
      %v653 = vunpack.c.l.b16 %v614
      %v654 = vunpack.c.l.b16 %v615
      %v655 = vunpack.c.l.b16 %v616
      %v656 = vunpack.c.l.b16 %v617
      %v657 = vunpack.c.l.b16 %v618
      %v658 = vunpack.c.l.b16 %v619
      %v659 = vpack.c.b16 %v644, %v643
      %v660 = vpack.c.b16 %v646, %v645
      %v661 = vpack.c.b16 %v648, %v647
      %v662 = vpack.c.b16 %v650, %v649
      %v663 = vpack.c.b16 %v652, %v651
      %v664 = vpack.c.b16 %v654, %v653
      %v665 = vpack.c.b16 %v656, %v655
      %v666 = vpack.c.b16 %v658, %v657
      %675 = vmatprep.subr.bf16.mxu0 0
      %676 = vmatpush1.bf16.msra.mxu0 %v659
      %677 = vmatprep.subr.bf16.mxu0 0
      %678 = vmatpush1.bf16.msra.mxu0 %v660
      %679 = vmatprep.subr.bf16.mxu0 0
      %680 = vmatpush1.bf16.msra.mxu0 %v661
      %681 = vmatprep.subr.bf16.mxu0 0
      %682 = vmatpush1.bf16.msra.mxu0 %v662
      %683 = vmatprep.subr.bf16.mxu0 0
      %684 = vmatpush1.bf16.msra.mxu0 %v663
      %685 = vmatprep.subr.bf16.mxu0 0
      %686 = vmatpush1.bf16.msra.mxu0 %v664
      %687 = vmatprep.subr.bf16.mxu0 0
      %688 = vmatpush1.bf16.msra.mxu0 %v665
      %689 = vmatprep.subr.bf16.mxu0 0
      %690 = vmatpush1.bf16.msra.mxu0 %v666
      %691 = vmatprep.subr.bf16.mxu0 0
      %692 = vmatpush1.bf16.msra.mxu0 0
      %693 = vmatprep.subr.bf16.mxu0 0
      %694 = vmatpush1.bf16.msra.mxu0 0
      %695 = vmatprep.subr.bf16.mxu0 0
      %696 = vmatpush1.bf16.msra.mxu0 0
      %697 = vmatprep.subr.bf16.mxu0 0
      %698 = vmatpush1.bf16.msra.mxu0 0
      %699 = vmatprep.subr.bf16.mxu0 0
      %700 = vmatpush1.bf16.msra.mxu0 0
      %701 = vmatprep.subr.bf16.mxu0 0
      %702 = vmatpush1.bf16.msra.mxu0 0
      %703 = vmatprep.subr.bf16.mxu0 0
      %704 = vmatpush1.bf16.msra.mxu0 0
      %705 = vmatprep.subr.bf16.mxu0 0
      %706 = vmatpush1.bf16.msra.mxu0 0
      %707 = vmatprep.mubr.bf16.mxu0 0
      %708 = vmatmul.mubr.bf16.gmra.mrb[0].mxu0 %v355
      %v709 = vpop.f32.mrb[0].mxu0
      %v710 = vadd.f32 %v625, %v709
      %v711 = vpop.f32.mrb[0].mxu0
      %v712 = vpop.f32.mrb[0].mxu0
      %v713 = vadd.f32 %v625, %v712
      %v714 = vpop.f32.mrb[0].mxu0
      %715 = vmatprep.mubr.bf16.mxu0 0
      %716 = vmatmul.mubr.bf16.gmra.mrb[0].mxu0 %v356
      %v717 = vpop.f32.mrb[0].mxu0
      %v718 = vadd.f32 %v625, %v717
      %v719 = vpop.f32.mrb[0].mxu0
      %v720 = vpop.f32.mrb[0].mxu0
      %v721 = vadd.f32 %v625, %v720
      %v722 = vpop.f32.mrb[0].mxu0
      %723 = vmatprep.mubr.bf16.mxu0 0
      %724 = vmatmul.mubr.bf16.gmra.mrb[0].mxu0 %v357
      %v725 = vpop.f32.mrb[0].mxu0
      %v726 = vadd.f32 %v625, %v725
      %v727 = vpop.f32.mrb[0].mxu0
      %v728 = vpop.f32.mrb[0].mxu0
      %v729 = vadd.f32 %v625, %v728
      %v730 = vpop.f32.mrb[0].mxu0
      %731 = vmatprep.mubr.bf16.mxu0 0
      %732 = vmatmul.mubr.bf16.gmra.mrb[0].mxu0 %v358
      %v733 = vpop.f32.mrb[0].mxu0
      %v734 = vadd.f32 %v625, %v733
      %v735 = vpop.f32.mrb[0].mxu0
      %v736 = vpop.f32.mrb[0].mxu0
      %v737 = vadd.f32 %v625, %v736
      %v738 = vpop.f32.mrb[0].mxu0
      %739 = vmatprep.mubr.bf16.mxu0 0
      %740 = vmatmul.mubr.bf16.gmra.mrb[0].mxu0 %v359
      %v741 = vpop.f32.mrb[0].mxu0
      %v742 = vadd.f32 %v625, %v741
      %v743 = vpop.f32.mrb[0].mxu0
      %v744 = vpop.f32.mrb[0].mxu0
      %v745 = vadd.f32 %v625, %v744
      %v746 = vpop.f32.mrb[0].mxu0
      %747 = vmatprep.mubr.bf16.mxu0 0
      %748 = vmatmul.mubr.bf16.gmra.mrb[0].mxu0 %v360
      %v749 = vpop.f32.mrb[0].mxu0
      %v750 = vadd.f32 %v625, %v749
      %v751 = vpop.f32.mrb[0].mxu0
      %v752 = vpop.f32.mrb[0].mxu0
      %v753 = vadd.f32 %v625, %v752
      %v754 = vpop.f32.mrb[0].mxu0
      %755 = vmatprep.mubr.bf16.mxu0 0
      %756 = vmatmul.mubr.bf16.gmra.mrb[0].mxu0 %v361
      %v757 = vpop.f32.mrb[0].mxu0
      %v758 = vadd.f32 %v625, %v757
      %v759 = vpop.f32.mrb[0].mxu0
      %v760 = vpop.f32.mrb[0].mxu0
      %v761 = vadd.f32 %v625, %v760
      %v762 = vpop.f32.mrb[0].mxu0
      %763 = vmatprep.mubr.bf16.mxu0 0
      %764 = vmatmul.mubr.bf16.gmra.mrb[0].mxu0 %v362
      %v765 = vpop.f32.mrb[0].mxu0
      %v766 = vadd.f32 %v625, %v765
      %v767 = vpop.f32.mrb[0].mxu0
      %v768 = vpop.f32.mrb[0].mxu0
      %v769 = vadd.f32 %v625, %v768
      %v770 = vpop.f32.mrb[0].mxu0
      %771 = vdwg.mxu0
      %772 = vst [vmem:[%s240] sm:$0xff] %v710
      %773 = vst [vmem:[%s240 + $0x8] sm:$0xff] %v713
      %774 = vst [vmem:[%s240 + $0x10] sm:$0xff] %v718
      %775 = vst [vmem:[%s240 + $0x18] sm:$0xff] %v721
      %776 = vst [vmem:[%s240 + $0x20] sm:$0xff] %v726
      %777 = vst [vmem:[%s240 + $0x28] sm:$0xff] %v729
      %778 = vst [vmem:[%s240 + $0x30] sm:$0xff] %v734
      %779 = vst [vmem:[%s240 + $0x38] sm:$0xff] %v737
      %780 = vst [vmem:[%s240 + $0x40] sm:$0xff] %v742
      %781 = vst [vmem:[%s240 + $0x48] sm:$0xff] %v745
      %782 = vst [vmem:[%s240 + $0x50] sm:$0xff] %v750
      %783 = vst [vmem:[%s240 + $0x58] sm:$0xff] %v753
      %784 = vst [vmem:[%s240 + $0x60] sm:$0xff] %v758
      %785 = vst [vmem:[%s240 + $0x68] sm:$0xff] %v761
      %786 = vst [vmem:[%s240 + $0x70] sm:$0xff] %v766
      %787 = vst [vmem:[%s240 + $0x78] sm:$0xff] %v769
      %s788 = smul.u32 16, %s17
      %p789 = scmp.lt.s32.totalorder %s788, 31
      %s790 = scalar_select %p789, %s788, 31
      %s791 = smul.addr %s790, 4
      %s792 = scalar_lea.vmem %s4, %s791
      %s793 = smul.u32 16, %s17
      %p794 = scmp.lt.s32.totalorder %s793, 31
      %s795 = scalar_select %p794, %s793, 31
      %s796 = smul.addr %s795, 8
      %s797 = scalar_lea.vmem %s5, %s796
      // Predicated region
      $region37: #{forward.4} parent=35 // pred_check
        %p798 = pneg %p124
      $region38: #{forward.4} parent=35 // pred_check_branch
        %800 = sbr.rel (%p798) target = $region40
      $region39: #{forward.4} parent=35 // pred_region
        %s801 = smul.u32 16, %s17
      $region40: #{forward.4} parent=35 // pred_fallthru
        _
      // Predicated region
      $region41: #{forward.4} parent=35 // pred_check
        %p802 = pneg %p150
      $region42: #{forward.4} parent=35 // pred_check_branch
        %804 = sbr.rel (%p802) target = $region44
      $region43: #{forward.4} parent=35 // pred_region
        %s805 = smul.u32 16, %s17
      $region44: #{forward.4} parent=35 // pred_fallthru
        _
    $region36: #{forward.4} parent=5 // pred_fallthru
      _
    %p806 = scmp.le.s32.totalorder 2, %s12
    // Predicated region
    $region45: #{forward.4} parent=5 // pred_check
      %p807 = pneg %p806
    $region46: #{forward.4} parent=5 // pred_check_branch
      %809 = sbr.rel (%p807) target = $region48
    $region47: #{forward.4} parent=5 // pred_region
      %s810 = ssub.s32 %s12, 2
      // Predicated region
      $region49: #{forward.4} parent=47 // pred_check
        %p811 = pneg %p130
      $region50: #{forward.4} parent=47 // pred_check_branch
        %813 = sbr.rel (%p811) target = $region52
      $region51: #{forward.4} parent=47 // pred_region
        %s814 = smul.u32 16, %s18
        %p815 = scmp.lt.s32.totalorder %s814, 31
        %s816 = scalar_select %p815, %s814, 31
        %s817 = smul.addr %s816, 4
        %s818 = scalar_lea.vmem %s4, %s817
      $region52: #{forward.4} parent=47 // pred_fallthru
        _
      // Predicated region
      $region53: #{forward.4} parent=47 // pred_check
        %p819 = pneg %p156
      $region54: #{forward.4} parent=47 // pred_check_branch
        %821 = sbr.rel (%p819) target = $region56
      $region55: #{forward.4} parent=47 // pred_region
        %s822 = smul.u32 16, %s18
        %p823 = scmp.lt.s32.totalorder %s822, 31
        %s824 = scalar_select %p823, %s822, 31
        %s825 = smul.addr %s824, 8
        %s826 = scalar_lea.vmem %s5, %s825
      $region56: #{forward.4} parent=47 // pred_fallthru
        _
    $region48: #{forward.4} parent=5 // pred_fallthru
      _
  $region6: #{forward.4} parent=0 // loop_footer
    %s16 = sadd.s32 1, %s12
  $region7: #{forward.4} parent=0 // loop_footer_branch
    %11 = sbr.rel target = $region3
  $region8: #{forward.4} parent=0 // loop_exit
    _

// kernel: forward.5
$region0: #{forward.5}
  #allocation0 [shape = 'u32[]', space=smem, size = 0x4, offset = 0x4, fixed_abs, tag = 'smem constant byte address 0x4 - core index']
  #allocation1 [shape = 'u32[144,128]{1,0:T(1,128)}', space=vmem, size = 0x12000, scoped, tag = 'internal scratch']
  #allocation2 [shape = 'f32[128,128]{1,0:T(8,128)}', space=vmem, size = 0x10000, scoped, tag = 'scratch operand']
  %s0 = inlined_call_operand.vmem [shape: s8[256,256], index: 0, kind: input, shape index: {}]
  %s1 = inlined_call_operand.vmem [shape: bf16[256,128], index: 1, kind: input, shape index: {}]
  %s2 = inlined_call_operand.vmem [shape: f32[256,1], index: 2, kind: input, shape index: {}]
  %s3 = inlined_call_operand.vmem [shape: f32[256,128], index: 3, kind: input, shape index: {}]
  %s4 = inlined_call_operand.vmem [shape: bf16[128,128], index: 4, kind: input, shape index: {}]
  %s5 = inlined_call_operand.vmem [shape: bf16[128,128], index: 5, kind: input, shape index: {}]
  %s6 = inlined_call_operand.vmem [shape: f32[1,128], index: 6, kind: input, shape index: {}]
  %s7 = inlined_call_operand.vmem [shape: bf16[256,128], index: 7, kind: output, shape index: {0}]
  %s8 = inlined_call_operand.vmem [shape: f32[256,128], index: 8, kind: output, shape index: {1}]
  %9 = xla_tuple %s7, %s8
  %s10 = sld [smem:[#allocation0]]
  $region118: #{forward.5} parent=0
    _
  %s12 = ssub.s32 1, %s10
  %s13 = scalar_select 0, %s12, %s10
  $region1: #{forward.5} parent=0
    #allocation3 [shape = 'u8[32768]{0}', space=vmem, size = 0x8000, scoped, tag = 'input window, operand 0']
    loop: start=0, step=1, limit=6
    $region2: #{forward.5} parent=1 // loop_pre_header
      _
    $region3: #{forward.5} parent=1 // loop_header
      %s15 = sphi 0, %s19
      %p16 = scmp.ge.s32.totalorder %s15, 6
      %s22 = sphi 0, %s34
      %s23 = sphi 0, %s30
      %s24 = sphi 0, %s22
      %s25 = sphi 0, %s23
      %s26 = sphi 0, %s24
      %s27 = sphi 0, %s25
      %s39 = sphi 0, %s41
      %s42 = sphi 0, %s39
      %s43 = sphi 0, %s42
      %s59 = sphi 0, %s43
      %s65 = sphi 0, %s67
      %s68 = sphi 0, %s65
      %s69 = sphi 0, %s68
      %s85 = sphi 0, %s69
      %s91 = sphi 0, %s93
      %s94 = sphi 0, %s91
      %s95 = sphi 0, %s94
      %s111 = sphi 0, %s95
      %s117 = sphi 0, %s119
      %s120 = sphi 0, %s117
      %s121 = sphi 0, %s120
      %s137 = sphi 0, %s121
      %s141 = sphi 0, %s141
      %s143 = sphi 0, %s141
      %s144 = sphi 0, %s143
      %s158 = sphi 0, %s144
      %s162 = sphi 0, %s162
      %s164 = sphi 0, %s162
      %s165 = sphi 0, %s164
      %s179 = sphi 0, %s165
      %s183 = sphi 0, %s183
      %s185 = sphi 0, %s183
      %s186 = sphi 0, %s185
      %s200 = sphi 0, %s186
      %s206 = sphi 0, %s208
      %s209 = sphi 0, %s206
      %s210 = sphi 0, %s209
      %s226 = sphi 0, %s210
      %s232 = sphi 0, %s234
      %s235 = sphi 0, %s232
      %s236 = sphi 0, %s235
      %s252 = sphi 0, %s236
    $region4: #{forward.5} parent=1 // loop_header_branch
      %18 = sbr.rel (%p16) target = $region8
    $region5: #{forward.5} parent=1 // loop_body
      %s20 = ssub.s32 %s15, 1
      %s21 = ssub.s32 %s15, 2
      %s28 = sadd.s32 1, %s23
      %p29 = scmp.ge.s32.totalorder %s28, 2
      %s30 = scalar_select %p29, 0, %s28
      %s31 = sadd.s32 1, %s22
      %s32 = scalar_select %p29, %s31, %s22
      %p33 = scmp.ge.s32.totalorder %s32, 2
      %s34 = scalar_select %p33, 0, %s32
      %s35 = ssub.s32 %s22, %s34
      %s36 = ssub.s32 %s23, %s30
      %s37 = sor.u32 %s35, %s36
      %p38 = scmp.eq.s32.totalorder %s37, 0
      %s40 = sadd.s32 %s39, 1
      %s41 = scalar_select %p38, %s39, %s40
      %p44 = pneg %p38
      %p45 = scmp.eq.s32.totalorder %s15, 3
      %p46 = por %p44, %p45
      %p47 = scmp.ne.s32.totalorder %s39, %s42
      %p48 = scmp.eq.s32.totalorder %s15, 0
      %p49 = por %p47, %p48
      %p50 = scmp.ne.s32.totalorder %s39, %s42
      %p51 = scmp.eq.s32.totalorder %s20, 3
      %p52 = por %p50, %p51
      %p53 = scmp.ne.s32.totalorder %s42, %s43
      %p54 = scmp.eq.s32.totalorder %s20, 0
      %p55 = por %p53, %p54
      %p56 = scmp.ne.s32.totalorder %s42, %s43
      %p57 = scmp.eq.s32.totalorder %s21, 3
      %p58 = por %p56, %p57
      %p60 = scmp.ne.s32.totalorder %s43, %s59
      %p61 = scmp.eq.s32.totalorder %s21, 0
      %p62 = por %p60, %p61
      %s63 = ssub.s32 %s23, %s30
      %p64 = scmp.eq.s32.totalorder %s63, 0
      %s66 = sadd.s32 %s65, 1
      %s67 = scalar_select %p64, %s65, %s66
      %p70 = pneg %p64
      %p71 = scmp.eq.s32.totalorder %s15, 3
      %p72 = por %p70, %p71
      %p73 = scmp.ne.s32.totalorder %s65, %s68
      %p74 = scmp.eq.s32.totalorder %s15, 0
      %p75 = por %p73, %p74
      %p76 = scmp.ne.s32.totalorder %s65, %s68
      %p77 = scmp.eq.s32.totalorder %s20, 3
      %p78 = por %p76, %p77
      %p79 = scmp.ne.s32.totalorder %s68, %s69
      %p80 = scmp.eq.s32.totalorder %s20, 0
      %p81 = por %p79, %p80
      %p82 = scmp.ne.s32.totalorder %s68, %s69
      %p83 = scmp.eq.s32.totalorder %s21, 3
      %p84 = por %p82, %p83
      %p86 = scmp.ne.s32.totalorder %s69, %s85
      %p87 = scmp.eq.s32.totalorder %s21, 0
      %p88 = por %p86, %p87
      %s89 = ssub.s32 %s22, %s34
      %p90 = scmp.eq.s32.totalorder %s89, 0
      %s92 = sadd.s32 %s91, 1
      %s93 = scalar_select %p90, %s91, %s92
      %p96 = pneg %p90
      %p97 = scmp.eq.s32.totalorder %s15, 3
      %p98 = por %p96, %p97
      %p99 = scmp.ne.s32.totalorder %s91, %s94
      %p100 = scmp.eq.s32.totalorder %s15, 0
      %p101 = por %p99, %p100
      %p102 = scmp.ne.s32.totalorder %s91, %s94
      %p103 = scmp.eq.s32.totalorder %s20, 3
      %p104 = por %p102, %p103
      %p105 = scmp.ne.s32.totalorder %s94, %s95
      %p106 = scmp.eq.s32.totalorder %s20, 0
      %p107 = por %p105, %p106
      %p108 = scmp.ne.s32.totalorder %s94, %s95
      %p109 = scmp.eq.s32.totalorder %s21, 3
      %p110 = por %p108, %p109
      %p112 = scmp.ne.s32.totalorder %s95, %s111
      %p113 = scmp.eq.s32.totalorder %s21, 0
      %p114 = por %p112, %p113
      %s115 = ssub.s32 %s22, %s34
      %p116 = scmp.eq.s32.totalorder %s115, 0
      %s118 = sadd.s32 %s117, 1
      %s119 = scalar_select %p116, %s117, %s118
      %p122 = pneg %p116
      %p123 = scmp.eq.s32.totalorder %s15, 3
      %p124 = por %p122, %p123
      %p125 = scmp.ne.s32.totalorder %s117, %s120
      %p126 = scmp.eq.s32.totalorder %s15, 0
      %p127 = por %p125, %p126
      %p128 = scmp.ne.s32.totalorder %s117, %s120
      %p129 = scmp.eq.s32.totalorder %s20, 3
      %p130 = por %p128, %p129
      %p131 = scmp.ne.s32.totalorder %s120, %s121
      %p132 = scmp.eq.s32.totalorder %s20, 0
      %p133 = por %p131, %p132
      %p134 = scmp.ne.s32.totalorder %s120, %s121
      %p135 = scmp.eq.s32.totalorder %s21, 3
      %p136 = por %p134, %p135
      %p138 = scmp.ne.s32.totalorder %s121, %s137
      %p139 = scmp.eq.s32.totalorder %s21, 0
      %p140 = por %p138, %p139
      %s142 = sadd.s32 %s141, 1
      %p145 = scmp.eq.s32.totalorder %s15, 3
      %p146 = scmp.ne.s32.totalorder %s141, %s143
      %p147 = scmp.eq.s32.totalorder %s15, 0
      %p148 = por %p146, %p147
      %p149 = scmp.ne.s32.totalorder %s141, %s143
      %p150 = scmp.eq.s32.totalorder %s20, 3
      %p151 = por %p149, %p150
      %p152 = scmp.ne.s32.totalorder %s143, %s144
      %p153 = scmp.eq.s32.totalorder %s20, 0
      %p154 = por %p152, %p153
      %p155 = scmp.ne.s32.totalorder %s143, %s144
      %p156 = scmp.eq.s32.totalorder %s21, 3
      %p157 = por %p155, %p156
      %p159 = scmp.ne.s32.totalorder %s144, %s158
      %p160 = scmp.eq.s32.totalorder %s21, 0
      %p161 = por %p159, %p160
      %s163 = sadd.s32 %s162, 1
      %p166 = scmp.eq.s32.totalorder %s15, 3
      %p167 = scmp.ne.s32.totalorder %s162, %s164
      %p168 = scmp.eq.s32.totalorder %s15, 0
      %p169 = por %p167, %p168
      %p170 = scmp.ne.s32.totalorder %s162, %s164
      %p171 = scmp.eq.s32.totalorder %s20, 3
      %p172 = por %p170, %p171
      %p173 = scmp.ne.s32.totalorder %s164, %s165
      %p174 = scmp.eq.s32.totalorder %s20, 0
      %p175 = por %p173, %p174
      %p176 = scmp.ne.s32.totalorder %s164, %s165
      %p177 = scmp.eq.s32.totalorder %s21, 3
      %p178 = por %p176, %p177
      %p180 = scmp.ne.s32.totalorder %s165, %s179
      %p181 = scmp.eq.s32.totalorder %s21, 0
      %p182 = por %p180, %p181
      %s184 = sadd.s32 %s183, 1
      %p187 = scmp.eq.s32.totalorder %s15, 3
      %p188 = scmp.ne.s32.totalorder %s183, %s185
      %p189 = scmp.eq.s32.totalorder %s15, 0
      %p190 = por %p188, %p189
      %p191 = scmp.ne.s32.totalorder %s183, %s185
      %p192 = scmp.eq.s32.totalorder %s20, 3
      %p193 = por %p191, %p192
      %p194 = scmp.ne.s32.totalorder %s185, %s186
      %p195 = scmp.eq.s32.totalorder %s20, 0
      %p196 = por %p194, %p195
      %p197 = scmp.ne.s32.totalorder %s185, %s186
      %p198 = scmp.eq.s32.totalorder %s21, 3
      %p199 = por %p197, %p198
      %p201 = scmp.ne.s32.totalorder %s186, %s200
      %p202 = scmp.eq.s32.totalorder %s21, 0
      %p203 = por %p201, %p202
      %s204 = ssub.s32 %s22, %s34
      %p205 = scmp.eq.s32.totalorder %s204, 0
      %s207 = sadd.s32 %s206, 1
      %s208 = scalar_select %p205, %s206, %s207
      %p211 = pneg %p205
      %p212 = scmp.eq.s32.totalorder %s15, 3
      %p213 = por %p211, %p212
      %p214 = scmp.ne.s32.totalorder %s206, %s209
      %p215 = scmp.eq.s32.totalorder %s15, 0
      %p216 = por %p214, %p215
      %p217 = scmp.ne.s32.totalorder %s206, %s209
      %p218 = scmp.eq.s32.totalorder %s20, 3
      %p219 = por %p217, %p218
      %p220 = scmp.ne.s32.totalorder %s209, %s210
      %p221 = scmp.eq.s32.totalorder %s20, 0
      %p222 = por %p220, %p221
      %p223 = scmp.ne.s32.totalorder %s209, %s210
      %p224 = scmp.eq.s32.totalorder %s21, 3
      %p225 = por %p223, %p224
      %p227 = scmp.ne.s32.totalorder %s210, %s226
      %p228 = scmp.eq.s32.totalorder %s21, 0
      %p229 = por %p227, %p228
      %s230 = ssub.s32 %s22, %s34
      %p231 = scmp.eq.s32.totalorder %s230, 0
      %s233 = sadd.s32 %s232, 1
      %s234 = scalar_select %p231, %s232, %s233
      %p237 = pneg %p231
      %p238 = scmp.eq.s32.totalorder %s15, 3
      %p239 = por %p237, %p238
      %p240 = scmp.ne.s32.totalorder %s232, %s235
      %p241 = scmp.eq.s32.totalorder %s15, 0
      %p242 = por %p240, %p241
      %p243 = scmp.ne.s32.totalorder %s232, %s235
      %p244 = scmp.eq.s32.totalorder %s20, 3
      %p245 = por %p243, %p244
      %p246 = scmp.ne.s32.totalorder %s235, %s236
      %p247 = scmp.eq.s32.totalorder %s20, 0
      %p248 = por %p246, %p247
      %p249 = scmp.ne.s32.totalorder %s235, %s236
      %p250 = scmp.eq.s32.totalorder %s21, 3
      %p251 = por %p249, %p250
      %p253 = scmp.ne.s32.totalorder %s236, %s252
      %p254 = scmp.eq.s32.totalorder %s21, 0
      %p255 = por %p253, %p254
      %p256 = scmp.le.s32.totalorder 1, %s15
      %p257 = scmp.lt.s32.totalorder %s15, 5
      %p258 = pnand %p256, %p257
      %p259 = pneg %p258
      // Predicated region
      $region9: #{forward.5} parent=5 // pred_check
        _
      $region10: #{forward.5} parent=5 // pred_check_branch
        %261 = sbr.rel (%p258) target = $region12
      $region11: #{forward.5} parent=5 // pred_region
        %s262 = ssub.s32 %s15, 1
        // Predicated region
        $region13: #{forward.5} parent=11 // pred_check
          %p263 = pneg %p154
        $region14: #{forward.5} parent=11 // pred_check_branch
          %265 = sbr.rel (%p263) target = $region16
        $region15: #{forward.5} parent=11 // pred_region
          _
        $region16: #{forward.5} parent=11 // pred_fallthru
          _
        // Predicated region
        $region17: #{forward.5} parent=11 // pred_check
          %p266 = pneg %p175
        $region18: #{forward.5} parent=11 // pred_check_branch
          %268 = sbr.rel (%p266) target = $region20
        $region19: #{forward.5} parent=11 // pred_region
          _
        $region20: #{forward.5} parent=11 // pred_fallthru
          _
        // Predicated region
        $region21: #{forward.5} parent=11 // pred_check
          %p269 = pneg %p196
        $region22: #{forward.5} parent=11 // pred_check_branch
          %271 = sbr.rel (%p269) target = $region24
        $region23: #{forward.5} parent=11 // pred_region
          _
        $region24: #{forward.5} parent=11 // pred_fallthru
          _
      $region12: #{forward.5} parent=5 // pred_fallthru
        _
      %p272 = scmp.lt.s32.totalorder %s15, 4
      // Predicated region
      $region25: #{forward.5} parent=5 // pred_check
        %p273 = pneg %p272
      $region26: #{forward.5} parent=5 // pred_check_branch
        %275 = sbr.rel (%p273) target = $region28
      $region27: #{forward.5} parent=5 // pred_region
        // Predicated region
        $region29: #{forward.5} parent=27 // pred_check
          %p276 = pneg %p49
        $region30: #{forward.5} parent=27 // pred_check_branch
          %278 = sbr.rel (%p276) target = $region32
        $region31: #{forward.5} parent=27 // pred_region
          %s279 = sand.u32 %s39, 1
          %s280 = sand.u32 %s39, 1
          %s281 = smul.addr %s280, 32
          %s282 = scalar_lea.vmem [#allocation3], %s281
          %s283 = smul.u32 16, %s22
          %s284 = smul.addr %s283, 2
          %s285 = sadd.s32 %s23, %s284
          %s286 = smul.addr %s285, 2
          %s287 = scalar_lea.vmem %s0, %s286
          // Predicated region
          $region33: #{forward.5} parent=31 // pred_check
            _
          $region34: #{forward.5} parent=31 // pred_check_branch
            %289 = sbr.rel (0) target = $region36
          $region35: #{forward.5} parent=31 // pred_region
            // Predicated region
            $region37: #{forward.5} parent=35 // pred_check
              _
            $region38: #{forward.5} parent=35 // pred_check_branch
              %291 = sbr.rel target = $region40
            $region39: #{forward.5} parent=35 // pred_region
              // Predicated region
              $region52: #{forward.5} parent=39 // pred_check
                _
              $region53: #{forward.5} parent=39 // pred_check_branch
                %336 = sbr.rel (0) target = $region55
              $region54: #{forward.5} parent=39 // pred_region
                loop: start=0, step=1, limit=1
                $region56: #{forward.5} parent=54 // loop_pre_header
                  _
                $region57: #{forward.5} parent=54 // loop_header
                  %s338 = sphi 0, %s342
                  %p339 = scmp.ge.s32.totalorder %s338, 1
                  %s343 = sphi %s287, %s287
                  %s344 = sphi %s282, %s282
                $region58: #{forward.5} parent=54 // loop_header_branch
                  %341 = sbr.rel (%p339) target = $region62
                $region59: #{forward.5} parent=54 // loop_body
                  _
                $region60: #{forward.5} parent=54 // loop_footer
                  %s342 = sadd.s32 1, %s338
                $region61: #{forward.5} parent=54 // loop_footer_branch
                  %337 = sbr.rel target = $region57
                $region62: #{forward.5} parent=54 // loop_exit
                  _
                loop: start=0, step=1, limit=1
                $region63: #{forward.5} parent=54 // loop_pre_header
                  _
                $region64: #{forward.5} parent=54 // loop_header
                  %s347 = sphi 0, %s351
                  %p348 = scmp.ge.s32.totalorder %s347, 1
                  %s352 = sphi %s287, %s287
                  %s353 = sphi %s282, %s282
                $region65: #{forward.5} parent=54 // loop_header_branch
                  %350 = sbr.rel (%p348) target = $region69
                $region66: #{forward.5} parent=54 // loop_body
                  %v354 = vld [vmem:[%s352] sm:$0x3]
                  %355 = vst [vmem:[%s353] sm:$0x3] %v354
                  %v356 = vld [vmem:[%s352 + $0x4] sm:$0x3]
                  %357 = vst [vmem:[%s353 + $0x2] sm:$0x3] %v356
                  %v358 = vld [vmem:[%s352 + $0x8] sm:$0x3]
                  %359 = vst [vmem:[%s353 + $0x4] sm:$0x3] %v358
                  %v360 = vld [vmem:[%s352 + $0xc] sm:$0x3]
                  %361 = vst [vmem:[%s353 + $0x6] sm:$0x3] %v360
                  %v362 = vld [vmem:[%s352 + $0x10] sm:$0x3]
                  %363 = vst [vmem:[%s353 + $0x8] sm:$0x3] %v362
                  %v364 = vld [vmem:[%s352 + $0x14] sm:$0x3]
                  %365 = vst [vmem:[%s353 + $0xa] sm:$0x3] %v364
                  %v366 = vld [vmem:[%s352 + $0x18] sm:$0x3]
                  %367 = vst [vmem:[%s353 + $0xc] sm:$0x3] %v366
                  %v368 = vld [vmem:[%s352 + $0x1c] sm:$0x3]
                  %369 = vst [vmem:[%s353 + $0xe] sm:$0x3] %v368
                  %v370 = vld [vmem:[%s352 + $0x20] sm:$0x3]
                  %371 = vst [vmem:[%s353 + $0x10] sm:$0x3] %v370
                  %v372 = vld [vmem:[%s352 + $0x24] sm:$0x3]
                  %373 = vst [vmem:[%s353 + $0x12] sm:$0x3] %v372
                  %v374 = vld [vmem:[%s352 + $0x28] sm:$0x3]
                  %375 = vst [vmem:[%s353 + $0x14] sm:$0x3] %v374
                  %v376 = vld [vmem:[%s352 + $0x2c] sm:$0x3]
                  %377 = vst [vmem:[%s353 + $0x16] sm:$0x3] %v376
                  %v378 = vld [vmem:[%s352 + $0x30] sm:$0x3]
                  %379 = vst [vmem:[%s353 + $0x18] sm:$0x3] %v378
                  %v380 = vld [vmem:[%s352 + $0x34] sm:$0x3]
                  %381 = vst [vmem:[%s353 + $0x1a] sm:$0x3] %v380
                  %v382 = vld [vmem:[%s352 + $0x38] sm:$0x3]
                  %383 = vst [vmem:[%s353 + $0x1c] sm:$0x3] %v382
                  %v384 = vld [vmem:[%s352 + $0x3c] sm:$0x3]
                  %385 = vst [vmem:[%s353 + $0x1e] sm:$0x3] %v384
                $region67: #{forward.5} parent=54 // loop_footer
                  %s351 = sadd.s32 1, %s347
                $region68: #{forward.5} parent=54 // loop_footer_branch
                  %346 = sbr.rel target = $region64
                $region69: #{forward.5} parent=54 // loop_exit
                  _
              $region55: #{forward.5} parent=39 // pred_fallthru
                _
            $region40: #{forward.5} parent=35 // pred_fallthru
              _
            // Predicated region
            $region41: #{forward.5} parent=35 // pred_check
              _
            $region42: #{forward.5} parent=35 // pred_check_branch
              %293 = sbr.rel (0) target = $region44
            $region43: #{forward.5} parent=35 // pred_region
              loop: start=0, step=1, limit=1
              $region45: #{forward.5} parent=43 // loop_pre_header
                _
              $region46: #{forward.5} parent=43 // loop_header
                %s296 = sphi 0, %s300
                %p297 = scmp.ge.s32.totalorder %s296, 1
                %s301 = sphi %s287, %s287
                %s302 = sphi %s282, %s282
              $region47: #{forward.5} parent=43 // loop_header_branch
                %299 = sbr.rel (%p297) target = $region51
              $region48: #{forward.5} parent=43 // loop_body
                %v303 = vld [vmem:[%s301] sm:$0x3]
                %304 = vst [vmem:[%s302] sm:$0x3] %v303
                %v305 = vld [vmem:[%s301 + $0x4] sm:$0x3]
                %306 = vst [vmem:[%s302 + $0x2] sm:$0x3] %v305
                %v307 = vld [vmem:[%s301 + $0x8] sm:$0x3]
                %308 = vst [vmem:[%s302 + $0x4] sm:$0x3] %v307
                %v309 = vld [vmem:[%s301 + $0xc] sm:$0x3]
                %310 = vst [vmem:[%s302 + $0x6] sm:$0x3] %v309
                %v311 = vld [vmem:[%s301 + $0x10] sm:$0x3]
                %312 = vst [vmem:[%s302 + $0x8] sm:$0x3] %v311
                %v313 = vld [vmem:[%s301 + $0x14] sm:$0x3]
                %314 = vst [vmem:[%s302 + $0xa] sm:$0x3] %v313
                %v315 = vld [vmem:[%s301 + $0x18] sm:$0x3]
                %316 = vst [vmem:[%s302 + $0xc] sm:$0x3] %v315
                %v317 = vld [vmem:[%s301 + $0x1c] sm:$0x3]
                %318 = vst [vmem:[%s302 + $0xe] sm:$0x3] %v317
                %v319 = vld [vmem:[%s301 + $0x20] sm:$0x3]
                %320 = vst [vmem:[%s302 + $0x10] sm:$0x3] %v319
                %v321 = vld [vmem:[%s301 + $0x24] sm:$0x3]
                %322 = vst [vmem:[%s302 + $0x12] sm:$0x3] %v321
                %v323 = vld [vmem:[%s301 + $0x28] sm:$0x3]
                %324 = vst [vmem:[%s302 + $0x14] sm:$0x3] %v323
                %v325 = vld [vmem:[%s301 + $0x2c] sm:$0x3]
                %326 = vst [vmem:[%s302 + $0x16] sm:$0x3] %v325
                %v327 = vld [vmem:[%s301 + $0x30] sm:$0x3]
                %328 = vst [vmem:[%s302 + $0x18] sm:$0x3] %v327
                %v329 = vld [vmem:[%s301 + $0x34] sm:$0x3]
                %330 = vst [vmem:[%s302 + $0x1a] sm:$0x3] %v329
                %v331 = vld [vmem:[%s301 + $0x38] sm:$0x3]
                %332 = vst [vmem:[%s302 + $0x1c] sm:$0x3] %v331
                %v333 = vld [vmem:[%s301 + $0x3c] sm:$0x3]
                %334 = vst [vmem:[%s302 + $0x1e] sm:$0x3] %v333
              $region49: #{forward.5} parent=43 // loop_footer
                %s300 = sadd.s32 1, %s296
              $region50: #{forward.5} parent=43 // loop_footer_branch
                %295 = sbr.rel target = $region46
              $region51: #{forward.5} parent=43 // loop_exit
                _
            $region44: #{forward.5} parent=35 // pred_fallthru
              _
          $region36: #{forward.5} parent=31 // pred_fallthru
            _
          %386 = vnop
        $region32: #{forward.5} parent=27 // pred_fallthru
          _
        // Predicated region
        $region70: #{forward.5} parent=27 // pred_check
          %p387 = pneg %p75
        $region71: #{forward.5} parent=27 // pred_check_branch
          %389 = sbr.rel (%p387) target = $region73
        $region72: #{forward.5} parent=27 // pred_region
          %s390 = smul.u32 16, %s23
          %p391 = scmp.lt.s32.totalorder %s390, 31
          %s392 = scalar_select %p391, %s390, 31
          %s393 = smul.addr %s392, 4
          %s394 = scalar_lea.vmem %s1, %s393
          %s395 = smul.u32 16, %s23
        $region73: #{forward.5} parent=27 // pred_fallthru
          _
        // Predicated region
        $region74: #{forward.5} parent=27 // pred_check
          %p396 = pneg %p101
        $region75: #{forward.5} parent=27 // pred_check_branch
          %398 = sbr.rel (%p396) target = $region77
        $region76: #{forward.5} parent=27 // pred_region
          %s399 = smul.u32 16, %s22
          %p400 = scmp.lt.s32.totalorder %s399, 31
          %s401 = scalar_select %p400, %s399, 31
          %s402 = smul.addr %s401, 8
          %s403 = scalar_lea.vmem %s2, %s402
          %s404 = smul.u32 16, %s22
        $region77: #{forward.5} parent=27 // pred_fallthru
          _
        // Predicated region
        $region78: #{forward.5} parent=27 // pred_check
          %p405 = pneg %p127
        $region79: #{forward.5} parent=27 // pred_check_branch
          %407 = sbr.rel (%p405) target = $region81
        $region80: #{forward.5} parent=27 // pred_region
          %s408 = smul.u32 16, %s22
          %p409 = scmp.lt.s32.totalorder %s408, 31
          %s410 = scalar_select %p409, %s408, 31
          %s411 = smul.addr %s410, 8
          %s412 = scalar_lea.vmem %s3, %s411
          %s413 = smul.u32 16, %s22
        $region81: #{forward.5} parent=27 // pred_fallthru
          _
      $region28: #{forward.5} parent=5 // pred_fallthru
        _
      %p414 = scmp.le.s32.totalorder 1, %s15
      %p415 = scmp.lt.s32.totalorder %s15, 5
      %p416 = pnand %p414, %p415
      %p417 = pneg %p416
      // Predicated region
      $region82: #{forward.5} parent=5 // pred_check
        _
      $region83: #{forward.5} parent=5 // pred_check_branch
        %419 = sbr.rel (%p416) target = $region85
      $region84: #{forward.5} parent=5 // pred_region
        %s420 = ssub.s32 %s15, 1
        %s421 = sand.u32 %s42, 1
        %s422 = sand.u32 %s42, 1
        %s423 = smul.addr %s422, 32
        %s424 = scalar_lea.vmem [#allocation3], %s423
        // Predicated region
        $region86: #{forward.5} parent=84 // pred_check
          %p425 = pneg %p55
        $region87: #{forward.5} parent=84 // pred_check_branch
          %427 = sbr.rel (%p425) target = $region89
        $region88: #{forward.5} parent=84 // pred_region
          _
        $region89: #{forward.5} parent=84 // pred_fallthru
          _
        %s428 = sand.u32 %s42, 1
        %s429 = sand.u32 %s42, 1
        %s430 = smul.addr %s429, 32
        %s431 = scalar_lea.vmem [#allocation3], %s430
        %p432 = pneg %p55
        %p433 = pneg %p52
        %s434 = smul.u32 16, %s25
        %p435 = scmp.lt.s32.totalorder %s434, 31
        %s436 = scalar_select %p435, %s434, 31
        %s437 = smul.addr %s436, 4
        %s438 = scalar_lea.vmem %s1, %s437
        %p439 = pneg %p81
        %p440 = pneg %p78
        %s441 = smul.u32 16, %s24
        %p442 = scmp.lt.s32.totalorder %s441, 31
        %s443 = scalar_select %p442, %s441, 31
        %s444 = smul.addr %s443, 8
        %s445 = scalar_lea.vmem %s2, %s444
        %p446 = pneg %p107
        %p447 = pneg %p104
        %s448 = smul.u32 16, %s24
        %p449 = scmp.lt.s32.totalorder %s448, 31
        %s450 = scalar_select %p449, %s448, 31
        %s451 = smul.addr %s450, 8
        %s452 = scalar_lea.vmem %s3, %s451
        %p453 = pneg %p133
        %p454 = pneg %p130
        %p455 = pneg %p154
        %p456 = pneg %p151
        %p457 = pneg %p175
        %p458 = pneg %p172
        %p459 = pneg %p196
        %p460 = pneg %p193
        %p461 = pneg %p222
        %p462 = pneg %p219
        %s463 = smul.u32 16, %s24
        %p464 = scmp.lt.s32.totalorder %s463, 31
        %s465 = scalar_select %p464, %s463, 31
        %s466 = smul.addr %s465, 4
        %s467 = scalar_lea.vmem %s7, %s466
        %p468 = pneg %p248
        %p469 = pneg %p245
        %s470 = smul.u32 16, %s24
        %p471 = scmp.lt.s32.totalorder %s470, 31
        %s472 = scalar_select %p471, %s470, 31
        %s473 = smul.addr %s472, 8
        %s474 = scalar_lea.vmem %s8, %s473
        %s475 = smul.u32 16, %s24
        %s476 = smul.u32 16, %s25
        %p477 = scmp.lt.s32.totalorder %s476, 31
        %s478 = scalar_select %p477, %s476, 31
        %s479 = smul.addr %s478, 4
        %s480 = scalar_lea.vmem %s1, %s479
        %s481 = smul.u32 16, %s25
        %s482 = smul.u32 16, %s24
        %p483 = scmp.lt.s32.totalorder %s482, 31
        %s484 = scalar_select %p483, %s482, 31
        %s485 = smul.addr %s484, 8
        %s486 = scalar_lea.vmem %s2, %s485
        %s487 = smul.u32 16, %s24
        %s488 = smul.u32 16, %s24
        %p489 = scmp.lt.s32.totalorder %s488, 31
        %s490 = scalar_select %p489, %s488, 31
        %s491 = smul.addr %s490, 8
        %s492 = scalar_lea.vmem %s3, %s491
        %s493 = smul.u32 16, %s24
        %s494 = smul.u32 16, %s24
        %p495 = scmp.lt.s32.totalorder %s494, 31
        %s496 = scalar_select %p495, %s494, 31
        %s497 = smul.addr %s496, 4
        %s498 = scalar_lea.vmem %s7, %s497
        %s499 = smul.u32 16, %s24
        %s500 = smul.u32 16, %s24
        %p501 = scmp.lt.s32.totalorder %s500, 31
        %s502 = scalar_select %p501, %s500, 31
        %s503 = smul.addr %s502, 8
        %s504 = scalar_lea.vmem %s8, %s503
        %s505 = smul.u32 16, %s24
        %p507 = scmp.eq.s32.totalorder %s25, 0
        // Predicated region
        $region90: #{forward.5} parent=84 // pred_check
          %p508 = pneg %p507
        $region91: #{forward.5} parent=84 // pred_check_branch
          %510 = sbr.rel (%p508) target = $region93
        $region92: #{forward.5} parent=84 // pred_region
          %511 = vst [vmem:[#allocation2] sm:$0xff] 0.0
          %512 = vst [vmem:[#allocation2 + $0x8] sm:$0xff] 0.0
          %513 = vst [vmem:[#allocation2 + $0x10] sm:$0xff] 0.0
          %514 = vst [vmem:[#allocation2 + $0x18] sm:$0xff] 0.0
          %515 = vst [vmem:[#allocation2 + $0x20] sm:$0xff] 0.0
          %516 = vst [vmem:[#allocation2 + $0x28] sm:$0xff] 0.0
          %517 = vst [vmem:[#allocation2 + $0x30] sm:$0xff] 0.0
          %518 = vst [vmem:[#allocation2 + $0x38] sm:$0xff] 0.0
          %519 = vst [vmem:[#allocation2 + $0x40] sm:$0xff] 0.0
          %520 = vst [vmem:[#allocation2 + $0x48] sm:$0xff] 0.0
          %521 = vst [vmem:[#allocation2 + $0x50] sm:$0xff] 0.0
          %522 = vst [vmem:[#allocation2 + $0x58] sm:$0xff] 0.0
          %523 = vst [vmem:[#allocation2 + $0x60] sm:$0xff] 0.0
          %524 = vst [vmem:[#allocation2 + $0x68] sm:$0xff] 0.0
          %525 = vst [vmem:[#allocation2 + $0x70] sm:$0xff] 0.0
          %526 = vst [vmem:[#allocation2 + $0x78] sm:$0xff] 0.0
        $region93: #{forward.5} parent=84 // pred_fallthru
          _
        %v527 = vld [vmem:[#allocation2] sm:$0xff]
        %v528 = vld [vmem:[#allocation2 + $0x8] sm:$0xff]
        %v529 = vld [vmem:[#allocation2 + $0x10] sm:$0xff]
        %v530 = vld [vmem:[#allocation2 + $0x18] sm:$0xff]
        %v531 = vld [vmem:[#allocation2 + $0x20] sm:$0xff]
        %v532 = vld [vmem:[#allocation2 + $0x28] sm:$0xff]
        %v533 = vld [vmem:[#allocation2 + $0x30] sm:$0xff]
        %v534 = vld [vmem:[#allocation2 + $0x38] sm:$0xff]
        %v535 = vld [vmem:[#allocation2 + $0x40] sm:$0xff]
        %v536 = vld [vmem:[#allocation2 + $0x48] sm:$0xff]
        %v537 = vld [vmem:[#allocation2 + $0x50] sm:$0xff]
        %v538 = vld [vmem:[#allocation2 + $0x58] sm:$0xff]
        %v539 = vld [vmem:[#allocation2 + $0x60] sm:$0xff]
        %v540 = vld [vmem:[#allocation2 + $0x68] sm:$0xff]
        %v541 = vld [vmem:[#allocation2 + $0x70] sm:$0xff]
        %v542 = vld [vmem:[#allocation2 + $0x78] sm:$0xff]
        %v543 = vld [vmem:[%s424] sm:$0x3]
        %v544 = vld [vmem:[%s424 + $0x2] sm:$0x3]
        %v545 = vld [vmem:[%s424 + $0x4] sm:$0x3]
        %v546 = vld [vmem:[%s424 + $0x6] sm:$0x3]
        %v547 = vld [vmem:[%s424 + $0x8] sm:$0x3]
        %v548 = vld [vmem:[%s424 + $0xa] sm:$0x3]
        %v549 = vld [vmem:[%s424 + $0xc] sm:$0x3]
        %v550 = vld [vmem:[%s424 + $0xe] sm:$0x3]
        %v551 = vld [vmem:[%s424 + $0x10] sm:$0x3]
        %v552 = vld [vmem:[%s424 + $0x12] sm:$0x3]
        %v553 = vld [vmem:[%s424 + $0x14] sm:$0x3]
        %v554 = vld [vmem:[%s424 + $0x16] sm:$0x3]
        %v555 = vld [vmem:[%s424 + $0x18] sm:$0x3]
        %v556 = vld [vmem:[%s424 + $0x1a] sm:$0x3]
        %v557 = vld [vmem:[%s424 + $0x1c] sm:$0x3]
        %v558 = vld [vmem:[%s424 + $0x1e] sm:$0x3]
        %v559 = vunpack.c.l.s8.bf16 %v543
        %v560 = vunpack.c.l.s8.bf16 %v544
        %v561 = vunpack.c.l.s8.bf16 %v545
        %v562 = vunpack.c.l.s8.bf16 %v546
        %v563 = vunpack.c.l.s8.bf16 %v547
        %v564 = vunpack.c.l.s8.bf16 %v548
        %v565 = vunpack.c.l.s8.bf16 %v549
        %v566 = vunpack.c.l.s8.bf16 %v550
        %v567 = vunpack.c.l.s8.bf16 %v551
        %v568 = vunpack.c.l.s8.bf16 %v552
        %v569 = vunpack.c.l.s8.bf16 %v553
        %v570 = vunpack.c.l.s8.bf16 %v554
        %v571 = vunpack.c.l.s8.bf16 %v555
        %v572 = vunpack.c.l.s8.bf16 %v556
        %v573 = vunpack.c.l.s8.bf16 %v557
        %v574 = vunpack.c.l.s8.bf16 %v558
        %v575 = vld [vmem:[%s480] sm:$0xf]
        %v576 = vld [vmem:[%s480 + $0x4] sm:$0xf]
        %v577 = vld [vmem:[%s480 + $0x8] sm:$0xf]
        %v578 = vld [vmem:[%s480 + $0xc] sm:$0xf]
        %v579 = vld [vmem:[%s480 + $0x10] sm:$0xf]
        %v580 = vld [vmem:[%s480 + $0x14] sm:$0xf]
        %v581 = vld [vmem:[%s480 + $0x18] sm:$0xf]
        %v582 = vld [vmem:[%s480 + $0x1c] sm:$0xf]
        %v583 = vld [vmem:[%s480 + $0x20] sm:$0xf]
        %v584 = vld [vmem:[%s480 + $0x24] sm:$0xf]
        %v585 = vld [vmem:[%s480 + $0x28] sm:$0xf]
        %v586 = vld [vmem:[%s480 + $0x2c] sm:$0xf]
        %v587 = vld [vmem:[%s480 + $0x30] sm:$0xf]
        %v588 = vld [vmem:[%s480 + $0x34] sm:$0xf]
        %v589 = vld [vmem:[%s480 + $0x38] sm:$0xf]
        %v590 = vld [vmem:[%s480 + $0x3c] sm:$0xf]
        %v607 = vunpack.c.l.b16 %v559
        %v608 = vunpack.c.l.b16 %v560
        %v609 = vunpack.c.l.b16 %v561
        %v610 = vunpack.c.l.b16 %v562
        %v611 = vunpack.c.l.b16 %v563
        %v612 = vunpack.c.l.b16 %v564
        %v613 = vunpack.c.l.b16 %v565
        %v614 = vunpack.c.l.b16 %v566
        %v615 = vunpack.c.l.b16 %v567
        %v616 = vunpack.c.l.b16 %v568
        %v617 = vunpack.c.l.b16 %v569
        %v618 = vunpack.c.l.b16 %v570
        %v619 = vunpack.c.l.b16 %v571
        %v620 = vunpack.c.l.b16 %v572
        %v621 = vunpack.c.l.b16 %v573
        %v622 = vunpack.c.l.b16 %v574
        %v623 = vpack.c.b16 %v608, %v607
        %v624 = vpack.c.b16 %v610, %v609
        %v625 = vpack.c.b16 %v612, %v611
        %v626 = vpack.c.b16 %v614, %v613
        %v627 = vpack.c.b16 %v616, %v615
        %v628 = vpack.c.b16 %v618, %v617
        %v629 = vpack.c.b16 %v620, %v619
        %v630 = vpack.c.b16 %v622, %v621
        %v655 = vunpack.c.l.b16 %v575
        %v656 = vunpack.c.l.b16 %v576
        %v657 = vunpack.c.l.b16 %v577
        %v658 = vunpack.c.l.b16 %v578
        %v659 = vunpack.c.l.b16 %v579
        %v660 = vunpack.c.l.b16 %v580
        %v661 = vunpack.c.l.b16 %v581
        %v662 = vunpack.c.l.b16 %v582
        %v663 = vunpack.c.l.b16 %v583
        %v664 = vunpack.c.l.b16 %v584
        %v665 = vunpack.c.l.b16 %v585
        %v666 = vunpack.c.l.b16 %v586
        %v667 = vunpack.c.l.b16 %v587
        %v668 = vunpack.c.l.b16 %v588
        %v669 = vunpack.c.l.b16 %v589
        %v670 = vunpack.c.l.b16 %v590
        %v671 = vpack.c.b16 %v656, %v655
        %v672 = vpack.c.b16 %v658, %v657
        %v673 = vpack.c.b16 %v660, %v659
        %v674 = vpack.c.b16 %v662, %v661
        %v675 = vpack.c.b16 %v664, %v663
        %v676 = vpack.c.b16 %v666, %v665
        %v677 = vpack.c.b16 %v668, %v667
        %v678 = vpack.c.b16 %v670, %v669
        %687 = vmatprep.subr.bf16.mxu0 0
        %688 = vmatpush1.bf16.msra.mxu0 %v671
        %689 = vmatprep.subr.bf16.mxu0 0
        %690 = vmatpush1.bf16.msra.mxu0 %v672
        %691 = vmatprep.subr.bf16.mxu0 0
        %692 = vmatpush1.bf16.msra.mxu0 %v673
        %693 = vmatprep.subr.bf16.mxu0 0
        %694 = vmatpush1.bf16.msra.mxu0 %v674
        %695 = vmatprep.subr.bf16.mxu0 0
        %696 = vmatpush1.bf16.msra.mxu0 %v675
        %697 = vmatprep.subr.bf16.mxu0 0
        %698 = vmatpush1.bf16.msra.mxu0 %v676
        %699 = vmatprep.subr.bf16.mxu0 0
        %700 = vmatpush1.bf16.msra.mxu0 %v677
        %701 = vmatprep.subr.bf16.mxu0 0
        %702 = vmatpush1.bf16.msra.mxu0 %v678
        %703 = vmatprep.subr.bf16.mxu0 0
        %704 = vmatpush1.bf16.msra.mxu0 0
        %705 = vmatprep.subr.bf16.mxu0 0
        %706 = vmatpush1.bf16.msra.mxu0 0
        %707 = vmatprep.subr.bf16.mxu0 0
        %708 = vmatpush1.bf16.msra.mxu0 0
        %709 = vmatprep.subr.bf16.mxu0 0
        %710 = vmatpush1.bf16.msra.mxu0 0
        %711 = vmatprep.subr.bf16.mxu0 0
        %712 = vmatpush1.bf16.msra.mxu0 0
        %713 = vmatprep.subr.bf16.mxu0 0
        %714 = vmatpush1.bf16.msra.mxu0 0
        %715 = vmatprep.subr.bf16.mxu0 0
        %716 = vmatpush1.bf16.msra.mxu0 0
        %717 = vmatprep.subr.bf16.mxu0 0
        %718 = vmatpush1.bf16.msra.mxu0 0
        %719 = vmatprep.mubr.bf16.mxu0 0
        %720 = vmatmul.mubr.bf16.gmra.mrb[0].mxu0 %v623
        %v721 = vpop.f32.mrb[0].mxu0
        %v722 = vadd.f32 0.0, %v721
        %v723 = vpop.f32.mrb[0].mxu0
        %v724 = vpop.f32.mrb[0].mxu0
        %v725 = vadd.f32 0.0, %v724
        %v726 = vpop.f32.mrb[0].mxu0
        %727 = vmatprep.mubr.bf16.mxu0 0
        %728 = vmatmul.mubr.bf16.gmra.mrb[0].mxu0 %v624
        %v729 = vpop.f32.mrb[0].mxu0
        %v730 = vadd.f32 0.0, %v729
        %v731 = vpop.f32.mrb[0].mxu0
        %v732 = vpop.f32.mrb[0].mxu0
        %v733 = vadd.f32 0.0, %v732
        %v734 = vpop.f32.mrb[0].mxu0
        %735 = vmatprep.mubr.bf16.mxu0 0
        %736 = vmatmul.mubr.bf16.gmra.mrb[0].mxu0 %v625
        %v737 = vpop.f32.mrb[0].mxu0
        %v738 = vadd.f32 0.0, %v737
        %v739 = vpop.f32.mrb[0].mxu0
        %v740 = vpop.f32.mrb[0].mxu0
        %v741 = vadd.f32 0.0, %v740
        %v742 = vpop.f32.mrb[0].mxu0
        %743 = vmatprep.mubr.bf16.mxu0 0
        %744 = vmatmul.mubr.bf16.gmra.mrb[0].mxu0 %v626
        %v745 = vpop.f32.mrb[0].mxu0
        %v746 = vadd.f32 0.0, %v745
        %v747 = vpop.f32.mrb[0].mxu0
        %v748 = vpop.f32.mrb[0].mxu0
        %v749 = vadd.f32 0.0, %v748
        %v750 = vpop.f32.mrb[0].mxu0
        %751 = vmatprep.mubr.bf16.mxu0 0
        %752 = vmatmul.mubr.bf16.gmra.mrb[0].mxu0 %v627
        %v753 = vpop.f32.mrb[0].mxu0
        %v754 = vadd.f32 0.0, %v753
        %v755 = vpop.f32.mrb[0].mxu0
        %v756 = vpop.f32.mrb[0].mxu0
        %v757 = vadd.f32 0.0, %v756
        %v758 = vpop.f32.mrb[0].mxu0
        %759 = vmatprep.mubr.bf16.mxu0 0
        %760 = vmatmul.mubr.bf16.gmra.mrb[0].mxu0 %v628
        %v761 = vpop.f32.mrb[0].mxu0
        %v762 = vadd.f32 0.0, %v761
        %v763 = vpop.f32.mrb[0].mxu0
        %v764 = vpop.f32.mrb[0].mxu0
        %v765 = vadd.f32 0.0, %v764
        %v766 = vpop.f32.mrb[0].mxu0
        %767 = vmatprep.mubr.bf16.mxu0 0
        %768 = vmatmul.mubr.bf16.gmra.mrb[0].mxu0 %v629
        %v769 = vpop.f32.mrb[0].mxu0
        %v770 = vadd.f32 0.0, %v769
        %v771 = vpop.f32.mrb[0].mxu0
        %v772 = vpop.f32.mrb[0].mxu0
        %v773 = vadd.f32 0.0, %v772
        %v774 = vpop.f32.mrb[0].mxu0
        %775 = vmatprep.mubr.bf16.mxu0 0
        %776 = vmatmul.mubr.bf16.gmra.mrb[0].mxu0 %v630
        %v777 = vpop.f32.mrb[0].mxu0
        %v778 = vadd.f32 0.0, %v777
        %v779 = vpop.f32.mrb[0].mxu0
        %v780 = vpop.f32.mrb[0].mxu0
        %v781 = vadd.f32 0.0, %v780
        %v782 = vpop.f32.mrb[0].mxu0
        %783 = vdwg.mxu0
        %v784 = vadd.f32 %v527, %v722
        %v785 = vadd.f32 %v528, %v725
        %v786 = vadd.f32 %v529, %v730
        %v787 = vadd.f32 %v530, %v733
        %v788 = vadd.f32 %v531, %v738
        %v789 = vadd.f32 %v532, %v741
        %v790 = vadd.f32 %v533, %v746
        %v791 = vadd.f32 %v534, %v749
        %v792 = vadd.f32 %v535, %v754
        %v793 = vadd.f32 %v536, %v757
        %v794 = vadd.f32 %v537, %v762
        %v795 = vadd.f32 %v538, %v765
        %v796 = vadd.f32 %v539, %v770
        %v797 = vadd.f32 %v540, %v773
        %v798 = vadd.f32 %v541, %v778
        %v799 = vadd.f32 %v542, %v781
        %800 = vst [vmem:[#allocation2] sm:$0xff] %v784
        %801 = vst [vmem:[#allocation2 + $0x8] sm:$0xff] %v785
        %802 = vst [vmem:[#allocation2 + $0x10] sm:$0xff] %v786
        %803 = vst [vmem:[#allocation2 + $0x18] sm:$0xff] %v787
        %804 = vst [vmem:[#allocation2 + $0x20] sm:$0xff] %v788
        %805 = vst [vmem:[#allocation2 + $0x28] sm:$0xff] %v789
        %806 = vst [vmem:[#allocation2 + $0x30] sm:$0xff] %v790
        %807 = vst [vmem:[#allocation2 + $0x38] sm:$0xff] %v791
        %808 = vst [vmem:[#allocation2 + $0x40] sm:$0xff] %v792
        %809 = vst [vmem:[#allocation2 + $0x48] sm:$0xff] %v793
        %810 = vst [vmem:[#allocation2 + $0x50] sm:$0xff] %v794
        %811 = vst [vmem:[#allocation2 + $0x58] sm:$0xff] %v795
        %812 = vst [vmem:[#allocation2 + $0x60] sm:$0xff] %v796
        %813 = vst [vmem:[#allocation2 + $0x68] sm:$0xff] %v797
        %814 = vst [vmem:[#allocation2 + $0x70] sm:$0xff] %v798
        %815 = vst [vmem:[#allocation2 + $0x78] sm:$0xff] %v799
        %p816 = scmp.eq.s32.totalorder %s25, 1
        // Predicated region
        $region94: #{forward.5} parent=84 // pred_check
          %p817 = pneg %p816
        $region95: #{forward.5} parent=84 // pred_check_branch
          %819 = sbr.rel (%p817) target = $region97
        $region96: #{forward.5} parent=84 // pred_region
          %v820 = vld [vmem:[%s486] sm:$0xff]
          %v821 = vld [vmem:[%s486 + $0x8] sm:$0xff]
          %v822 = vld [vmem:[%s486 + $0x10] sm:$0xff]
          %v823 = vld [vmem:[%s486 + $0x18] sm:$0xff]
          %v824 = vld [vmem:[%s486 + $0x20] sm:$0xff]
          %v825 = vld [vmem:[%s486 + $0x28] sm:$0xff]
          %v826 = vld [vmem:[%s486 + $0x30] sm:$0xff]
          %v827 = vld [vmem:[%s486 + $0x38] sm:$0xff]
          %v828 = vld [vmem:[%s486 + $0x40] sm:$0xff]
          %v829 = vld [vmem:[%s486 + $0x48] sm:$0xff]
          %v830 = vld [vmem:[%s486 + $0x50] sm:$0xff]
          %v831 = vld [vmem:[%s486 + $0x58] sm:$0xff]
          %v832 = vld [vmem:[%s486 + $0x60] sm:$0xff]
          %v833 = vld [vmem:[%s486 + $0x68] sm:$0xff]
          %v834 = vld [vmem:[%s486 + $0x70] sm:$0xff]
          %v835 = vld [vmem:[%s486 + $0x78] sm:$0xff]
          %v836 = vld [vmem:[#allocation2] sm:$0xff]
          %v837 = vld [vmem:[#allocation2 + $0x8] sm:$0xff]
          %v838 = vld [vmem:[#allocation2 + $0x10] sm:$0xff]
          %v839 = vld [vmem:[#allocation2 + $0x18] sm:$0xff]
          %v840 = vld [vmem:[#allocation2 + $0x20] sm:$0xff]
          %v841 = vld [vmem:[#allocation2 + $0x28] sm:$0xff]
          %v842 = vld [vmem:[#allocation2 + $0x30] sm:$0xff]
          %v843 = vld [vmem:[#allocation2 + $0x38] sm:$0xff]
          %v844 = vld [vmem:[#allocation2 + $0x40] sm:$0xff]
          %v845 = vld [vmem:[#allocation2 + $0x48] sm:$0xff]
          %v846 = vld [vmem:[#allocation2 + $0x50] sm:$0xff]
          %v847 = vld [vmem:[#allocation2 + $0x58] sm:$0xff]
          %v848 = vld [vmem:[#allocation2 + $0x60] sm:$0xff]
          %v849 = vld [vmem:[#allocation2 + $0x68] sm:$0xff]
          %v850 = vld [vmem:[#allocation2 + $0x70] sm:$0xff]
          %v851 = vld [vmem:[#allocation2 + $0x78] sm:$0xff]
          %853 = vset.pattern.permute.xlu0 0
          %854 = vperm.xlu0 %853, %v820
          %v855 = vpop.permute.xlu0 %854
          %858 = vset.pattern.permute.xlu0 0
          %859 = vperm.xlu0 %858, %v821
          %v860 = vpop.permute.xlu0 %859
          %863 = vset.pattern.permute.xlu0 0
          %864 = vperm.xlu0 %863, %v822
          %v865 = vpop.permute.xlu0 %864
          %868 = vset.pattern.permute.xlu0 0
          %869 = vperm.xlu0 %868, %v823
          %v870 = vpop.permute.xlu0 %869
          %873 = vset.pattern.permute.xlu0 0
          %874 = vperm.xlu0 %873, %v824
          %v875 = vpop.permute.xlu0 %874
          %878 = vset.pattern.permute.xlu0 0
          %879 = vperm.xlu0 %878, %v825
          %v880 = vpop.permute.xlu0 %879
          %883 = vset.pattern.permute.xlu0 0
          %884 = vperm.xlu0 %883, %v826
          %v885 = vpop.permute.xlu0 %884
          %888 = vset.pattern.permute.xlu0 0
          %889 = vperm.xlu0 %888, %v827
          %v890 = vpop.permute.xlu0 %889
          %893 = vset.pattern.permute.xlu0 0
          %894 = vperm.xlu0 %893, %v828
          %v895 = vpop.permute.xlu0 %894
          %898 = vset.pattern.permute.xlu0 0
          %899 = vperm.xlu0 %898, %v829
          %v900 = vpop.permute.xlu0 %899
          %903 = vset.pattern.permute.xlu0 0
          %904 = vperm.xlu0 %903, %v830
          %v905 = vpop.permute.xlu0 %904
          %908 = vset.pattern.permute.xlu0 0
          %909 = vperm.xlu0 %908, %v831
          %v910 = vpop.permute.xlu0 %909
          %913 = vset.pattern.permute.xlu0 0
          %914 = vperm.xlu0 %913, %v832
          %v915 = vpop.permute.xlu0 %914
          %918 = vset.pattern.permute.xlu0 0
          %919 = vperm.xlu0 %918, %v833
          %v920 = vpop.permute.xlu0 %919
          %923 = vset.pattern.permute.xlu0 0
          %924 = vperm.xlu0 %923, %v834
          %v925 = vpop.permute.xlu0 %924
          %928 = vset.pattern.permute.xlu0 0
          %929 = vperm.xlu0 %928, %v835
          %v930 = vpop.permute.xlu0 %929
          %v932 = vmul.f32 %v855, %v836
          %v933 = vmul.f32 %v860, %v837
          %v934 = vmul.f32 %v865, %v838
          %v935 = vmul.f32 %v870, %v839
          %v936 = vmul.f32 %v875, %v840
          %v937 = vmul.f32 %v880, %v841
          %v938 = vmul.f32 %v885, %v842
          %v939 = vmul.f32 %v890, %v843
          %v940 = vmul.f32 %v895, %v844
          %v941 = vmul.f32 %v900, %v845
          %v942 = vmul.f32 %v905, %v846
          %v943 = vmul.f32 %v910, %v847
          %v944 = vmul.f32 %v915, %v848
          %v945 = vmul.f32 %v920, %v849
          %v946 = vmul.f32 %v925, %v850
          %v947 = vmul.f32 %v930, %v851
          %v948 = vld [vmem:[%s492] sm:$0xff]
          %v949 = vld [vmem:[%s492 + $0x8] sm:$0xff]
          %v950 = vld [vmem:[%s492 + $0x10] sm:$0xff]
          %v951 = vld [vmem:[%s492 + $0x18] sm:$0xff]
          %v952 = vld [vmem:[%s492 + $0x20] sm:$0xff]
          %v953 = vld [vmem:[%s492 + $0x28] sm:$0xff]
          %v954 = vld [vmem:[%s492 + $0x30] sm:$0xff]
          %v955 = vld [vmem:[%s492 + $0x38] sm:$0xff]
          %v956 = vld [vmem:[%s492 + $0x40] sm:$0xff]
          %v957 = vld [vmem:[%s492 + $0x48] sm:$0xff]
          %v958 = vld [vmem:[%s492 + $0x50] sm:$0xff]
          %v959 = vld [vmem:[%s492 + $0x58] sm:$0xff]
          %v960 = vld [vmem:[%s492 + $0x60] sm:$0xff]
          %v961 = vld [vmem:[%s492 + $0x68] sm:$0xff]
          %v962 = vld [vmem:[%s492 + $0x70] sm:$0xff]
          %v963 = vld [vmem:[%s492 + $0x78] sm:$0xff]
          %v964 = vadd.f32 %v932, %v948
          %v965 = vadd.f32 %v933, %v949
          %v966 = vadd.f32 %v934, %v950
          %v967 = vadd.f32 %v935, %v951
          %v968 = vadd.f32 %v936, %v952
          %v969 = vadd.f32 %v937, %v953
          %v970 = vadd.f32 %v938, %v954
          %v971 = vadd.f32 %v939, %v955
          %v972 = vadd.f32 %v940, %v956
          %v973 = vadd.f32 %v941, %v957
          %v974 = vadd.f32 %v942, %v958
          %v975 = vadd.f32 %v943, %v959
          %v976 = vadd.f32 %v944, %v960
          %v977 = vadd.f32 %v945, %v961
          %v978 = vadd.f32 %v946, %v962
          %v979 = vadd.f32 %v947, %v963
          %v980 = vmax.f32 %v964, 0.0
          %v981 = vmax.f32 %v965, 0.0
          %v982 = vmax.f32 %v966, 0.0
          %v983 = vmax.f32 %v967, 0.0
          %v984 = vmax.f32 %v968, 0.0
          %v985 = vmax.f32 %v969, 0.0
          %v986 = vmax.f32 %v970, 0.0
          %v987 = vmax.f32 %v971, 0.0
          %v988 = vmax.f32 %v972, 0.0
          %v989 = vmax.f32 %v973, 0.0
          %v990 = vmax.f32 %v974, 0.0
          %v991 = vmax.f32 %v975, 0.0
          %v992 = vmax.f32 %v976, 0.0
          %v993 = vmax.f32 %v977, 0.0
          %v994 = vmax.f32 %v978, 0.0
          %v995 = vmax.f32 %v979, 0.0
          %v996 = vpack.c.bf16 %v981, %v980
          %v997 = vpack.c.bf16 %v983, %v982
          %v998 = vpack.c.bf16 %v985, %v984
          %v999 = vpack.c.bf16 %v987, %v986
          %v1000 = vpack.c.bf16 %v989, %v988
          %v1001 = vpack.c.bf16 %v991, %v990
          %v1002 = vpack.c.bf16 %v993, %v992
          %v1003 = vpack.c.bf16 %v995, %v994
          %v1004 = vld [vmem:[%s4] sm:$0xf]
          %v1005 = vld [vmem:[%s4 + $0x4] sm:$0xf]
          %v1006 = vld [vmem:[%s4 + $0x8] sm:$0xf]
          %v1007 = vld [vmem:[%s4 + $0xc] sm:$0xf]
          %v1008 = vld [vmem:[%s4 + $0x10] sm:$0xf]
          %v1009 = vld [vmem:[%s4 + $0x14] sm:$0xf]
          %v1010 = vld [vmem:[%s4 + $0x18] sm:$0xf]
          %v1011 = vld [vmem:[%s4 + $0x1c] sm:$0xf]
          %v1012 = vld [vmem:[%s4 + $0x20] sm:$0xf]
          %v1013 = vld [vmem:[%s4 + $0x24] sm:$0xf]
          %v1014 = vld [vmem:[%s4 + $0x28] sm:$0xf]
          %v1015 = vld [vmem:[%s4 + $0x2c] sm:$0xf]
          %v1016 = vld [vmem:[%s4 + $0x30] sm:$0xf]
          %v1017 = vld [vmem:[%s4 + $0x34] sm:$0xf]
          %v1018 = vld [vmem:[%s4 + $0x38] sm:$0xf]
          %v1019 = vld [vmem:[%s4 + $0x3c] sm:$0xf]
          %v1036 = vunpack.c.l.b16 %v1004
          %v1037 = vunpack.c.l.b16 %v1005
          %v1038 = vunpack.c.l.b16 %v1006
          %v1039 = vunpack.c.l.b16 %v1007
          %v1040 = vunpack.c.l.b16 %v1008
          %v1041 = vunpack.c.l.b16 %v1009
          %v1042 = vunpack.c.l.b16 %v1010
          %v1043 = vunpack.c.l.b16 %v1011
          %v1044 = vunpack.c.l.b16 %v1012
          %v1045 = vunpack.c.l.b16 %v1013
          %v1046 = vunpack.c.l.b16 %v1014
          %v1047 = vunpack.c.l.b16 %v1015
          %v1048 = vunpack.c.l.b16 %v1016
          %v1049 = vunpack.c.l.b16 %v1017
          %v1050 = vunpack.c.l.b16 %v1018
          %v1051 = vunpack.c.l.b16 %v1019
          %v1052 = vpack.c.b16 %v1037, %v1036
          %v1053 = vpack.c.b16 %v1039, %v1038
          %v1054 = vpack.c.b16 %v1041, %v1040
          %v1055 = vpack.c.b16 %v1043, %v1042
          %v1056 = vpack.c.b16 %v1045, %v1044
          %v1057 = vpack.c.b16 %v1047, %v1046
          %v1058 = vpack.c.b16 %v1049, %v1048
          %v1059 = vpack.c.b16 %v1051, %v1050
          %1068 = vmatprep.subr.bf16.mxu0 0
          %1069 = vmatpush1.bf16.msra.mxu0 %v1052
          %1070 = vmatprep.subr.bf16.mxu0 0
          %1071 = vmatpush1.bf16.msra.mxu0 %v1053
          %1072 = vmatprep.subr.bf16.mxu0 0
          %1073 = vmatpush1.bf16.msra.mxu0 %v1054
          %1074 = vmatprep.subr.bf16.mxu0 0
          %1075 = vmatpush1.bf16.msra.mxu0 %v1055
          %1076 = vmatprep.subr.bf16.mxu0 0
          %1077 = vmatpush1.bf16.msra.mxu0 %v1056
          %1078 = vmatprep.subr.bf16.mxu0 0
          %1079 = vmatpush1.bf16.msra.mxu0 %v1057
          %1080 = vmatprep.subr.bf16.mxu0 0
          %1081 = vmatpush1.bf16.msra.mxu0 %v1058
          %1082 = vmatprep.subr.bf16.mxu0 0
          %1083 = vmatpush1.bf16.msra.mxu0 %v1059
          %1084 = vmatprep.subr.bf16.mxu0 0
          %1085 = vmatpush1.bf16.msra.mxu0 0
          %1086 = vmatprep.subr.bf16.mxu0 0
          %1087 = vmatpush1.bf16.msra.mxu0 0
          %1088 = vmatprep.subr.bf16.mxu0 0
          %1089 = vmatpush1.bf16.msra.mxu0 0
          %1090 = vmatprep.subr.bf16.mxu0 0
          %1091 = vmatpush1.bf16.msra.mxu0 0
          %1092 = vmatprep.subr.bf16.mxu0 0
          %1093 = vmatpush1.bf16.msra.mxu0 0
          %1094 = vmatprep.subr.bf16.mxu0 0
          %1095 = vmatpush1.bf16.msra.mxu0 0
          %1096 = vmatprep.subr.bf16.mxu0 0
          %1097 = vmatpush1.bf16.msra.mxu0 0
          %1098 = vmatprep.subr.bf16.mxu0 0
          %1099 = vmatpush1.bf16.msra.mxu0 0
          %1100 = vmatprep.mubr.bf16.mxu0 0
          %1101 = vmatmul.mubr.bf16.gmra.mrb[0].mxu0 %v996
          %v1102 = vpop.f32.mrb[0].mxu0
          %v1103 = vadd.f32 0.0, %v1102
          %v1104 = vpop.f32.mrb[0].mxu0
          %v1105 = vpop.f32.mrb[0].mxu0
          %v1106 = vadd.f32 0.0, %v1105
          %v1107 = vpop.f32.mrb[0].mxu0
          %1108 = vmatprep.mubr.bf16.mxu0 0
          %1109 = vmatmul.mubr.bf16.gmra.mrb[0].mxu0 %v997
          %v1110 = vpop.f32.mrb[0].mxu0
          %v1111 = vadd.f32 0.0, %v1110
          %v1112 = vpop.f32.mrb[0].mxu0
          %v1113 = vpop.f32.mrb[0].mxu0
          %v1114 = vadd.f32 0.0, %v1113
          %v1115 = vpop.f32.mrb[0].mxu0
          %1116 = vmatprep.mubr.bf16.mxu0 0
          %1117 = vmatmul.mubr.bf16.gmra.mrb[0].mxu0 %v998
          %v1118 = vpop.f32.mrb[0].mxu0
          %v1119 = vadd.f32 0.0, %v1118
          %v1120 = vpop.f32.mrb[0].mxu0
          %v1121 = vpop.f32.mrb[0].mxu0
          %v1122 = vadd.f32 0.0, %v1121
          %v1123 = vpop.f32.mrb[0].mxu0
          %1124 = vmatprep.mubr.bf16.mxu0 0
          %1125 = vmatmul.mubr.bf16.gmra.mrb[0].mxu0 %v999
          %v1126 = vpop.f32.mrb[0].mxu0
          %v1127 = vadd.f32 0.0, %v1126
          %v1128 = vpop.f32.mrb[0].mxu0
          %v1129 = vpop.f32.mrb[0].mxu0
          %v1130 = vadd.f32 0.0, %v1129
          %v1131 = vpop.f32.mrb[0].mxu0
          %1132 = vmatprep.mubr.bf16.mxu0 0
          %1133 = vmatmul.mubr.bf16.gmra.mrb[0].mxu0 %v1000
          %v1134 = vpop.f32.mrb[0].mxu0
          %v1135 = vadd.f32 0.0, %v1134
          %v1136 = vpop.f32.mrb[0].mxu0
          %v1137 = vpop.f32.mrb[0].mxu0
          %v1138 = vadd.f32 0.0, %v1137
          %v1139 = vpop.f32.mrb[0].mxu0
          %1140 = vmatprep.mubr.bf16.mxu0 0
          %1141 = vmatmul.mubr.bf16.gmra.mrb[0].mxu0 %v1001
          %v1142 = vpop.f32.mrb[0].mxu0
          %v1143 = vadd.f32 0.0, %v1142
          %v1144 = vpop.f32.mrb[0].mxu0
          %v1145 = vpop.f32.mrb[0].mxu0
          %v1146 = vadd.f32 0.0, %v1145
          %v1147 = vpop.f32.mrb[0].mxu0
          %1148 = vmatprep.mubr.bf16.mxu0 0
          %1149 = vmatmul.mubr.bf16.gmra.mrb[0].mxu0 %v1002
          %v1150 = vpop.f32.mrb[0].mxu0
          %v1151 = vadd.f32 0.0, %v1150
          %v1152 = vpop.f32.mrb[0].mxu0
          %v1153 = vpop.f32.mrb[0].mxu0
          %v1154 = vadd.f32 0.0, %v1153
          %v1155 = vpop.f32.mrb[0].mxu0
          %1156 = vmatprep.mubr.bf16.mxu0 0
          %1157 = vmatmul.mubr.bf16.gmra.mrb[0].mxu0 %v1003
          %v1158 = vpop.f32.mrb[0].mxu0
          %v1159 = vadd.f32 0.0, %v1158
          %v1160 = vpop.f32.mrb[0].mxu0
          %v1161 = vpop.f32.mrb[0].mxu0
          %v1162 = vadd.f32 0.0, %v1161
          %v1163 = vpop.f32.mrb[0].mxu0
          %1164 = vdwg.mxu0
          %v1165 = vpack.c.bf16 %v1106, %v1103
          %v1166 = vpack.c.bf16 %v1114, %v1111
          %v1167 = vpack.c.bf16 %v1122, %v1119
          %v1168 = vpack.c.bf16 %v1130, %v1127
          %v1169 = vpack.c.bf16 %v1138, %v1135
          %v1170 = vpack.c.bf16 %v1146, %v1143
          %v1171 = vpack.c.bf16 %v1154, %v1151
          %v1172 = vpack.c.bf16 %v1162, %v1159
          %v1181 = vunpack.c.l.b16 %v1165
          %v1182 = vunpack.c.h.b16 %v1165
          %v1183 = vunpack.c.l.b16 %v1166
          %v1184 = vunpack.c.h.b16 %v1166
          %v1185 = vunpack.c.l.b16 %v1167
          %v1186 = vunpack.c.h.b16 %v1167
          %v1187 = vunpack.c.l.b16 %v1168
          %v1188 = vunpack.c.h.b16 %v1168
          %v1189 = vunpack.c.l.b16 %v1169
          %v1190 = vunpack.c.h.b16 %v1169
          %v1191 = vunpack.c.l.b16 %v1170
          %v1192 = vunpack.c.h.b16 %v1170
          %v1193 = vunpack.c.l.b16 %v1171
          %v1194 = vunpack.c.h.b16 %v1171
          %v1195 = vunpack.c.l.b16 %v1172
          %v1196 = vunpack.c.h.b16 %v1172
          %v1197 = vpack.c.b16 %v1181, %v1181
          %v1198 = vpack.c.b16 %v1182, %v1182
          %v1199 = vpack.c.b16 %v1183, %v1183
          %v1200 = vpack.c.b16 %v1184, %v1184
          %v1201 = vpack.c.b16 %v1185, %v1185
          %v1202 = vpack.c.b16 %v1186, %v1186
          %v1203 = vpack.c.b16 %v1187, %v1187
          %v1204 = vpack.c.b16 %v1188, %v1188
          %v1205 = vpack.c.b16 %v1189, %v1189
          %v1206 = vpack.c.b16 %v1190, %v1190
          %v1207 = vpack.c.b16 %v1191, %v1191
          %v1208 = vpack.c.b16 %v1192, %v1192
          %v1209 = vpack.c.b16 %v1193, %v1193
          %v1210 = vpack.c.b16 %v1194, %v1194
          %v1211 = vpack.c.b16 %v1195, %v1195
          %v1212 = vpack.c.b16 %v1196, %v1196
          %1229 = vst [vmem:[%s498] sm:$0xf] %v1197
          %1230 = vst [vmem:[%s498 + $0x4] sm:$0xf] %v1198
          %1231 = vst [vmem:[%s498 + $0x8] sm:$0xf] %v1199
          %1232 = vst [vmem:[%s498 + $0xc] sm:$0xf] %v1200
          %1233 = vst [vmem:[%s498 + $0x10] sm:$0xf] %v1201
          %1234 = vst [vmem:[%s498 + $0x14] sm:$0xf] %v1202
          %1235 = vst [vmem:[%s498 + $0x18] sm:$0xf] %v1203
          %1236 = vst [vmem:[%s498 + $0x1c] sm:$0xf] %v1204
          %1237 = vst [vmem:[%s498 + $0x20] sm:$0xf] %v1205
          %1238 = vst [vmem:[%s498 + $0x24] sm:$0xf] %v1206
          %1239 = vst [vmem:[%s498 + $0x28] sm:$0xf] %v1207
          %1240 = vst [vmem:[%s498 + $0x2c] sm:$0xf] %v1208
          %1241 = vst [vmem:[%s498 + $0x30] sm:$0xf] %v1209
          %1242 = vst [vmem:[%s498 + $0x34] sm:$0xf] %v1210
          %1243 = vst [vmem:[%s498 + $0x38] sm:$0xf] %v1211
          %1244 = vst [vmem:[%s498 + $0x3c] sm:$0xf] %v1212
          %v1245 = vld [vmem:[%s5] sm:$0xf]
          %v1246 = vld [vmem:[%s5 + $0x4] sm:$0xf]
          %v1247 = vld [vmem:[%s5 + $0x8] sm:$0xf]
          %v1248 = vld [vmem:[%s5 + $0xc] sm:$0xf]
          %v1249 = vld [vmem:[%s5 + $0x10] sm:$0xf]
          %v1250 = vld [vmem:[%s5 + $0x14] sm:$0xf]
          %v1251 = vld [vmem:[%s5 + $0x18] sm:$0xf]
          %v1252 = vld [vmem:[%s5 + $0x1c] sm:$0xf]
          %v1253 = vld [vmem:[%s5 + $0x20] sm:$0xf]
          %v1254 = vld [vmem:[%s5 + $0x24] sm:$0xf]
          %v1255 = vld [vmem:[%s5 + $0x28] sm:$0xf]
          %v1256 = vld [vmem:[%s5 + $0x2c] sm:$0xf]
          %v1257 = vld [vmem:[%s5 + $0x30] sm:$0xf]
          %v1258 = vld [vmem:[%s5 + $0x34] sm:$0xf]
          %v1259 = vld [vmem:[%s5 + $0x38] sm:$0xf]
          %v1260 = vld [vmem:[%s5 + $0x3c] sm:$0xf]
          %v1261 = vld [vmem:[%s6] sm:$0x1]
          %v1263 = vlaneseq
          %v1264 = vshrl.u32 %v1263, 7
          %v1265 = vsub.s32 0, %v1264
          %v1266 = vrot.slane %v1261, %v1265
          %v1284 = vunpack.c.l.b16 %v1245
          %v1285 = vunpack.c.l.b16 %v1246
          %v1286 = vunpack.c.l.b16 %v1247
          %v1287 = vunpack.c.l.b16 %v1248
          %v1288 = vunpack.c.l.b16 %v1249
          %v1289 = vunpack.c.l.b16 %v1250
          %v1290 = vunpack.c.l.b16 %v1251
          %v1291 = vunpack.c.l.b16 %v1252
          %v1292 = vunpack.c.l.b16 %v1253
          %v1293 = vunpack.c.l.b16 %v1254
          %v1294 = vunpack.c.l.b16 %v1255
          %v1295 = vunpack.c.l.b16 %v1256
          %v1296 = vunpack.c.l.b16 %v1257
          %v1297 = vunpack.c.l.b16 %v1258
          %v1298 = vunpack.c.l.b16 %v1259
          %v1299 = vunpack.c.l.b16 %v1260
          %v1300 = vpack.c.b16 %v1285, %v1284
          %v1301 = vpack.c.b16 %v1287, %v1286
          %v1302 = vpack.c.b16 %v1289, %v1288
          %v1303 = vpack.c.b16 %v1291, %v1290
          %v1304 = vpack.c.b16 %v1293, %v1292
          %v1305 = vpack.c.b16 %v1295, %v1294
          %v1306 = vpack.c.b16 %v1297, %v1296
          %v1307 = vpack.c.b16 %v1299, %v1298
          %1316 = vmatprep.subr.bf16.mxu0 0
          %1317 = vmatpush1.bf16.msra.mxu0 %v1300
          %1318 = vmatprep.subr.bf16.mxu0 0
          %1319 = vmatpush1.bf16.msra.mxu0 %v1301
          %1320 = vmatprep.subr.bf16.mxu0 0
          %1321 = vmatpush1.bf16.msra.mxu0 %v1302
          %1322 = vmatprep.subr.bf16.mxu0 0
          %1323 = vmatpush1.bf16.msra.mxu0 %v1303
          %1324 = vmatprep.subr.bf16.mxu0 0
          %1325 = vmatpush1.bf16.msra.mxu0 %v1304
          %1326 = vmatprep.subr.bf16.mxu0 0
          %1327 = vmatpush1.bf16.msra.mxu0 %v1305
          %1328 = vmatprep.subr.bf16.mxu0 0
          %1329 = vmatpush1.bf16.msra.mxu0 %v1306
          %1330 = vmatprep.subr.bf16.mxu0 0
          %1331 = vmatpush1.bf16.msra.mxu0 %v1307
          %1332 = vmatprep.subr.bf16.mxu0 0
          %1333 = vmatpush1.bf16.msra.mxu0 0
          %1334 = vmatprep.subr.bf16.mxu0 0
          %1335 = vmatpush1.bf16.msra.mxu0 0
          %1336 = vmatprep.subr.bf16.mxu0 0
          %1337 = vmatpush1.bf16.msra.mxu0 0
          %1338 = vmatprep.subr.bf16.mxu0 0
          %1339 = vmatpush1.bf16.msra.mxu0 0
          %1340 = vmatprep.subr.bf16.mxu0 0
          %1341 = vmatpush1.bf16.msra.mxu0 0
          %1342 = vmatprep.subr.bf16.mxu0 0
          %1343 = vmatpush1.bf16.msra.mxu0 0
          %1344 = vmatprep.subr.bf16.mxu0 0
          %1345 = vmatpush1.bf16.msra.mxu0 0
          %1346 = vmatprep.subr.bf16.mxu0 0
          %1347 = vmatpush1.bf16.msra.mxu0 0
          %1348 = vmatprep.mubr.bf16.mxu0 0
          %1349 = vmatmul.mubr.bf16.gmra.mrb[0].mxu0 %v996
          %v1350 = vpop.f32.mrb[0].mxu0
          %v1351 = vadd.f32 %v1266, %v1350
          %v1352 = vpop.f32.mrb[0].mxu0
          %v1353 = vpop.f32.mrb[0].mxu0
          %v1354 = vadd.f32 %v1266, %v1353
          %v1355 = vpop.f32.mrb[0].mxu0
          %1356 = vmatprep.mubr.bf16.mxu0 0
          %1357 = vmatmul.mubr.bf16.gmra.mrb[0].mxu0 %v997
          %v1358 = vpop.f32.mrb[0].mxu0
          %v1359 = vadd.f32 %v1266, %v1358
          %v1360 = vpop.f32.mrb[0].mxu0
          %v1361 = vpop.f32.mrb[0].mxu0
          %v1362 = vadd.f32 %v1266, %v1361
          %v1363 = vpop.f32.mrb[0].mxu0
          %1364 = vmatprep.mubr.bf16.mxu0 0
          %1365 = vmatmul.mubr.bf16.gmra.mrb[0].mxu0 %v998
          %v1366 = vpop.f32.mrb[0].mxu0
          %v1367 = vadd.f32 %v1266, %v1366
          %v1368 = vpop.f32.mrb[0].mxu0
          %v1369 = vpop.f32.mrb[0].mxu0
          %v1370 = vadd.f32 %v1266, %v1369
          %v1371 = vpop.f32.mrb[0].mxu0
          %1372 = vmatprep.mubr.bf16.mxu0 0
          %1373 = vmatmul.mubr.bf16.gmra.mrb[0].mxu0 %v999
          %v1374 = vpop.f32.mrb[0].mxu0
          %v1375 = vadd.f32 %v1266, %v1374
          %v1376 = vpop.f32.mrb[0].mxu0
          %v1377 = vpop.f32.mrb[0].mxu0
          %v1378 = vadd.f32 %v1266, %v1377
          %v1379 = vpop.f32.mrb[0].mxu0
          %1380 = vmatprep.mubr.bf16.mxu0 0
          %1381 = vmatmul.mubr.bf16.gmra.mrb[0].mxu0 %v1000
          %v1382 = vpop.f32.mrb[0].mxu0
          %v1383 = vadd.f32 %v1266, %v1382
          %v1384 = vpop.f32.mrb[0].mxu0
          %v1385 = vpop.f32.mrb[0].mxu0
          %v1386 = vadd.f32 %v1266, %v1385
          %v1387 = vpop.f32.mrb[0].mxu0
          %1388 = vmatprep.mubr.bf16.mxu0 0
          %1389 = vmatmul.mubr.bf16.gmra.mrb[0].mxu0 %v1001
          %v1390 = vpop.f32.mrb[0].mxu0
          %v1391 = vadd.f32 %v1266, %v1390
          %v1392 = vpop.f32.mrb[0].mxu0
          %v1393 = vpop.f32.mrb[0].mxu0
          %v1394 = vadd.f32 %v1266, %v1393
          %v1395 = vpop.f32.mrb[0].mxu0
          %1396 = vmatprep.mubr.bf16.mxu0 0
          %1397 = vmatmul.mubr.bf16.gmra.mrb[0].mxu0 %v1002
          %v1398 = vpop.f32.mrb[0].mxu0
          %v1399 = vadd.f32 %v1266, %v1398
          %v1400 = vpop.f32.mrb[0].mxu0
          %v1401 = vpop.f32.mrb[0].mxu0
          %v1402 = vadd.f32 %v1266, %v1401
          %v1403 = vpop.f32.mrb[0].mxu0
          %1404 = vmatprep.mubr.bf16.mxu0 0
          %1405 = vmatmul.mubr.bf16.gmra.mrb[0].mxu0 %v1003
          %v1406 = vpop.f32.mrb[0].mxu0
          %v1407 = vadd.f32 %v1266, %v1406
          %v1408 = vpop.f32.mrb[0].mxu0
          %v1409 = vpop.f32.mrb[0].mxu0
          %v1410 = vadd.f32 %v1266, %v1409
          %v1411 = vpop.f32.mrb[0].mxu0
          %1412 = vdwg.mxu0
          %1413 = vst [vmem:[%s504] sm:$0xff] %v1351
          %1414 = vst [vmem:[%s504 + $0x8] sm:$0xff] %v1354
          %1415 = vst [vmem:[%s504 + $0x10] sm:$0xff] %v1359
          %1416 = vst [vmem:[%s504 + $0x18] sm:$0xff] %v1362
          %1417 = vst [vmem:[%s504 + $0x20] sm:$0xff] %v1367
          %1418 = vst [vmem:[%s504 + $0x28] sm:$0xff] %v1370
          %1419 = vst [vmem:[%s504 + $0x30] sm:$0xff] %v1375
          %1420 = vst [vmem:[%s504 + $0x38] sm:$0xff] %v1378
          %1421 = vst [vmem:[%s504 + $0x40] sm:$0xff] %v1383
          %1422 = vst [vmem:[%s504 + $0x48] sm:$0xff] %v1386
          %1423 = vst [vmem:[%s504 + $0x50] sm:$0xff] %v1391
          %1424 = vst [vmem:[%s504 + $0x58] sm:$0xff] %v1394
          %1425 = vst [vmem:[%s504 + $0x60] sm:$0xff] %v1399
          %1426 = vst [vmem:[%s504 + $0x68] sm:$0xff] %v1402
          %1427 = vst [vmem:[%s504 + $0x70] sm:$0xff] %v1407
          %1428 = vst [vmem:[%s504 + $0x78] sm:$0xff] %v1410
        $region97: #{forward.5} parent=84 // pred_fallthru
          _
        %s1429 = smul.u32 16, %s24
        %p1430 = scmp.lt.s32.totalorder %s1429, 31
        %s1431 = scalar_select %p1430, %s1429, 31
        %s1432 = smul.addr %s1431, 4
        %s1433 = scalar_lea.vmem %s7, %s1432
        %s1434 = smul.u32 16, %s24
        %p1435 = scmp.lt.s32.totalorder %s1434, 31
        %s1436 = scalar_select %p1435, %s1434, 31
        %s1437 = smul.addr %s1436, 8
        %s1438 = scalar_lea.vmem %s8, %s1437
        // Predicated region
        $region98: #{forward.5} parent=84 // pred_check
          %p1439 = pneg %p219
        $region99: #{forward.5} parent=84 // pred_check_branch
          %1441 = sbr.rel (%p1439) target = $region101
        $region100: #{forward.5} parent=84 // pred_region
          %s1442 = smul.u32 16, %s24
        $region101: #{forward.5} parent=84 // pred_fallthru
          _
        // Predicated region
        $region102: #{forward.5} parent=84 // pred_check
          %p1443 = pneg %p245
        $region103: #{forward.5} parent=84 // pred_check_branch
          %1445 = sbr.rel (%p1443) target = $region105
        $region104: #{forward.5} parent=84 // pred_region
          %s1446 = smul.u32 16, %s24
        $region105: #{forward.5} parent=84 // pred_fallthru
          _
      $region85: #{forward.5} parent=5 // pred_fallthru
        _
      %p1447 = scmp.le.s32.totalorder 2, %s15
      // Predicated region
      $region106: #{forward.5} parent=5 // pred_check
        %p1448 = pneg %p1447
      $region107: #{forward.5} parent=5 // pred_check_branch
        %1450 = sbr.rel (%p1448) target = $region109
      $region108: #{forward.5} parent=5 // pred_region
        %s1451 = ssub.s32 %s15, 2
        // Predicated region
        $region110: #{forward.5} parent=108 // pred_check
          %p1452 = pneg %p225
        $region111: #{forward.5} parent=108 // pred_check_branch
          %1454 = sbr.rel (%p1452) target = $region113
        $region112: #{forward.5} parent=108 // pred_region
          %s1455 = smul.u32 16, %s26
          %p1456 = scmp.lt.s32.totalorder %s1455, 31
          %s1457 = scalar_select %p1456, %s1455, 31
          %s1458 = smul.addr %s1457, 4
          %s1459 = scalar_lea.vmem %s7, %s1458
        $region113: #{forward.5} parent=108 // pred_fallthru
          _
        // Predicated region
        $region114: #{forward.5} parent=108 // pred_check
          %p1460 = pneg %p251
        $region115: #{forward.5} parent=108 // pred_check_branch
          %1462 = sbr.rel (%p1460) target = $region117
        $region116: #{forward.5} parent=108 // pred_region
          %s1463 = smul.u32 16, %s26
          %p1464 = scmp.lt.s32.totalorder %s1463, 31
          %s1465 = scalar_select %p1464, %s1463, 31
          %s1466 = smul.addr %s1465, 8
          %s1467 = scalar_lea.vmem %s8, %s1466
        $region117: #{forward.5} parent=108 // pred_fallthru
          _
      $region109: #{forward.5} parent=5 // pred_fallthru
        _
    $region6: #{forward.5} parent=1 // loop_footer
      %s19 = sadd.s32 1, %s15
    $region7: #{forward.5} parent=1 // loop_footer_branch
      %14 = sbr.rel target = $region3
    $region8: #{forward.5} parent=1 // loop_exit
      _

// kernel: forward.6
$region0: #{forward.6}
  #allocation0 [shape = 'u32[]', space=smem, size = 0x4, offset = 0x4, fixed_abs, tag = 'smem constant byte address 0x4 - core index']
  #allocation1 [shape = 'u32[144,128]{1,0:T(1,128)}', space=vmem, size = 0x12000, scoped, tag = 'internal scratch']
  #allocation2 [shape = 'f32[128,128]{1,0:T(8,128)}', space=vmem, size = 0x10000, scoped, tag = 'scratch operand']
  %s0 = inlined_call_operand.vmem [shape: s8[256,256], index: 0, kind: input, shape index: {}]
  %s1 = inlined_call_operand.vmem [shape: bf16[256,128], index: 1, kind: input, shape index: {}]
  %s2 = inlined_call_operand.vmem [shape: f32[256,1], index: 2, kind: input, shape index: {}]
  %s3 = inlined_call_operand.vmem [shape: f32[256,128], index: 3, kind: input, shape index: {}]
  %s4 = inlined_call_operand.vmem [shape: f32[256,128], index: 4, kind: output, shape index: {}]
  %s5 = sld [smem:[#allocation0]]
  $region98: #{forward.6} parent=0
    _
  %s7 = ssub.s32 1, %s5
  %s8 = scalar_select 0, %s7, %s5
  $region1: #{forward.6} parent=0
    #allocation3 [shape = 'u8[32768]{0}', space=vmem, size = 0x8000, scoped, tag = 'input window, operand 0']
    loop: start=0, step=1, limit=6
    $region2: #{forward.6} parent=1 // loop_pre_header
      _
    $region3: #{forward.6} parent=1 // loop_header
      %s10 = sphi 0, %s14
      %p11 = scmp.ge.s32.totalorder %s10, 6
      %s17 = sphi 0, %s29
      %s18 = sphi 0, %s25
      %s19 = sphi 0, %s17
      %s20 = sphi 0, %s18
      %s21 = sphi 0, %s19
      %s22 = sphi 0, %s20
      %s34 = sphi 0, %s36
      %s37 = sphi 0, %s34
      %s38 = sphi 0, %s37
      %s54 = sphi 0, %s38
      %s60 = sphi 0, %s62
      %s63 = sphi 0, %s60
      %s64 = sphi 0, %s63
      %s80 = sphi 0, %s64
      %s86 = sphi 0, %s88
      %s89 = sphi 0, %s86
      %s90 = sphi 0, %s89
      %s106 = sphi 0, %s90
      %s112 = sphi 0, %s114
      %s115 = sphi 0, %s112
      %s116 = sphi 0, %s115
      %s132 = sphi 0, %s116
      %s138 = sphi 0, %s140
      %s141 = sphi 0, %s138
      %s142 = sphi 0, %s141
      %s158 = sphi 0, %s142
    $region4: #{forward.6} parent=1 // loop_header_branch
      %13 = sbr.rel (%p11) target = $region8
    $region5: #{forward.6} parent=1 // loop_body
      %s15 = ssub.s32 %s10, 1
      %s16 = ssub.s32 %s10, 2
      %s23 = sadd.s32 1, %s18
      %p24 = scmp.ge.s32.totalorder %s23, 2
      %s25 = scalar_select %p24, 0, %s23
      %s26 = sadd.s32 1, %s17
      %s27 = scalar_select %p24, %s26, %s17
      %p28 = scmp.ge.s32.totalorder %s27, 2
      %s29 = scalar_select %p28, 0, %s27
      %s30 = ssub.s32 %s17, %s29
      %s31 = ssub.s32 %s18, %s25
      %s32 = sor.u32 %s30, %s31
      %p33 = scmp.eq.s32.totalorder %s32, 0
      %s35 = sadd.s32 %s34, 1
      %s36 = scalar_select %p33, %s34, %s35
      %p39 = pneg %p33
      %p40 = scmp.eq.s32.totalorder %s10, 3
      %p41 = por %p39, %p40
      %p42 = scmp.ne.s32.totalorder %s34, %s37
      %p43 = scmp.eq.s32.totalorder %s10, 0
      %p44 = por %p42, %p43
      %p45 = scmp.ne.s32.totalorder %s34, %s37
      %p46 = scmp.eq.s32.totalorder %s15, 3
      %p47 = por %p45, %p46
      %p48 = scmp.ne.s32.totalorder %s37, %s38
      %p49 = scmp.eq.s32.totalorder %s15, 0
      %p50 = por %p48, %p49
      %p51 = scmp.ne.s32.totalorder %s37, %s38
      %p52 = scmp.eq.s32.totalorder %s16, 3
      %p53 = por %p51, %p52
      %p55 = scmp.ne.s32.totalorder %s38, %s54
      %p56 = scmp.eq.s32.totalorder %s16, 0
      %p57 = por %p55, %p56
      %s58 = ssub.s32 %s18, %s25
      %p59 = scmp.eq.s32.totalorder %s58, 0
      %s61 = sadd.s32 %s60, 1
      %s62 = scalar_select %p59, %s60, %s61
      %p65 = pneg %p59
      %p66 = scmp.eq.s32.totalorder %s10, 3
      %p67 = por %p65, %p66
      %p68 = scmp.ne.s32.totalorder %s60, %s63
      %p69 = scmp.eq.s32.totalorder %s10, 0
      %p70 = por %p68, %p69
      %p71 = scmp.ne.s32.totalorder %s60, %s63
      %p72 = scmp.eq.s32.totalorder %s15, 3
      %p73 = por %p71, %p72
      %p74 = scmp.ne.s32.totalorder %s63, %s64
      %p75 = scmp.eq.s32.totalorder %s15, 0
      %p76 = por %p74, %p75
      %p77 = scmp.ne.s32.totalorder %s63, %s64
      %p78 = scmp.eq.s32.totalorder %s16, 3
      %p79 = por %p77, %p78
      %p81 = scmp.ne.s32.totalorder %s64, %s80
      %p82 = scmp.eq.s32.totalorder %s16, 0
      %p83 = por %p81, %p82
      %s84 = ssub.s32 %s17, %s29
      %p85 = scmp.eq.s32.totalorder %s84, 0
      %s87 = sadd.s32 %s86, 1
      %s88 = scalar_select %p85, %s86, %s87
      %p91 = pneg %p85
      %p92 = scmp.eq.s32.totalorder %s10, 3
      %p93 = por %p91, %p92
      %p94 = scmp.ne.s32.totalorder %s86, %s89
      %p95 = scmp.eq.s32.totalorder %s10, 0
      %p96 = por %p94, %p95
      %p97 = scmp.ne.s32.totalorder %s86, %s89
      %p98 = scmp.eq.s32.totalorder %s15, 3
      %p99 = por %p97, %p98
      %p100 = scmp.ne.s32.totalorder %s89, %s90
      %p101 = scmp.eq.s32.totalorder %s15, 0
      %p102 = por %p100, %p101
      %p103 = scmp.ne.s32.totalorder %s89, %s90
      %p104 = scmp.eq.s32.totalorder %s16, 3
      %p105 = por %p103, %p104
      %p107 = scmp.ne.s32.totalorder %s90, %s106
      %p108 = scmp.eq.s32.totalorder %s16, 0
      %p109 = por %p107, %p108
      %s110 = ssub.s32 %s17, %s29
      %p111 = scmp.eq.s32.totalorder %s110, 0
      %s113 = sadd.s32 %s112, 1
      %s114 = scalar_select %p111, %s112, %s113
      %p117 = pneg %p111
      %p118 = scmp.eq.s32.totalorder %s10, 3
      %p119 = por %p117, %p118
      %p120 = scmp.ne.s32.totalorder %s112, %s115
      %p121 = scmp.eq.s32.totalorder %s10, 0
      %p122 = por %p120, %p121
      %p123 = scmp.ne.s32.totalorder %s112, %s115
      %p124 = scmp.eq.s32.totalorder %s15, 3
      %p125 = por %p123, %p124
      %p126 = scmp.ne.s32.totalorder %s115, %s116
      %p127 = scmp.eq.s32.totalorder %s15, 0
      %p128 = por %p126, %p127
      %p129 = scmp.ne.s32.totalorder %s115, %s116
      %p130 = scmp.eq.s32.totalorder %s16, 3
      %p131 = por %p129, %p130
      %p133 = scmp.ne.s32.totalorder %s116, %s132
      %p134 = scmp.eq.s32.totalorder %s16, 0
      %p135 = por %p133, %p134
      %s136 = ssub.s32 %s17, %s29
      %p137 = scmp.eq.s32.totalorder %s136, 0
      %s139 = sadd.s32 %s138, 1
      %s140 = scalar_select %p137, %s138, %s139
      %p143 = pneg %p137
      %p144 = scmp.eq.s32.totalorder %s10, 3
      %p145 = por %p143, %p144
      %p146 = scmp.ne.s32.totalorder %s138, %s141
      %p147 = scmp.eq.s32.totalorder %s10, 0
      %p148 = por %p146, %p147
      %p149 = scmp.ne.s32.totalorder %s138, %s141
      %p150 = scmp.eq.s32.totalorder %s15, 3
      %p151 = por %p149, %p150
      %p152 = scmp.ne.s32.totalorder %s141, %s142
      %p153 = scmp.eq.s32.totalorder %s15, 0
      %p154 = por %p152, %p153
      %p155 = scmp.ne.s32.totalorder %s141, %s142
      %p156 = scmp.eq.s32.totalorder %s16, 3
      %p157 = por %p155, %p156
      %p159 = scmp.ne.s32.totalorder %s142, %s158
      %p160 = scmp.eq.s32.totalorder %s16, 0
      %p161 = por %p159, %p160
      %p162 = scmp.le.s32.totalorder 1, %s10
      %p163 = scmp.lt.s32.totalorder %s10, 5
      %p164 = pnand %p162, %p163
      %p165 = pneg %p164
      // Predicated region
      $region9: #{forward.6} parent=5 // pred_check
        _
      $region10: #{forward.6} parent=5 // pred_check_branch
        %167 = sbr.rel (%p164) target = $region12
      $region11: #{forward.6} parent=5 // pred_region
        %s168 = ssub.s32 %s10, 1
      $region12: #{forward.6} parent=5 // pred_fallthru
        _
      %p169 = scmp.lt.s32.totalorder %s10, 4
      // Predicated region
      $region13: #{forward.6} parent=5 // pred_check
        %p170 = pneg %p169
      $region14: #{forward.6} parent=5 // pred_check_branch
        %172 = sbr.rel (%p170) target = $region16
      $region15: #{forward.6} parent=5 // pred_region
        // Predicated region
        $region17: #{forward.6} parent=15 // pred_check
          %p173 = pneg %p44
        $region18: #{forward.6} parent=15 // pred_check_branch
          %175 = sbr.rel (%p173) target = $region20
        $region19: #{forward.6} parent=15 // pred_region
          %s176 = sand.u32 %s34, 1
          %s177 = sand.u32 %s34, 1
          %s178 = smul.addr %s177, 32
          %s179 = scalar_lea.vmem [#allocation3], %s178
          %s180 = smul.u32 16, %s17
          %s181 = smul.addr %s180, 2
          %s182 = sadd.s32 %s18, %s181
          %s183 = smul.addr %s182, 2
          %s184 = scalar_lea.vmem %s0, %s183
          // Predicated region
          $region21: #{forward.6} parent=19 // pred_check
            _
          $region22: #{forward.6} parent=19 // pred_check_branch
            %186 = sbr.rel (0) target = $region24
          $region23: #{forward.6} parent=19 // pred_region
            // Predicated region
            $region25: #{forward.6} parent=23 // pred_check
              _
            $region26: #{forward.6} parent=23 // pred_check_branch
              %188 = sbr.rel target = $region28
            $region27: #{forward.6} parent=23 // pred_region
              // Predicated region
              $region40: #{forward.6} parent=27 // pred_check
                _
              $region41: #{forward.6} parent=27 // pred_check_branch
                %233 = sbr.rel (0) target = $region43
              $region42: #{forward.6} parent=27 // pred_region
                loop: start=0, step=1, limit=1
                $region44: #{forward.6} parent=42 // loop_pre_header
                  _
                $region45: #{forward.6} parent=42 // loop_header
                  %s235 = sphi 0, %s239
                  %p236 = scmp.ge.s32.totalorder %s235, 1
                  %s240 = sphi %s184, %s184
                  %s241 = sphi %s179, %s179
                $region46: #{forward.6} parent=42 // loop_header_branch
                  %238 = sbr.rel (%p236) target = $region50
                $region47: #{forward.6} parent=42 // loop_body
                  _
                $region48: #{forward.6} parent=42 // loop_footer
                  %s239 = sadd.s32 1, %s235
                $region49: #{forward.6} parent=42 // loop_footer_branch
                  %234 = sbr.rel target = $region45
                $region50: #{forward.6} parent=42 // loop_exit
                  _
                loop: start=0, step=1, limit=1
                $region51: #{forward.6} parent=42 // loop_pre_header
                  _
                $region52: #{forward.6} parent=42 // loop_header
                  %s244 = sphi 0, %s248
                  %p245 = scmp.ge.s32.totalorder %s244, 1
                  %s249 = sphi %s184, %s184
                  %s250 = sphi %s179, %s179
                $region53: #{forward.6} parent=42 // loop_header_branch
                  %247 = sbr.rel (%p245) target = $region57
                $region54: #{forward.6} parent=42 // loop_body
                  %v251 = vld [vmem:[%s249] sm:$0x3]
                  %252 = vst [vmem:[%s250] sm:$0x3] %v251
                  %v253 = vld [vmem:[%s249 + $0x4] sm:$0x3]
                  %254 = vst [vmem:[%s250 + $0x2] sm:$0x3] %v253
                  %v255 = vld [vmem:[%s249 + $0x8] sm:$0x3]
                  %256 = vst [vmem:[%s250 + $0x4] sm:$0x3] %v255
                  %v257 = vld [vmem:[%s249 + $0xc] sm:$0x3]
                  %258 = vst [vmem:[%s250 + $0x6] sm:$0x3] %v257
                  %v259 = vld [vmem:[%s249 + $0x10] sm:$0x3]
                  %260 = vst [vmem:[%s250 + $0x8] sm:$0x3] %v259
                  %v261 = vld [vmem:[%s249 + $0x14] sm:$0x3]
                  %262 = vst [vmem:[%s250 + $0xa] sm:$0x3] %v261
                  %v263 = vld [vmem:[%s249 + $0x18] sm:$0x3]
                  %264 = vst [vmem:[%s250 + $0xc] sm:$0x3] %v263
                  %v265 = vld [vmem:[%s249 + $0x1c] sm:$0x3]
                  %266 = vst [vmem:[%s250 + $0xe] sm:$0x3] %v265
                  %v267 = vld [vmem:[%s249 + $0x20] sm:$0x3]
                  %268 = vst [vmem:[%s250 + $0x10] sm:$0x3] %v267
                  %v269 = vld [vmem:[%s249 + $0x24] sm:$0x3]
                  %270 = vst [vmem:[%s250 + $0x12] sm:$0x3] %v269
                  %v271 = vld [vmem:[%s249 + $0x28] sm:$0x3]
                  %272 = vst [vmem:[%s250 + $0x14] sm:$0x3] %v271
                  %v273 = vld [vmem:[%s249 + $0x2c] sm:$0x3]
                  %274 = vst [vmem:[%s250 + $0x16] sm:$0x3] %v273
                  %v275 = vld [vmem:[%s249 + $0x30] sm:$0x3]
                  %276 = vst [vmem:[%s250 + $0x18] sm:$0x3] %v275
                  %v277 = vld [vmem:[%s249 + $0x34] sm:$0x3]
                  %278 = vst [vmem:[%s250 + $0x1a] sm:$0x3] %v277
                  %v279 = vld [vmem:[%s249 + $0x38] sm:$0x3]
                  %280 = vst [vmem:[%s250 + $0x1c] sm:$0x3] %v279
                  %v281 = vld [vmem:[%s249 + $0x3c] sm:$0x3]
                  %282 = vst [vmem:[%s250 + $0x1e] sm:$0x3] %v281
                $region55: #{forward.6} parent=42 // loop_footer
                  %s248 = sadd.s32 1, %s244
                $region56: #{forward.6} parent=42 // loop_footer_branch
                  %243 = sbr.rel target = $region52
                $region57: #{forward.6} parent=42 // loop_exit
                  _
              $region43: #{forward.6} parent=27 // pred_fallthru
                _
            $region28: #{forward.6} parent=23 // pred_fallthru
              _
            // Predicated region
            $region29: #{forward.6} parent=23 // pred_check
              _
            $region30: #{forward.6} parent=23 // pred_check_branch
              %190 = sbr.rel (0) target = $region32
            $region31: #{forward.6} parent=23 // pred_region
              loop: start=0, step=1, limit=1
              $region33: #{forward.6} parent=31 // loop_pre_header
                _
              $region34: #{forward.6} parent=31 // loop_header
                %s193 = sphi 0, %s197
                %p194 = scmp.ge.s32.totalorder %s193, 1
                %s198 = sphi %s184, %s184
                %s199 = sphi %s179, %s179
              $region35: #{forward.6} parent=31 // loop_header_branch
                %196 = sbr.rel (%p194) target = $region39
              $region36: #{forward.6} parent=31 // loop_body
                %v200 = vld [vmem:[%s198] sm:$0x3]
                %201 = vst [vmem:[%s199] sm:$0x3] %v200
                %v202 = vld [vmem:[%s198 + $0x4] sm:$0x3]
                %203 = vst [vmem:[%s199 + $0x2] sm:$0x3] %v202
                %v204 = vld [vmem:[%s198 + $0x8] sm:$0x3]
                %205 = vst [vmem:[%s199 + $0x4] sm:$0x3] %v204
                %v206 = vld [vmem:[%s198 + $0xc] sm:$0x3]
                %207 = vst [vmem:[%s199 + $0x6] sm:$0x3] %v206
                %v208 = vld [vmem:[%s198 + $0x10] sm:$0x3]
                %209 = vst [vmem:[%s199 + $0x8] sm:$0x3] %v208
                %v210 = vld [vmem:[%s198 + $0x14] sm:$0x3]
                %211 = vst [vmem:[%s199 + $0xa] sm:$0x3] %v210
                %v212 = vld [vmem:[%s198 + $0x18] sm:$0x3]
                %213 = vst [vmem:[%s199 + $0xc] sm:$0x3] %v212
                %v214 = vld [vmem:[%s198 + $0x1c] sm:$0x3]
                %215 = vst [vmem:[%s199 + $0xe] sm:$0x3] %v214
                %v216 = vld [vmem:[%s198 + $0x20] sm:$0x3]
                %217 = vst [vmem:[%s199 + $0x10] sm:$0x3] %v216
                %v218 = vld [vmem:[%s198 + $0x24] sm:$0x3]
                %219 = vst [vmem:[%s199 + $0x12] sm:$0x3] %v218
                %v220 = vld [vmem:[%s198 + $0x28] sm:$0x3]
                %221 = vst [vmem:[%s199 + $0x14] sm:$0x3] %v220
                %v222 = vld [vmem:[%s198 + $0x2c] sm:$0x3]
                %223 = vst [vmem:[%s199 + $0x16] sm:$0x3] %v222
                %v224 = vld [vmem:[%s198 + $0x30] sm:$0x3]
                %225 = vst [vmem:[%s199 + $0x18] sm:$0x3] %v224
                %v226 = vld [vmem:[%s198 + $0x34] sm:$0x3]
                %227 = vst [vmem:[%s199 + $0x1a] sm:$0x3] %v226
                %v228 = vld [vmem:[%s198 + $0x38] sm:$0x3]
                %229 = vst [vmem:[%s199 + $0x1c] sm:$0x3] %v228
                %v230 = vld [vmem:[%s198 + $0x3c] sm:$0x3]
                %231 = vst [vmem:[%s199 + $0x1e] sm:$0x3] %v230
              $region37: #{forward.6} parent=31 // loop_footer
                %s197 = sadd.s32 1, %s193
              $region38: #{forward.6} parent=31 // loop_footer_branch
                %192 = sbr.rel target = $region34
              $region39: #{forward.6} parent=31 // loop_exit
                _
            $region32: #{forward.6} parent=23 // pred_fallthru
              _
          $region24: #{forward.6} parent=19 // pred_fallthru
            _
          %283 = vnop
        $region20: #{forward.6} parent=15 // pred_fallthru
          _
        // Predicated region
        $region58: #{forward.6} parent=15 // pred_check
          %p284 = pneg %p70
        $region59: #{forward.6} parent=15 // pred_check_branch
          %286 = sbr.rel (%p284) target = $region61
        $region60: #{forward.6} parent=15 // pred_region
          %s287 = smul.u32 16, %s18
          %p288 = scmp.lt.s32.totalorder %s287, 31
          %s289 = scalar_select %p288, %s287, 31
          %s290 = smul.addr %s289, 4
          %s291 = scalar_lea.vmem %s1, %s290
          %s292 = smul.u32 16, %s18
        $region61: #{forward.6} parent=15 // pred_fallthru
          _
        // Predicated region
        $region62: #{forward.6} parent=15 // pred_check
          %p293 = pneg %p96
        $region63: #{forward.6} parent=15 // pred_check_branch
          %295 = sbr.rel (%p293) target = $region65
        $region64: #{forward.6} parent=15 // pred_region
          %s296 = smul.u32 16, %s17
          %p297 = scmp.lt.s32.totalorder %s296, 31
          %s298 = scalar_select %p297, %s296, 31
          %s299 = smul.addr %s298, 8
          %s300 = scalar_lea.vmem %s2, %s299
          %s301 = smul.u32 16, %s17
        $region65: #{forward.6} parent=15 // pred_fallthru
          _
        // Predicated region
        $region66: #{forward.6} parent=15 // pred_check
          %p302 = pneg %p122
        $region67: #{forward.6} parent=15 // pred_check_branch
          %304 = sbr.rel (%p302) target = $region69
        $region68: #{forward.6} parent=15 // pred_region
          %s305 = smul.u32 16, %s17
          %p306 = scmp.lt.s32.totalorder %s305, 31
          %s307 = scalar_select %p306, %s305, 31
          %s308 = smul.addr %s307, 8
          %s309 = scalar_lea.vmem %s3, %s308
          %s310 = smul.u32 16, %s17
        $region69: #{forward.6} parent=15 // pred_fallthru
          _
      $region16: #{forward.6} parent=5 // pred_fallthru
        _
      %p311 = scmp.le.s32.totalorder 1, %s10
      %p312 = scmp.lt.s32.totalorder %s10, 5
      %p313 = pnand %p311, %p312
      %p314 = pneg %p313
      // Predicated region
      $region70: #{forward.6} parent=5 // pred_check
        _
      $region71: #{forward.6} parent=5 // pred_check_branch
        %316 = sbr.rel (%p313) target = $region73
      $region72: #{forward.6} parent=5 // pred_region
        %s317 = ssub.s32 %s10, 1
        %s318 = sand.u32 %s37, 1
        %s319 = sand.u32 %s37, 1
        %s320 = smul.addr %s319, 32
        %s321 = scalar_lea.vmem [#allocation3], %s320
        // Predicated region
        $region74: #{forward.6} parent=72 // pred_check
          %p322 = pneg %p50
        $region75: #{forward.6} parent=72 // pred_check_branch
          %324 = sbr.rel (%p322) target = $region77
        $region76: #{forward.6} parent=72 // pred_region
          _
        $region77: #{forward.6} parent=72 // pred_fallthru
          _
        %s325 = sand.u32 %s37, 1
        %s326 = sand.u32 %s37, 1
        %s327 = smul.addr %s326, 32
        %s328 = scalar_lea.vmem [#allocation3], %s327
        %p329 = pneg %p50
        %p330 = pneg %p47
        %s331 = smul.u32 16, %s20
        %p332 = scmp.lt.s32.totalorder %s331, 31
        %s333 = scalar_select %p332, %s331, 31
        %s334 = smul.addr %s333, 4
        %s335 = scalar_lea.vmem %s1, %s334
        %p336 = pneg %p76
        %p337 = pneg %p73
        %s338 = smul.u32 16, %s19
        %p339 = scmp.lt.s32.totalorder %s338, 31
        %s340 = scalar_select %p339, %s338, 31
        %s341 = smul.addr %s340, 8
        %s342 = scalar_lea.vmem %s2, %s341
        %p343 = pneg %p102
        %p344 = pneg %p99
        %s345 = smul.u32 16, %s19
        %p346 = scmp.lt.s32.totalorder %s345, 31
        %s347 = scalar_select %p346, %s345, 31
        %s348 = smul.addr %s347, 8
        %s349 = scalar_lea.vmem %s3, %s348
        %p350 = pneg %p128
        %p351 = pneg %p125
        %p352 = pneg %p154
        %p353 = pneg %p151
        %s354 = smul.u32 16, %s19
        %p355 = scmp.lt.s32.totalorder %s354, 31
        %s356 = scalar_select %p355, %s354, 31
        %s357 = smul.addr %s356, 8
        %s358 = scalar_lea.vmem %s4, %s357
        %s359 = smul.u32 16, %s19
        %s360 = smul.u32 16, %s20
        %p361 = scmp.lt.s32.totalorder %s360, 31
        %s362 = scalar_select %p361, %s360, 31
        %s363 = smul.addr %s362, 4
        %s364 = scalar_lea.vmem %s1, %s363
        %s365 = smul.u32 16, %s20
        %s366 = smul.u32 16, %s19
        %p367 = scmp.lt.s32.totalorder %s366, 31
        %s368 = scalar_select %p367, %s366, 31
        %s369 = smul.addr %s368, 8
        %s370 = scalar_lea.vmem %s2, %s369
        %s371 = smul.u32 16, %s19
        %s372 = smul.u32 16, %s19
        %p373 = scmp.lt.s32.totalorder %s372, 31
        %s374 = scalar_select %p373, %s372, 31
        %s375 = smul.addr %s374, 8
        %s376 = scalar_lea.vmem %s3, %s375
        %s377 = smul.u32 16, %s19
        %s378 = smul.u32 16, %s19
        %p379 = scmp.lt.s32.totalorder %s378, 31
        %s380 = scalar_select %p379, %s378, 31
        %s381 = smul.addr %s380, 8
        %s382 = scalar_lea.vmem %s4, %s381
        %s383 = smul.u32 16, %s19
        %p385 = scmp.eq.s32.totalorder %s20, 0
        // Predicated region
        $region78: #{forward.6} parent=72 // pred_check
          %p386 = pneg %p385
        $region79: #{forward.6} parent=72 // pred_check_branch
          %388 = sbr.rel (%p386) target = $region81
        $region80: #{forward.6} parent=72 // pred_region
          %389 = vst [vmem:[#allocation2] sm:$0xff] 0.0
          %390 = vst [vmem:[#allocation2 + $0x8] sm:$0xff] 0.0
          %391 = vst [vmem:[#allocation2 + $0x10] sm:$0xff] 0.0
          %392 = vst [vmem:[#allocation2 + $0x18] sm:$0xff] 0.0
          %393 = vst [vmem:[#allocation2 + $0x20] sm:$0xff] 0.0
          %394 = vst [vmem:[#allocation2 + $0x28] sm:$0xff] 0.0
          %395 = vst [vmem:[#allocation2 + $0x30] sm:$0xff] 0.0
          %396 = vst [vmem:[#allocation2 + $0x38] sm:$0xff] 0.0
          %397 = vst [vmem:[#allocation2 + $0x40] sm:$0xff] 0.0
          %398 = vst [vmem:[#allocation2 + $0x48] sm:$0xff] 0.0
          %399 = vst [vmem:[#allocation2 + $0x50] sm:$0xff] 0.0
          %400 = vst [vmem:[#allocation2 + $0x58] sm:$0xff] 0.0
          %401 = vst [vmem:[#allocation2 + $0x60] sm:$0xff] 0.0
          %402 = vst [vmem:[#allocation2 + $0x68] sm:$0xff] 0.0
          %403 = vst [vmem:[#allocation2 + $0x70] sm:$0xff] 0.0
          %404 = vst [vmem:[#allocation2 + $0x78] sm:$0xff] 0.0
        $region81: #{forward.6} parent=72 // pred_fallthru
          _
        %v405 = vld [vmem:[#allocation2] sm:$0xff]
        %v406 = vld [vmem:[#allocation2 + $0x8] sm:$0xff]
        %v407 = vld [vmem:[#allocation2 + $0x10] sm:$0xff]
        %v408 = vld [vmem:[#allocation2 + $0x18] sm:$0xff]
        %v409 = vld [vmem:[#allocation2 + $0x20] sm:$0xff]
        %v410 = vld [vmem:[#allocation2 + $0x28] sm:$0xff]
        %v411 = vld [vmem:[#allocation2 + $0x30] sm:$0xff]
        %v412 = vld [vmem:[#allocation2 + $0x38] sm:$0xff]
        %v413 = vld [vmem:[#allocation2 + $0x40] sm:$0xff]
        %v414 = vld [vmem:[#allocation2 + $0x48] sm:$0xff]
        %v415 = vld [vmem:[#allocation2 + $0x50] sm:$0xff]
        %v416 = vld [vmem:[#allocation2 + $0x58] sm:$0xff]
        %v417 = vld [vmem:[#allocation2 + $0x60] sm:$0xff]
        %v418 = vld [vmem:[#allocation2 + $0x68] sm:$0xff]
        %v419 = vld [vmem:[#allocation2 + $0x70] sm:$0xff]
        %v420 = vld [vmem:[#allocation2 + $0x78] sm:$0xff]
        %v421 = vld [vmem:[%s321] sm:$0x3]
        %v422 = vld [vmem:[%s321 + $0x2] sm:$0x3]
        %v423 = vld [vmem:[%s321 + $0x4] sm:$0x3]
        %v424 = vld [vmem:[%s321 + $0x6] sm:$0x3]
        %v425 = vld [vmem:[%s321 + $0x8] sm:$0x3]
        %v426 = vld [vmem:[%s321 + $0xa] sm:$0x3]
        %v427 = vld [vmem:[%s321 + $0xc] sm:$0x3]
        %v428 = vld [vmem:[%s321 + $0xe] sm:$0x3]
        %v429 = vld [vmem:[%s321 + $0x10] sm:$0x3]
        %v430 = vld [vmem:[%s321 + $0x12] sm:$0x3]
        %v431 = vld [vmem:[%s321 + $0x14] sm:$0x3]
        %v432 = vld [vmem:[%s321 + $0x16] sm:$0x3]
        %v433 = vld [vmem:[%s321 + $0x18] sm:$0x3]
        %v434 = vld [vmem:[%s321 + $0x1a] sm:$0x3]
        %v435 = vld [vmem:[%s321 + $0x1c] sm:$0x3]
        %v436 = vld [vmem:[%s321 + $0x1e] sm:$0x3]
        %v437 = vunpack.c.l.s8.bf16 %v421
        %v438 = vunpack.c.l.s8.bf16 %v422
        %v439 = vunpack.c.l.s8.bf16 %v423
        %v440 = vunpack.c.l.s8.bf16 %v424
        %v441 = vunpack.c.l.s8.bf16 %v425
        %v442 = vunpack.c.l.s8.bf16 %v426
        %v443 = vunpack.c.l.s8.bf16 %v427
        %v444 = vunpack.c.l.s8.bf16 %v428
        %v445 = vunpack.c.l.s8.bf16 %v429
        %v446 = vunpack.c.l.s8.bf16 %v430
        %v447 = vunpack.c.l.s8.bf16 %v431
        %v448 = vunpack.c.l.s8.bf16 %v432
        %v449 = vunpack.c.l.s8.bf16 %v433
        %v450 = vunpack.c.l.s8.bf16 %v434
        %v451 = vunpack.c.l.s8.bf16 %v435
        %v452 = vunpack.c.l.s8.bf16 %v436
        %v453 = vld [vmem:[%s364] sm:$0xf]
        %v454 = vld [vmem:[%s364 + $0x4] sm:$0xf]
        %v455 = vld [vmem:[%s364 + $0x8] sm:$0xf]
        %v456 = vld [vmem:[%s364 + $0xc] sm:$0xf]
        %v457 = vld [vmem:[%s364 + $0x10] sm:$0xf]
        %v458 = vld [vmem:[%s364 + $0x14] sm:$0xf]
        %v459 = vld [vmem:[%s364 + $0x18] sm:$0xf]
        %v460 = vld [vmem:[%s364 + $0x1c] sm:$0xf]
        %v461 = vld [vmem:[%s364 + $0x20] sm:$0xf]
        %v462 = vld [vmem:[%s364 + $0x24] sm:$0xf]
        %v463 = vld [vmem:[%s364 + $0x28] sm:$0xf]
        %v464 = vld [vmem:[%s364 + $0x2c] sm:$0xf]
        %v465 = vld [vmem:[%s364 + $0x30] sm:$0xf]
        %v466 = vld [vmem:[%s364 + $0x34] sm:$0xf]
        %v467 = vld [vmem:[%s364 + $0x38] sm:$0xf]
        %v468 = vld [vmem:[%s364 + $0x3c] sm:$0xf]
        %v485 = vunpack.c.l.b16 %v437
        %v486 = vunpack.c.l.b16 %v438
        %v487 = vunpack.c.l.b16 %v439
        %v488 = vunpack.c.l.b16 %v440
        %v489 = vunpack.c.l.b16 %v441
        %v490 = vunpack.c.l.b16 %v442
        %v491 = vunpack.c.l.b16 %v443
        %v492 = vunpack.c.l.b16 %v444
        %v493 = vunpack.c.l.b16 %v445
        %v494 = vunpack.c.l.b16 %v446
        %v495 = vunpack.c.l.b16 %v447
        %v496 = vunpack.c.l.b16 %v448
        %v497 = vunpack.c.l.b16 %v449
        %v498 = vunpack.c.l.b16 %v450
        %v499 = vunpack.c.l.b16 %v451
        %v500 = vunpack.c.l.b16 %v452
        %v501 = vpack.c.b16 %v486, %v485
        %v502 = vpack.c.b16 %v488, %v487
        %v503 = vpack.c.b16 %v490, %v489
        %v504 = vpack.c.b16 %v492, %v491
        %v505 = vpack.c.b16 %v494, %v493
        %v506 = vpack.c.b16 %v496, %v495
        %v507 = vpack.c.b16 %v498, %v497
        %v508 = vpack.c.b16 %v500, %v499
        %v533 = vunpack.c.l.b16 %v453
        %v534 = vunpack.c.l.b16 %v454
        %v535 = vunpack.c.l.b16 %v455
        %v536 = vunpack.c.l.b16 %v456
        %v537 = vunpack.c.l.b16 %v457
        %v538 = vunpack.c.l.b16 %v458
        %v539 = vunpack.c.l.b16 %v459
        %v540 = vunpack.c.l.b16 %v460
        %v541 = vunpack.c.l.b16 %v461
        %v542 = vunpack.c.l.b16 %v462
        %v543 = vunpack.c.l.b16 %v463
        %v544 = vunpack.c.l.b16 %v464
        %v545 = vunpack.c.l.b16 %v465
        %v546 = vunpack.c.l.b16 %v466
        %v547 = vunpack.c.l.b16 %v467
        %v548 = vunpack.c.l.b16 %v468
        %v549 = vpack.c.b16 %v534, %v533
        %v550 = vpack.c.b16 %v536, %v535
        %v551 = vpack.c.b16 %v538, %v537
        %v552 = vpack.c.b16 %v540, %v539
        %v553 = vpack.c.b16 %v542, %v541
        %v554 = vpack.c.b16 %v544, %v543
        %v555 = vpack.c.b16 %v546, %v545
        %v556 = vpack.c.b16 %v548, %v547
        %565 = vmatprep.subr.bf16.mxu0 0
        %566 = vmatpush1.bf16.msra.mxu0 %v549
        %567 = vmatprep.subr.bf16.mxu0 0
        %568 = vmatpush1.bf16.msra.mxu0 %v550
        %569 = vmatprep.subr.bf16.mxu0 0
        %570 = vmatpush1.bf16.msra.mxu0 %v551
        %571 = vmatprep.subr.bf16.mxu0 0
        %572 = vmatpush1.bf16.msra.mxu0 %v552
        %573 = vmatprep.subr.bf16.mxu0 0
        %574 = vmatpush1.bf16.msra.mxu0 %v553
        %575 = vmatprep.subr.bf16.mxu0 0
        %576 = vmatpush1.bf16.msra.mxu0 %v554
        %577 = vmatprep.subr.bf16.mxu0 0
        %578 = vmatpush1.bf16.msra.mxu0 %v555
        %579 = vmatprep.subr.bf16.mxu0 0
        %580 = vmatpush1.bf16.msra.mxu0 %v556
        %581 = vmatprep.subr.bf16.mxu0 0
        %582 = vmatpush1.bf16.msra.mxu0 0
        %583 = vmatprep.subr.bf16.mxu0 0
        %584 = vmatpush1.bf16.msra.mxu0 0
        %585 = vmatprep.subr.bf16.mxu0 0
        %586 = vmatpush1.bf16.msra.mxu0 0
        %587 = vmatprep.subr.bf16.mxu0 0
        %588 = vmatpush1.bf16.msra.mxu0 0
        %589 = vmatprep.subr.bf16.mxu0 0
        %590 = vmatpush1.bf16.msra.mxu0 0
        %591 = vmatprep.subr.bf16.mxu0 0
        %592 = vmatpush1.bf16.msra.mxu0 0
        %593 = vmatprep.subr.bf16.mxu0 0
        %594 = vmatpush1.bf16.msra.mxu0 0
        %595 = vmatprep.subr.bf16.mxu0 0
        %596 = vmatpush1.bf16.msra.mxu0 0
        %597 = vmatprep.mubr.bf16.mxu0 0
        %598 = vmatmul.mubr.bf16.gmra.mrb[0].mxu0 %v501
        %v599 = vpop.f32.mrb[0].mxu0
        %v600 = vadd.f32 0.0, %v599
        %v601 = vpop.f32.mrb[0].mxu0
        %v602 = vpop.f32.mrb[0].mxu0
        %v603 = vadd.f32 0.0, %v602
        %v604 = vpop.f32.mrb[0].mxu0
        %605 = vmatprep.mubr.bf16.mxu0 0
        %606 = vmatmul.mubr.bf16.gmra.mrb[0].mxu0 %v502
        %v607 = vpop.f32.mrb[0].mxu0
        %v608 = vadd.f32 0.0, %v607
        %v609 = vpop.f32.mrb[0].mxu0
        %v610 = vpop.f32.mrb[0].mxu0
        %v611 = vadd.f32 0.0, %v610
        %v612 = vpop.f32.mrb[0].mxu0
        %613 = vmatprep.mubr.bf16.mxu0 0
        %614 = vmatmul.mubr.bf16.gmra.mrb[0].mxu0 %v503
        %v615 = vpop.f32.mrb[0].mxu0
        %v616 = vadd.f32 0.0, %v615
        %v617 = vpop.f32.mrb[0].mxu0
        %v618 = vpop.f32.mrb[0].mxu0
        %v619 = vadd.f32 0.0, %v618
        %v620 = vpop.f32.mrb[0].mxu0
        %621 = vmatprep.mubr.bf16.mxu0 0
        %622 = vmatmul.mubr.bf16.gmra.mrb[0].mxu0 %v504
        %v623 = vpop.f32.mrb[0].mxu0
        %v624 = vadd.f32 0.0, %v623
        %v625 = vpop.f32.mrb[0].mxu0
        %v626 = vpop.f32.mrb[0].mxu0
        %v627 = vadd.f32 0.0, %v626
        %v628 = vpop.f32.mrb[0].mxu0
        %629 = vmatprep.mubr.bf16.mxu0 0
        %630 = vmatmul.mubr.bf16.gmra.mrb[0].mxu0 %v505
        %v631 = vpop.f32.mrb[0].mxu0
        %v632 = vadd.f32 0.0, %v631
        %v633 = vpop.f32.mrb[0].mxu0
        %v634 = vpop.f32.mrb[0].mxu0
        %v635 = vadd.f32 0.0, %v634
        %v636 = vpop.f32.mrb[0].mxu0
        %637 = vmatprep.mubr.bf16.mxu0 0
        %638 = vmatmul.mubr.bf16.gmra.mrb[0].mxu0 %v506
        %v639 = vpop.f32.mrb[0].mxu0
        %v640 = vadd.f32 0.0, %v639
        %v641 = vpop.f32.mrb[0].mxu0
        %v642 = vpop.f32.mrb[0].mxu0
        %v643 = vadd.f32 0.0, %v642
        %v644 = vpop.f32.mrb[0].mxu0
        %645 = vmatprep.mubr.bf16.mxu0 0
        %646 = vmatmul.mubr.bf16.gmra.mrb[0].mxu0 %v507
        %v647 = vpop.f32.mrb[0].mxu0
        %v648 = vadd.f32 0.0, %v647
        %v649 = vpop.f32.mrb[0].mxu0
        %v650 = vpop.f32.mrb[0].mxu0
        %v651 = vadd.f32 0.0, %v650
        %v652 = vpop.f32.mrb[0].mxu0
        %653 = vmatprep.mubr.bf16.mxu0 0
        %654 = vmatmul.mubr.bf16.gmra.mrb[0].mxu0 %v508
        %v655 = vpop.f32.mrb[0].mxu0
        %v656 = vadd.f32 0.0, %v655
        %v657 = vpop.f32.mrb[0].mxu0
        %v658 = vpop.f32.mrb[0].mxu0
        %v659 = vadd.f32 0.0, %v658
        %v660 = vpop.f32.mrb[0].mxu0
        %661 = vdwg.mxu0
        %v662 = vadd.f32 %v405, %v600
        %v663 = vadd.f32 %v406, %v603
        %v664 = vadd.f32 %v407, %v608
        %v665 = vadd.f32 %v408, %v611
        %v666 = vadd.f32 %v409, %v616
        %v667 = vadd.f32 %v410, %v619
        %v668 = vadd.f32 %v411, %v624
        %v669 = vadd.f32 %v412, %v627
        %v670 = vadd.f32 %v413, %v632
        %v671 = vadd.f32 %v414, %v635
        %v672 = vadd.f32 %v415, %v640
        %v673 = vadd.f32 %v416, %v643
        %v674 = vadd.f32 %v417, %v648
        %v675 = vadd.f32 %v418, %v651
        %v676 = vadd.f32 %v419, %v656
        %v677 = vadd.f32 %v420, %v659
        %678 = vst [vmem:[#allocation2] sm:$0xff] %v662
        %679 = vst [vmem:[#allocation2 + $0x8] sm:$0xff] %v663
        %680 = vst [vmem:[#allocation2 + $0x10] sm:$0xff] %v664
        %681 = vst [vmem:[#allocation2 + $0x18] sm:$0xff] %v665
        %682 = vst [vmem:[#allocation2 + $0x20] sm:$0xff] %v666
        %683 = vst [vmem:[#allocation2 + $0x28] sm:$0xff] %v667
        %684 = vst [vmem:[#allocation2 + $0x30] sm:$0xff] %v668
        %685 = vst [vmem:[#allocation2 + $0x38] sm:$0xff] %v669
        %686 = vst [vmem:[#allocation2 + $0x40] sm:$0xff] %v670
        %687 = vst [vmem:[#allocation2 + $0x48] sm:$0xff] %v671
        %688 = vst [vmem:[#allocation2 + $0x50] sm:$0xff] %v672
        %689 = vst [vmem:[#allocation2 + $0x58] sm:$0xff] %v673
        %690 = vst [vmem:[#allocation2 + $0x60] sm:$0xff] %v674
        %691 = vst [vmem:[#allocation2 + $0x68] sm:$0xff] %v675
        %692 = vst [vmem:[#allocation2 + $0x70] sm:$0xff] %v676
        %693 = vst [vmem:[#allocation2 + $0x78] sm:$0xff] %v677
        %p694 = scmp.eq.s32.totalorder %s20, 1
        // Predicated region
        $region82: #{forward.6} parent=72 // pred_check
          %p695 = pneg %p694
        $region83: #{forward.6} parent=72 // pred_check_branch
          %697 = sbr.rel (%p695) target = $region85
        $region84: #{forward.6} parent=72 // pred_region
          %v698 = vld [vmem:[%s370] sm:$0xff]
          %v699 = vld [vmem:[%s370 + $0x8] sm:$0xff]
          %v700 = vld [vmem:[%s370 + $0x10] sm:$0xff]
          %v701 = vld [vmem:[%s370 + $0x18] sm:$0xff]
          %v702 = vld [vmem:[%s370 + $0x20] sm:$0xff]
          %v703 = vld [vmem:[%s370 + $0x28] sm:$0xff]
          %v704 = vld [vmem:[%s370 + $0x30] sm:$0xff]
          %v705 = vld [vmem:[%s370 + $0x38] sm:$0xff]
          %v706 = vld [vmem:[%s370 + $0x40] sm:$0xff]
          %v707 = vld [vmem:[%s370 + $0x48] sm:$0xff]
          %v708 = vld [vmem:[%s370 + $0x50] sm:$0xff]
          %v709 = vld [vmem:[%s370 + $0x58] sm:$0xff]
          %v710 = vld [vmem:[%s370 + $0x60] sm:$0xff]
          %v711 = vld [vmem:[%s370 + $0x68] sm:$0xff]
          %v712 = vld [vmem:[%s370 + $0x70] sm:$0xff]
          %v713 = vld [vmem:[%s370 + $0x78] sm:$0xff]
          %v714 = vld [vmem:[#allocation2] sm:$0xff]
          %v715 = vld [vmem:[#allocation2 + $0x8] sm:$0xff]
          %v716 = vld [vmem:[#allocation2 + $0x10] sm:$0xff]
          %v717 = vld [vmem:[#allocation2 + $0x18] sm:$0xff]
          %v718 = vld [vmem:[#allocation2 + $0x20] sm:$0xff]
          %v719 = vld [vmem:[#allocation2 + $0x28] sm:$0xff]
          %v720 = vld [vmem:[#allocation2 + $0x30] sm:$0xff]
          %v721 = vld [vmem:[#allocation2 + $0x38] sm:$0xff]
          %v722 = vld [vmem:[#allocation2 + $0x40] sm:$0xff]
          %v723 = vld [vmem:[#allocation2 + $0x48] sm:$0xff]
          %v724 = vld [vmem:[#allocation2 + $0x50] sm:$0xff]
          %v725 = vld [vmem:[#allocation2 + $0x58] sm:$0xff]
          %v726 = vld [vmem:[#allocation2 + $0x60] sm:$0xff]
          %v727 = vld [vmem:[#allocation2 + $0x68] sm:$0xff]
          %v728 = vld [vmem:[#allocation2 + $0x70] sm:$0xff]
          %v729 = vld [vmem:[#allocation2 + $0x78] sm:$0xff]
          %731 = vset.pattern.permute.xlu0 0
          %732 = vperm.xlu0 %731, %v698
          %v733 = vpop.permute.xlu0 %732
          %736 = vset.pattern.permute.xlu0 0
          %737 = vperm.xlu0 %736, %v699
          %v738 = vpop.permute.xlu0 %737
          %741 = vset.pattern.permute.xlu0 0
          %742 = vperm.xlu0 %741, %v700
          %v743 = vpop.permute.xlu0 %742
          %746 = vset.pattern.permute.xlu0 0
          %747 = vperm.xlu0 %746, %v701
          %v748 = vpop.permute.xlu0 %747
          %751 = vset.pattern.permute.xlu0 0
          %752 = vperm.xlu0 %751, %v702
          %v753 = vpop.permute.xlu0 %752
          %756 = vset.pattern.permute.xlu0 0
          %757 = vperm.xlu0 %756, %v703
          %v758 = vpop.permute.xlu0 %757
          %761 = vset.pattern.permute.xlu0 0
          %762 = vperm.xlu0 %761, %v704
          %v763 = vpop.permute.xlu0 %762
          %766 = vset.pattern.permute.xlu0 0
          %767 = vperm.xlu0 %766, %v705
          %v768 = vpop.permute.xlu0 %767
          %771 = vset.pattern.permute.xlu0 0
          %772 = vperm.xlu0 %771, %v706
          %v773 = vpop.permute.xlu0 %772
          %776 = vset.pattern.permute.xlu0 0
          %777 = vperm.xlu0 %776, %v707
          %v778 = vpop.permute.xlu0 %777
          %781 = vset.pattern.permute.xlu0 0
          %782 = vperm.xlu0 %781, %v708
          %v783 = vpop.permute.xlu0 %782
          %786 = vset.pattern.permute.xlu0 0
          %787 = vperm.xlu0 %786, %v709
          %v788 = vpop.permute.xlu0 %787
          %791 = vset.pattern.permute.xlu0 0
          %792 = vperm.xlu0 %791, %v710
          %v793 = vpop.permute.xlu0 %792
          %796 = vset.pattern.permute.xlu0 0
          %797 = vperm.xlu0 %796, %v711
          %v798 = vpop.permute.xlu0 %797
          %801 = vset.pattern.permute.xlu0 0
          %802 = vperm.xlu0 %801, %v712
          %v803 = vpop.permute.xlu0 %802
          %806 = vset.pattern.permute.xlu0 0
          %807 = vperm.xlu0 %806, %v713
          %v808 = vpop.permute.xlu0 %807
          %v810 = vmul.f32 %v733, %v714
          %v811 = vmul.f32 %v738, %v715
          %v812 = vmul.f32 %v743, %v716
          %v813 = vmul.f32 %v748, %v717
          %v814 = vmul.f32 %v753, %v718
          %v815 = vmul.f32 %v758, %v719
          %v816 = vmul.f32 %v763, %v720
          %v817 = vmul.f32 %v768, %v721
          %v818 = vmul.f32 %v773, %v722
          %v819 = vmul.f32 %v778, %v723
          %v820 = vmul.f32 %v783, %v724
          %v821 = vmul.f32 %v788, %v725
          %v822 = vmul.f32 %v793, %v726
          %v823 = vmul.f32 %v798, %v727
          %v824 = vmul.f32 %v803, %v728
          %v825 = vmul.f32 %v808, %v729
          %v826 = vld [vmem:[%s376] sm:$0xff]
          %v827 = vld [vmem:[%s376 + $0x8] sm:$0xff]
          %v828 = vld [vmem:[%s376 + $0x10] sm:$0xff]
          %v829 = vld [vmem:[%s376 + $0x18] sm:$0xff]
          %v830 = vld [vmem:[%s376 + $0x20] sm:$0xff]
          %v831 = vld [vmem:[%s376 + $0x28] sm:$0xff]
          %v832 = vld [vmem:[%s376 + $0x30] sm:$0xff]
          %v833 = vld [vmem:[%s376 + $0x38] sm:$0xff]
          %v834 = vld [vmem:[%s376 + $0x40] sm:$0xff]
          %v835 = vld [vmem:[%s376 + $0x48] sm:$0xff]
          %v836 = vld [vmem:[%s376 + $0x50] sm:$0xff]
          %v837 = vld [vmem:[%s376 + $0x58] sm:$0xff]
          %v838 = vld [vmem:[%s376 + $0x60] sm:$0xff]
          %v839 = vld [vmem:[%s376 + $0x68] sm:$0xff]
          %v840 = vld [vmem:[%s376 + $0x70] sm:$0xff]
          %v841 = vld [vmem:[%s376 + $0x78] sm:$0xff]
          %v842 = vadd.f32 %v810, %v826
          %v843 = vadd.f32 %v811, %v827
          %v844 = vadd.f32 %v812, %v828
          %v845 = vadd.f32 %v813, %v829
          %v846 = vadd.f32 %v814, %v830
          %v847 = vadd.f32 %v815, %v831
          %v848 = vadd.f32 %v816, %v832
          %v849 = vadd.f32 %v817, %v833
          %v850 = vadd.f32 %v818, %v834
          %v851 = vadd.f32 %v819, %v835
          %v852 = vadd.f32 %v820, %v836
          %v853 = vadd.f32 %v821, %v837
          %v854 = vadd.f32 %v822, %v838
          %v855 = vadd.f32 %v823, %v839
          %v856 = vadd.f32 %v824, %v840
          %v857 = vadd.f32 %v825, %v841
          %858 = vst [vmem:[%s382] sm:$0xff] %v842
          %859 = vst [vmem:[%s382 + $0x8] sm:$0xff] %v843
          %860 = vst [vmem:[%s382 + $0x10] sm:$0xff] %v844
          %861 = vst [vmem:[%s382 + $0x18] sm:$0xff] %v845
          %862 = vst [vmem:[%s382 + $0x20] sm:$0xff] %v846
          %863 = vst [vmem:[%s382 + $0x28] sm:$0xff] %v847
          %864 = vst [vmem:[%s382 + $0x30] sm:$0xff] %v848
          %865 = vst [vmem:[%s382 + $0x38] sm:$0xff] %v849
          %866 = vst [vmem:[%s382 + $0x40] sm:$0xff] %v850
          %867 = vst [vmem:[%s382 + $0x48] sm:$0xff] %v851
          %868 = vst [vmem:[%s382 + $0x50] sm:$0xff] %v852
          %869 = vst [vmem:[%s382 + $0x58] sm:$0xff] %v853
          %870 = vst [vmem:[%s382 + $0x60] sm:$0xff] %v854
          %871 = vst [vmem:[%s382 + $0x68] sm:$0xff] %v855
          %872 = vst [vmem:[%s382 + $0x70] sm:$0xff] %v856
          %873 = vst [vmem:[%s382 + $0x78] sm:$0xff] %v857
        $region85: #{forward.6} parent=72 // pred_fallthru
          _
        %s874 = smul.u32 16, %s19
        %p875 = scmp.lt.s32.totalorder %s874, 31
        %s876 = scalar_select %p875, %s874, 31
        %s877 = smul.addr %s876, 8
        %s878 = scalar_lea.vmem %s4, %s877
        // Predicated region
        $region86: #{forward.6} parent=72 // pred_check
          %p879 = pneg %p151
        $region87: #{forward.6} parent=72 // pred_check_branch
          %881 = sbr.rel (%p879) target = $region89
        $region88: #{forward.6} parent=72 // pred_region
          %s882 = smul.u32 16, %s19
        $region89: #{forward.6} parent=72 // pred_fallthru
          _
      $region73: #{forward.6} parent=5 // pred_fallthru
        _
      %p883 = scmp.le.s32.totalorder 2, %s10
      // Predicated region
      $region90: #{forward.6} parent=5 // pred_check
        %p884 = pneg %p883
      $region91: #{forward.6} parent=5 // pred_check_branch
        %886 = sbr.rel (%p884) target = $region93
      $region92: #{forward.6} parent=5 // pred_region
        %s887 = ssub.s32 %s10, 2
        // Predicated region
        $region94: #{forward.6} parent=92 // pred_check
          %p888 = pneg %p157
        $region95: #{forward.6} parent=92 // pred_check_branch
          %890 = sbr.rel (%p888) target = $region97
        $region96: #{forward.6} parent=92 // pred_region
          %s891 = smul.u32 16, %s21
          %p892 = scmp.lt.s32.totalorder %s891, 31
          %s893 = scalar_select %p892, %s891, 31
          %s894 = smul.addr %s893, 8
          %s895 = scalar_lea.vmem %s4, %s894
        $region97: #{forward.6} parent=92 // pred_fallthru
          _
      $region93: #{forward.6} parent=5 // pred_fallthru
        _
    $region6: #{forward.6} parent=1 // loop_footer
      %s14 = sadd.s32 1, %s10
    $region7: #{forward.6} parent=1 // loop_footer_branch
      %9 = sbr.rel target = $region3
    $region8: #{forward.6} parent=1 // loop_exit
      _

// kernel: forward.7
$region0: #{forward.7}
  #allocation0 [shape = 'u32[]', space=smem, size = 0x4, offset = 0x4, fixed_abs, tag = 'smem constant byte address 0x4 - core index']
  #allocation1 [shape = 'u32[144,128]{1,0:T(1,128)}', space=vmem, size = 0x12000, scoped, tag = 'internal scratch']
  #allocation2 [shape = 'f32[1,1]{1,0:T(1,128)S(1)}', space=vmem, size = 0x200, scoped, tag = 'scoped memory for forward.7']
  %s0 = inlined_call_operand.vmem [shape: f32[1,384], index: 0, kind: input, shape index: {}]
  %s1 = inlined_call_operand.vmem [shape: f32[1,384], index: 1, kind: input, shape index: {}]
  %s2 = inlined_call_operand.<no memory space> [shape: f32[1,1], index: 2, kind: input, shape index: {}]
  %s3 = inlined_call_operand.vmem [shape: f32[1,384], index: 3, kind: output, shape index: {}]
  %s4 = sld [smem:[#allocation0]]
  $region45: #{forward.7} parent=0
    _
  %s6 = ssub.s32 1, %s4
  %s7 = scalar_select 0, %s6, %s4
  %v8 = vstv %s2
  %9 = vst [vmem:[#allocation2] sm:$0x1] %v8
  loop: start=0, step=1, limit=5
  $region2: #{forward.7} parent=0 // loop_pre_header
    _
  $region3: #{forward.7} parent=0 // loop_header
    %s11 = sphi 0, %s15
    %p12 = scmp.ge.s32.totalorder %s11, 5
    %s21 = sphi 0, %s23
    %s24 = sphi 0, %s21
    %s25 = sphi 0, %s24
    %s41 = sphi 0, %s25
    %s47 = sphi 0, %s49
    %s50 = sphi 0, %s47
    %s51 = sphi 0, %s50
    %s67 = sphi 0, %s51
    %s71 = sphi 0, %s71
    %s73 = sphi 0, %s71
    %s74 = sphi 0, %s73
    %s88 = sphi 0, %s74
    %s94 = sphi 0, %s96
    %s97 = sphi 0, %s94
    %s98 = sphi 0, %s97
    %s114 = sphi 0, %s98
  $region4: #{forward.7} parent=0 // loop_header_branch
    %14 = sbr.rel (%p12) target = $region8
  $region5: #{forward.7} parent=0 // loop_body
    %s16 = ssub.s32 %s11, 1
    %s17 = ssub.s32 %s11, 2
    %s18 = sadd.s32 %s11, 1
    %s19 = ssub.s32 %s11, %s18
    %p20 = scmp.eq.s32.totalorder %s19, 0
    %s22 = sadd.s32 %s21, 1
    %s23 = scalar_select %p20, %s21, %s22
    %p26 = pneg %p20
    %p27 = scmp.eq.s32.totalorder %s11, 2
    %p28 = por %p26, %p27
    %p29 = scmp.ne.s32.totalorder %s21, %s24
    %p30 = scmp.eq.s32.totalorder %s11, 0
    %p31 = por %p29, %p30
    %p32 = scmp.ne.s32.totalorder %s21, %s24
    %p33 = scmp.eq.s32.totalorder %s16, 2
    %p34 = por %p32, %p33
    %p35 = scmp.ne.s32.totalorder %s24, %s25
    %p36 = scmp.eq.s32.totalorder %s16, 0
    %p37 = por %p35, %p36
    %p38 = scmp.ne.s32.totalorder %s24, %s25
    %p39 = scmp.eq.s32.totalorder %s17, 2
    %p40 = por %p38, %p39
    %p42 = scmp.ne.s32.totalorder %s25, %s41
    %p43 = scmp.eq.s32.totalorder %s17, 0
    %p44 = por %p42, %p43
    %s45 = ssub.s32 %s11, %s18
    %p46 = scmp.eq.s32.totalorder %s45, 0
    %s48 = sadd.s32 %s47, 1
    %s49 = scalar_select %p46, %s47, %s48
    %p52 = pneg %p46
    %p53 = scmp.eq.s32.totalorder %s11, 2
    %p54 = por %p52, %p53
    %p55 = scmp.ne.s32.totalorder %s47, %s50
    %p56 = scmp.eq.s32.totalorder %s11, 0
    %p57 = por %p55, %p56
    %p58 = scmp.ne.s32.totalorder %s47, %s50
    %p59 = scmp.eq.s32.totalorder %s16, 2
    %p60 = por %p58, %p59
    %p61 = scmp.ne.s32.totalorder %s50, %s51
    %p62 = scmp.eq.s32.totalorder %s16, 0
    %p63 = por %p61, %p62
    %p64 = scmp.ne.s32.totalorder %s50, %s51
    %p65 = scmp.eq.s32.totalorder %s17, 2
    %p66 = por %p64, %p65
    %p68 = scmp.ne.s32.totalorder %s51, %s67
    %p69 = scmp.eq.s32.totalorder %s17, 0
    %p70 = por %p68, %p69
    %s72 = sadd.s32 %s71, 1
    %p75 = scmp.eq.s32.totalorder %s11, 2
    %p76 = scmp.ne.s32.totalorder %s71, %s73
    %p77 = scmp.eq.s32.totalorder %s11, 0
    %p78 = por %p76, %p77
    %p79 = scmp.ne.s32.totalorder %s71, %s73
    %p80 = scmp.eq.s32.totalorder %s16, 2
    %p81 = por %p79, %p80
    %p82 = scmp.ne.s32.totalorder %s73, %s74
    %p83 = scmp.eq.s32.totalorder %s16, 0
    %p84 = por %p82, %p83
    %p85 = scmp.ne.s32.totalorder %s73, %s74
    %p86 = scmp.eq.s32.totalorder %s17, 2
    %p87 = por %p85, %p86
    %p89 = scmp.ne.s32.totalorder %s74, %s88
    %p90 = scmp.eq.s32.totalorder %s17, 0
    %p91 = por %p89, %p90
    %s92 = ssub.s32 %s11, %s18
    %p93 = scmp.eq.s32.totalorder %s92, 0
    %s95 = sadd.s32 %s94, 1
    %s96 = scalar_select %p93, %s94, %s95
    %p99 = pneg %p93
    %p100 = scmp.eq.s32.totalorder %s11, 2
    %p101 = por %p99, %p100
    %p102 = scmp.ne.s32.totalorder %s94, %s97
    %p103 = scmp.eq.s32.totalorder %s11, 0
    %p104 = por %p102, %p103
    %p105 = scmp.ne.s32.totalorder %s94, %s97
    %p106 = scmp.eq.s32.totalorder %s16, 2
    %p107 = por %p105, %p106
    %p108 = scmp.ne.s32.totalorder %s97, %s98
    %p109 = scmp.eq.s32.totalorder %s16, 0
    %p110 = por %p108, %p109
    %p111 = scmp.ne.s32.totalorder %s97, %s98
    %p112 = scmp.eq.s32.totalorder %s17, 2
    %p113 = por %p111, %p112
    %p115 = scmp.ne.s32.totalorder %s98, %s114
    %p116 = scmp.eq.s32.totalorder %s17, 0
    %p117 = por %p115, %p116
    %p118 = scmp.le.s32.totalorder 1, %s11
    %p119 = scmp.lt.s32.totalorder %s11, 4
    %p120 = pnand %p118, %p119
    %p121 = pneg %p120
    // Predicated region
    $region9: #{forward.7} parent=5 // pred_check
      _
    $region10: #{forward.7} parent=5 // pred_check_branch
      %123 = sbr.rel (%p120) target = $region12
    $region11: #{forward.7} parent=5 // pred_region
      %s124 = ssub.s32 %s11, 1
      // Predicated region
      $region13: #{forward.7} parent=11 // pred_check
        %p125 = pneg %p84
      $region14: #{forward.7} parent=11 // pred_check_branch
        %127 = sbr.rel (%p125) target = $region16
      $region15: #{forward.7} parent=11 // pred_region
        _
      $region16: #{forward.7} parent=11 // pred_fallthru
        _
    $region12: #{forward.7} parent=5 // pred_fallthru
      _
    %p128 = scmp.lt.s32.totalorder %s11, 3
    // Predicated region
    $region17: #{forward.7} parent=5 // pred_check
      %p129 = pneg %p128
    $region18: #{forward.7} parent=5 // pred_check_branch
      %131 = sbr.rel (%p129) target = $region20
    $region19: #{forward.7} parent=5 // pred_region
      // Predicated region
      $region21: #{forward.7} parent=19 // pred_check
        %p132 = pneg %p31
      $region22: #{forward.7} parent=19 // pred_check_branch
        %134 = sbr.rel (%p132) target = $region24
      $region23: #{forward.7} parent=19 // pred_region
        %p135 = scmp.lt.s32.totalorder %s11, 2
        %s136 = scalar_select %p135, %s11, 2
        %s137 = scalar_lea.vmem %s0, %s136
      $region24: #{forward.7} parent=19 // pred_fallthru
        _
      // Predicated region
      $region25: #{forward.7} parent=19 // pred_check
        %p138 = pneg %p57
      $region26: #{forward.7} parent=19 // pred_check_branch
        %140 = sbr.rel (%p138) target = $region28
      $region27: #{forward.7} parent=19 // pred_region
        %p141 = scmp.lt.s32.totalorder %s11, 2
        %s142 = scalar_select %p141, %s11, 2
        %s143 = scalar_lea.vmem %s1, %s142
      $region28: #{forward.7} parent=19 // pred_fallthru
        _
    $region20: #{forward.7} parent=5 // pred_fallthru
      _
    %p144 = scmp.le.s32.totalorder 1, %s11
    %p145 = scmp.lt.s32.totalorder %s11, 4
    %p146 = pnand %p144, %p145
    %p147 = pneg %p146
    // Predicated region
    $region29: #{forward.7} parent=5 // pred_check
      _
    $region30: #{forward.7} parent=5 // pred_check_branch
      %149 = sbr.rel (%p146) target = $region32
    $region31: #{forward.7} parent=5 // pred_region
      %s150 = ssub.s32 %s11, 1
      %p151 = scmp.lt.s32.totalorder %s16, 2
      %s152 = scalar_select %p151, %s16, 2
      %s153 = scalar_lea.vmem %s0, %s152
      %p154 = pneg %p37
      %p155 = pneg %p34
      %p156 = scmp.lt.s32.totalorder %s16, 2
      %s157 = scalar_select %p156, %s16, 2
      %s158 = scalar_lea.vmem %s1, %s157
      %p159 = pneg %p63
      %p160 = pneg %p60
      %p161 = pneg %p84
      %p162 = pneg %p81
      %p163 = pneg %p110
      %p164 = pneg %p107
      %p165 = scmp.lt.s32.totalorder %s16, 2
      %s166 = scalar_select %p165, %s16, 2
      %s167 = scalar_lea.vmem %s3, %s166
      %p168 = scmp.lt.s32.totalorder %s16, 2
      %s169 = scalar_select %p168, %s16, 2
      %s170 = scalar_lea.vmem %s0, %s169
      %p171 = scmp.lt.s32.totalorder %s16, 2
      %s172 = scalar_select %p171, %s16, 2
      %s173 = scalar_lea.vmem %s1, %s172
      %p174 = scmp.lt.s32.totalorder %s16, 2
      %s175 = scalar_select %p174, %s16, 2
      %s176 = scalar_lea.vmem %s3, %s175
      %v177 = vld [vmem:[%s170] sm:$0x1]
      %v178 = vld [vmem:[%s173] sm:$0x1]
      %v179 = vadd.f32 %v177, %v178
      %v180 = vld [vmem:[#allocation2] sm:$0x1]
      %182 = vset.pattern.permute.xlu0 0
      %183 = vperm.xlu0 %182, %v180
      %v184 = vpop.permute.xlu0 %183
      %v186 = vlaneseq
      %v187 = vshrl.u32 %v186, 7
      %v188 = vsub.s32 0, %v187
      %v189 = vrot.slane %v184, %v188
      %v190 = vadd.f32 %v179, %v189
      %v191 = vxor.u32 %v190, 2147483648
      %v192 = vmul.f32 %v191, 1.442695
      %v193 = vpow.pop %v192
      %v194 = vadd.f32 %v193, 1.0
      %v195 = vrcp.pop %v194
      %v196 = vmul.f32 1.0, %v195
      %197 = vst [vmem:[%s176] sm:$0x1] %v196
      %p198 = scmp.lt.s32.totalorder %s16, 2
      %s199 = scalar_select %p198, %s16, 2
      %s200 = scalar_lea.vmem %s3, %s199
      // Predicated region
      $region33: #{forward.7} parent=31 // pred_check
        %p201 = pneg %p107
      $region34: #{forward.7} parent=31 // pred_check_branch
        %203 = sbr.rel (%p201) target = $region36
      $region35: #{forward.7} parent=31 // pred_region
        _
      $region36: #{forward.7} parent=31 // pred_fallthru
        _
    $region32: #{forward.7} parent=5 // pred_fallthru
      _
    %p204 = scmp.le.s32.totalorder 2, %s11
    // Predicated region
    $region37: #{forward.7} parent=5 // pred_check
      %p205 = pneg %p204
    $region38: #{forward.7} parent=5 // pred_check_branch
      %207 = sbr.rel (%p205) target = $region40
    $region39: #{forward.7} parent=5 // pred_region
      %s208 = ssub.s32 %s11, 2
      // Predicated region
      $region41: #{forward.7} parent=39 // pred_check
        %p209 = pneg %p113
      $region42: #{forward.7} parent=39 // pred_check_branch
        %211 = sbr.rel (%p209) target = $region44
      $region43: #{forward.7} parent=39 // pred_region
        %p212 = scmp.lt.s32.totalorder %s17, 2
        %s213 = scalar_select %p212, %s17, 2
        %s214 = scalar_lea.vmem %s3, %s213
      $region44: #{forward.7} parent=39 // pred_fallthru
        _
    $region40: #{forward.7} parent=5 // pred_fallthru
      _
  $region6: #{forward.7} parent=0 // loop_footer
    %s15 = sadd.s32 1, %s11
  $region7: #{forward.7} parent=0 // loop_footer_branch
    %10 = sbr.rel target = $region3
  $region8: #{forward.7} parent=0 // loop_exit
    _

</llo_original>
